<compile_context>
chip_gen: v7x
topology: tpu7x:2x2x1
jax: 0.10.0
libtpu: 0.0.40
codegen_flags: <defaults>
</compile_context>

<pallas_src>
import math

import jax
import jax.numpy as jnp
from jax.experimental import pallas as pl
from jax.experimental.pallas import tpu as pltpu

f32 = jnp.float32
bf16 = jnp.bfloat16

TM = 128   # node row tile
TN = 128   # node column tile (pairwise-loss grid)


def _rup(v, m):
    return (v + m - 1) // m * m


def _pad2(a, rows, cols):
    return jnp.pad(a, ((0, rows - a.shape[0]), (0, cols - a.shape[1])))


def _sum11(v):
    # lane reduce then sublane reduce -> (1, 1)
    return jnp.sum(jnp.sum(v, axis=1, keepdims=True), axis=0, keepdims=True)


# ----------------------------- kernels --------------------------------------
def _conv1_kernel(x0_full_ref, x0_tile_ref, s_ref, w1_ref, b1_ref, h1_ref):
    """h1[tile] = relu([x0_tile | S_hat_tile @ x0] @ [W0;W1] + b)."""
    sx0 = jnp.dot(s_ref[...], x0_full_ref[...], preferred_element_type=f32)
    xin = jnp.concatenate([x0_tile_ref[...], sx0.astype(bf16)], axis=1)
    h1 = jnp.dot(xin, w1_ref[...], preferred_element_type=f32) + b1_ref[...]
    h1_ref[...] = jnp.maximum(h1, 0.0).astype(h1_ref.dtype)


def _conv2_kernel(h1_full_ref, h1_tile_ref, x0_tile_ref, s_ref,
                  w2_ref, b2_ref, wl1_ref, bl1_ref, wl2_ref, bl2_ref,
                  xres_ref, z_ref):
    sh1 = jnp.dot(s_ref[...], h1_full_ref[...], preferred_element_type=f32)
    hin = jnp.concatenate([h1_tile_ref[...], sh1.astype(bf16)], axis=1)
    x1 = jnp.maximum(
        jnp.dot(hin, w2_ref[...], preferred_element_type=f32) + b2_ref[...], 0.0)
    x0t = x0_tile_ref[...]
    l1 = jnp.maximum(
        jnp.dot(x0t, wl1_ref[...], preferred_element_type=f32) + bl1_ref[...], 0.0)
    l2 = jnp.maximum(
        jnp.dot(x0t, wl2_ref[...], preferred_element_type=f32) + bl2_ref[...], 0.0)
    xres_ref[...] = (x1 + l1).astype(xres_ref.dtype)
    z_ref[...] = (x1 + l2).astype(z_ref.dtype)


def _conv3_kernel(xr_full_ref, xr_tile_ref, s_ref, w3_ref, b3_ref, out_ref):
    sxr = jnp.dot(s_ref[...], xr_full_ref[...], preferred_element_type=f32)
    xin = jnp.concatenate([xr_tile_ref[...], sxr.astype(bf16)], axis=1)
    out_ref[...] = (jnp.dot(xin, w3_ref[...], preferred_element_type=f32)
                    + b3_ref[...])


def _loss_kernel(inv_ref, zi_ref, zjt_ref, ep_ref, en_ref, loss_ref):
    """Blocked link-prediction loss; never materializes the full (N,N) gram."""
    @pl.when(jnp.logical_and(pl.program_id(0) == 0, pl.program_id(1) == 0))
    def _():
        loss_ref[...] = jnp.zeros_like(loss_ref)

    g = jnp.dot(zi_ref[...], zjt_ref[...], preferred_element_type=f32)
    # softplus rewrite: -log(sigmoid(g)) = softplus(-g); -log(1-sigmoid(g)) = softplus(g)
    t = jnp.log(1.0 + jnp.exp(-jnp.abs(g)))              # one exp + one log per pair
    pos_term = ep_ref[...].astype(f32) * (jnp.maximum(-g, 0.0) + t)
    neg_term = en_ref[...].astype(f32) * (jnp.maximum(g, 0.0) + t)
    loss_ref[...] += (_sum11(pos_term) * inv_ref[0, 0]
                      + _sum11(neg_term) * inv_ref[0, 1])


# ----------------------------- wrapper ---------------------------------------
@jax.jit
def chebnet_forward(x0, s_hat, e_pos, e_neg, params):
    (w1a, w1b, b1, w2a, w2b, b2, w3a, w3b, b3, wl1, bl1, wl2, bl2) = params
    N, F = x0.shape
    H1, H2 = w1a.shape[1], w2a.shape[1]
    NP, FP = _rup(N, TM), _rup(F, 128)
    H1P, H2P = _rup(H1, 128), _rup(H2, 128)
    OUTP = 128                                            # lane-dense conv3 output

    # ---- fuse each ChebConv's (W0, W1) into one (2*in, out) bf16 weight ------
    w1f = jnp.concatenate([_pad2(w1a, FP, H1P), _pad2(w1b, FP, H1P)], 0).astype(bf16)
    w2f = jnp.concatenate([_pad2(w2a, H1P, H2P), _pad2(w2b, H1P, H2P)], 0).astype(bf16)
    w3f = jnp.concatenate([_pad2(w3a, H2P, OUTP), _pad2(w3b, H2P, OUTP)], 0).astype(bf16)
    b1p = _pad2(b1.reshape(1, -1).astype(f32), 1, H1P)
    b2p = _pad2(b2.reshape(1, -1).astype(f32), 1, H2P)
    b3p = _pad2(b3.reshape(1, -1).astype(f32), 1, OUTP)
    wl1p = _pad2(wl1, FP, H2P).astype(bf16)
    wl2p = _pad2(wl2, FP, H2P).astype(bf16)
    bl1p = _pad2(bl1.reshape(1, -1).astype(f32), 1, H2P)
    bl2p = _pad2(bl2.reshape(1, -1).astype(f32), 1, H2P)

    # ---- bf16 inputs, zero-padded to 128-aligned node / feature counts -------
    x0p = _pad2(x0.astype(bf16), NP, FP)
    sp = _pad2(s_hat.astype(bf16), NP, NP)
    epp = _pad2(e_pos, NP, NP).astype(bf16)
    enp = _pad2(e_neg, NP, NP).astype(bf16)

    # edge-count denominators precomputed host-side, passed as SMEM scalars
    inv = jnp.stack([1.0 / jnp.maximum(jnp.sum(e_pos), 1.0),
                     1.0 / jnp.maximum(jnp.sum(e_neg), 1.0)]).reshape(1, 2).astype(f32)

    nt = NP // TM
    nbytes = lambda a: math.prod(a.shape) * a.dtype.itemsize
    vlim = int(min(64 << 20, max(16 << 20, 4 * sum(
        nbytes(a) for a in (x0p, sp, epp, enp, w1f, w2f, w3f, wl1p, wl2p)))))
    cp_par = pltpu.CompilerParams(dimension_semantics=("parallel",),
                                  vmem_limit_bytes=vlim)
    cp_red = pltpu.CompilerParams(dimension_semantics=("arbitrary", "arbitrary"),
                                  vmem_limit_bytes=vlim)
    full = lambda r, c: pl.BlockSpec((r, c), lambda i: (0, 0))
    rows = lambda c: pl.BlockSpec((TM, c), lambda i: (i, 0))

    # ---- conv1: F -> 300, relu ------------------------------------------------
    h1 = pl.pallas_call(
        _conv1_kernel,
        out_shape=jax.ShapeDtypeStruct((NP, H1P), bf16),
        grid=(nt,),
        in_specs=[full(NP, FP), rows(FP), rows(NP), full(2 * FP, H1P), full(1, H1P)],
        out_specs=rows(H1P),
        compiler_params=cp_par,
    )(x0p, x0p, sp, w1f, b1p)

    # ---- conv2 + residual linear branches ------------------------------------
    x_res, z = pl.pallas_call(
        _conv2_kernel,
        out_shape=(jax.ShapeDtypeStruct((NP, H2P), bf16),
                   jax.ShapeDtypeStruct((NP, H2P), bf16)),
        grid=(nt,),
        in_specs=[full(NP, H1P), rows(H1P), rows(FP), rows(NP),
                  full(2 * H1P, H2P), full(1, H2P),
                  full(FP, H2P), full(1, H2P), full(FP, H2P), full(1, H2P)],
        out_specs=(rows(H2P), rows(H2P)),
        compiler_params=cp_par,
    )(h1, h1, x0p, sp, w2f, b2p, wl1p, bl1p, wl2p, bl2p)

    # ---- conv3: 100 -> 1 (lane-dense 128-padded output slab) ------------------
    out_pad = pl.pallas_call(
        _conv3_kernel,
        out_shape=jax.ShapeDtypeStruct((NP, OUTP), f32),
        grid=(nt,),
        in_specs=[full(NP, H2P), rows(H2P), rows(NP),
                  full(2 * H2P, OUTP), full(1, OUTP)],
        out_specs=rows(OUTP),
        compiler_params=cp_par,
    )(x_res, x_res, sp, w3f, b3p)

    # ---- blocked link-prediction loss ----------------------------------------
    zT = z.T    # one transpose outside the kernel -> plain NN dot per gram block
    loss = pl.pallas_call(
        _loss_kernel,
        out_shape=jax.ShapeDtypeStruct((1, 1), f32),
        grid=(nt, NP // TN),
        in_specs=[pl.BlockSpec(memory_space=pltpu.MemorySpace.SMEM),
                  pl.BlockSpec((TM, H2P), lambda i, j: (i, 0)),
                  pl.BlockSpec((H2P, TN), lambda i, j: (0, j)),
                  pl.BlockSpec((TM, TN), lambda i, j: (i, j)),
                  pl.BlockSpec((TM, TN), lambda i, j: (i, j))],
        out_specs=pl.BlockSpec((1, 1), lambda i, j: (0, 0)),
        compiler_params=cp_red,
    )(inv, z, zT, epp, enp)

    return out_pad[:N, :1], loss[0, 0]


# ----------------------------- pure-JAX reference ----------------------------
def _reference(x0, s_hat, e_pos, e_neg, params):
    (w1a, w1b, b1, w2a, w2b, b2, w3a, w3b, b3, wl1, bl1, wl2, bl2) = params
    dot = lambda a, b: jnp.dot(a, b.astype(bf16), preferred_element_type=f32)
    x0b = x0.astype(bf16)
    sb = s_hat.astype(bf16)
    sx0 = jnp.dot(sb, x0b, preferred_element_type=f32).astype(bf16)
    h1 = jnp.maximum(dot(x0b, w1a) + dot(sx0, w1b) + b1[None, :], 0.0).astype(bf16)
    sh1 = jnp.dot(sb, h1, preferred_element_type=f32).astype(bf16)
    x1 = jnp.maximum(dot(h1, w2a) + dot(sh1, w2b) + b2[None, :], 0.0)
    l1 = jnp.maximum(dot(x0b, wl1) + bl1[None, :], 0.0)
    l2 = jnp.maximum(dot(x0b, wl2) + bl2[None, :], 0.0)
    x_res = (x1 + l1).astype(bf16)
    z = (x1 + l2).astype(bf16)
    g = jnp.dot(z, z.T, preferred_element_type=f32)
    sig = jax.nn.sigmoid(g)
    n_pos = jnp.maximum(e_pos.sum(), 1.0)
    n_neg = jnp.maximum(e_neg.sum(), 1.0)
    pos_loss = -(e_pos * jnp.log(sig + 1e-15)).sum() / n_pos
    neg_loss = -(e_neg * jnp.log(1.0 - sig + 1e-15)).sum() / n_neg
    sxr = jnp.dot(sb, x_res, preferred_element_type=f32).astype(bf16)
    out = dot(x_res, w3a) + dot(sxr, w3b) + b3[None, :]
    return out, pos_loss + neg_loss


if __name__ == "__main__":
    N, F_IN, H1, H2 = 200, 64, 300, 100
    keys = jax.random.split(jax.random.PRNGKey(0), 20)

    # node features
    x0 = jax.random.normal(keys[0], (N, F_IN), dtype=f32)

    # random undirected graph (dense adjacency view of edge_index), no self-loops
    u = (jax.random.uniform(keys[1], (N, N)) < 0.05).astype(f32)
    upper = jnp.triu(u, k=1)
    adj = jnp.maximum(upper, upper.T)
    adj = adj.at[0, 1].set(1.0).at[1, 0].set(1.0)          # guarantee >= 1 edge

    # ChebConv 'sym' scaled Laplacian with lambda_max = 2:  S_hat = -D^-1/2 A D^-1/2
    deg = adj.sum(axis=1)
    dis = jnp.where(deg > 0, 1.0 / jnp.sqrt(deg), 0.0)
    s_hat = (-(dis[:, None] * adj * dis[None, :])).astype(bf16)

    # positive edges = data.edge_index (both directions)
    e_pos = adj

    # deterministic stand-in for PyG negative_sampling (rejects edges/self-loops,
    # duplicates deduplicated via .max so no pair is double-weighted)
    num_neg = 512
    pos_or_self = jnp.maximum(adj, jnp.eye(N, dtype=f32))
    nsrc = jax.random.randint(keys[2], (num_neg,), 0, N)
    ndst = jax.random.randint(keys[3], (num_neg,), 0, N)
    valid = (pos_or_self[nsrc, ndst] == 0).astype(f32)
    e_neg = jnp.zeros((N, N), f32).at[nsrc, ndst].max(valid)

    def rnd(k, shape):
        return jax.random.normal(k, shape, dtype=f32) * 0.03

    params = (
        rnd(keys[4], (F_IN, H1)), rnd(keys[5], (F_IN, H1)), rnd(keys[6], (H1,)),   # conv1
        rnd(keys[7], (H1, H2)), rnd(keys[8], (H1, H2)), rnd(keys[9], (H2,)),       # conv2
        rnd(keys[10], (H2, 1)), rnd(keys[11], (H2, 1)), rnd(keys[12], (1,)),       # conv3
        rnd(keys[13], (F_IN, H2)), rnd(keys[14], (H2,)),                           # lin1
        rnd(keys[15], (F_IN, H2)), rnd(keys[16], (H2,)),                           # lin2
    )
    c1 = jnp.array(0.5, f32)   # module parameters returned unchanged
    c2 = jnp.array(0.5, f32)

    out_x, r_loss = chebnet_forward(x0, s_hat, e_pos, e_neg, params)
    jax.block_until_ready((out_x, r_loss))
    result = (out_x, r_loss, c1, c2)   # mirrors the module's return tuple

    ref_x, ref_loss = _reference(x0, s_hat, e_pos, e_neg, params)
    assert out_x.shape == (N, 1)
    assert jnp.allclose(out_x, ref_x, rtol=2e-2, atol=5e-3), "node output mismatch"
    assert jnp.allclose(r_loss, ref_loss, rtol=2e-2, atol=2e-2), "loss mismatch"

    print("KERNEL_OK")
</pallas_src>

<mosaic_0001>
module attributes {stable_mosaic.version = 11 : i64} {
  func.func @_conv1_kernel(%arg0: i32, %arg1: memref<256x128xbf16, #tpu.memory_space<vmem>>, %arg2: memref<128x128xbf16, #tpu.memory_space<vmem>>, %arg3: memref<128x256xbf16, #tpu.memory_space<vmem>>, %arg4: memref<256x384xbf16, #tpu.memory_space<vmem>>, %arg5: memref<1x384xf32, #tpu.memory_space<vmem>>, %arg6: memref<128x384xbf16, #tpu.memory_space<vmem>>) attributes {dimension_semantics = [#tpu.dimension_semantics<parallel>], iteration_bounds = array<i64: 2>, scalar_prefetch = 0 : i64, scratch_operands = 0 : i64, tpu.core_type = #tpu.core_type<tc>, window_params = [{pipeline_mode = #tpu.pipeline_mode<synchronous>, transform_indices = @transform_0, window_bounds = array<i64: 256, 128>}, {transform_indices = @transform_1, window_bounds = array<i64: 128, 128>}, {transform_indices = @transform_2, window_bounds = array<i64: 128, 256>}, {pipeline_mode = #tpu.pipeline_mode<synchronous>, transform_indices = @transform_3, window_bounds = array<i64: 256, 384>}, {pipeline_mode = #tpu.pipeline_mode<synchronous>, transform_indices = @transform_4, window_bounds = array<i64: 1, 384>}, {transform_indices = @transform_5, window_bounds = array<i64: 128, 384>}]} {
    %c0 = arith.constant 0 : index
    %c0_0 = arith.constant 0 : index
    %0 = vector.load %arg3[%c0, %c0_0] : memref<128x256xbf16, #tpu.memory_space<vmem>>, vector<128x256xbf16>
    %c0_1 = arith.constant 0 : index
    %c0_2 = arith.constant 0 : index
    %1 = vector.load %arg1[%c0_1, %c0_2] : memref<256x128xbf16, #tpu.memory_space<vmem>>, vector<256x128xbf16>
    %cst = arith.constant dense<0.000000e+00> : vector<128x128xf32>
    %2 = tpu.matmul %0, %1, %cst {dimension_numbers = #tpu.dot_dimension_numbers<[1], [0], [0], [1], [0, 0, 1, 1], [], []>} : vector<128x256xbf16>, vector<256x128xbf16>, vector<128x128xf32> -> vector<128x128xf32>
    %c0_3 = arith.constant 0 : index
    %c0_4 = arith.constant 0 : index
    %3 = vector.load %arg2[%c0_3, %c0_4] : memref<128x128xbf16, #tpu.memory_space<vmem>>, vector<128x128xbf16>
    %4 = arith.truncf %2 : vector<128x128xf32> to vector<128x128xbf16>
    %5 = tpu.concatenate %3, %4 in 1 : vector<128x128xbf16>, vector<128x128xbf16> -> vector<128x256xbf16>
    %c0_5 = arith.constant 0 : index
    %c0_6 = arith.constant 0 : index
    %6 = vector.load %arg4[%c0_5, %c0_6] : memref<256x384xbf16, #tpu.memory_space<vmem>>, vector<256x384xbf16>
    %cst_7 = arith.constant dense<0.000000e+00> : vector<128x384xf32>
    %7 = tpu.matmul %5, %6, %cst_7 {dimension_numbers = #tpu.dot_dimension_numbers<[1], [0], [0], [1], [0, 0, 1, 1], [], []>} : vector<128x256xbf16>, vector<256x384xbf16>, vector<128x384xf32> -> vector<128x384xf32>
    %c0_8 = arith.constant 0 : index
    %c0_9 = arith.constant 0 : index
    %8 = vector.load %arg5[%c0_8, %c0_9] : memref<1x384xf32, #tpu.memory_space<vmem>>, vector<1x384xf32>
    %9 = vector.broadcast %8 : vector<1x384xf32> to vector<128x384xf32>
    %10 = arith.addf %7, %9 : vector<128x384xf32>
    %cst_10 = arith.constant 0.000000e+00 : f32
    %11 = vector.broadcast %cst_10 : f32 to vector<128x384xf32>
    %12 = arith.maximumf %10, %11 : vector<128x384xf32>
    %13 = arith.truncf %12 : vector<128x384xf32> to vector<128x384xbf16>
    %c0_11 = arith.constant 0 : index
    %c0_12 = arith.constant 0 : index
    %14 = vector.load %arg6[%c0_11, %c0_12] : memref<128x384xbf16, #tpu.memory_space<vmem>>, vector<128x384xbf16>
    tpu.vector_store %arg6[%c0_11, %c0_12], %13 {strides = array<i32>} : memref<128x384xbf16, #tpu.memory_space<vmem>>, vector<128x384xbf16>,
    return
  }
  func.func @transform_0(%arg0: i32) -> (i32, i32) {
    %c0_i32 = arith.constant 0 : i32
    %c0_i32_0 = arith.constant 0 : i32
    %c0_i32_1 = arith.constant 0 : i32
    return %c0_i32, %c0_i32_0 : i32, i32
  }
  func.func @transform_1(%arg0: i32) -> (i32, i32) {
    %c0_i32 = arith.constant 0 : i32
    %c0_i32_0 = arith.constant 0 : i32
    return %arg0, %c0_i32 : i32, i32
  }
  func.func @transform_2(%arg0: i32) -> (i32, i32) {
    %c0_i32 = arith.constant 0 : i32
    %c0_i32_0 = arith.constant 0 : i32
    return %arg0, %c0_i32 : i32, i32
  }
  func.func @transform_3(%arg0: i32) -> (i32, i32) {
    %c0_i32 = arith.constant 0 : i32
    %c0_i32_0 = arith.constant 0 : i32
    %c0_i32_1 = arith.constant 0 : i32
    return %c0_i32, %c0_i32_0 : i32, i32
  }
  func.func @transform_4(%arg0: i32) -> (i32, i32) {
    %c0_i32 = arith.constant 0 : i32
    %c0_i32_0 = arith.constant 0 : i32
    %c0_i32_1 = arith.constant 0 : i32
    return %c0_i32, %c0_i32_0 : i32, i32
  }
  func.func @transform_5(%arg0: i32) -> (i32, i32) {
    %c0_i32 = arith.constant 0 : i32
    %c0_i32_0 = arith.constant 0 : i32
    return %arg0, %c0_i32 : i32, i32
  }
}

module attributes {stable_mosaic.version = 11 : i64} {
  func.func @_conv2_kernel(%arg0: i32, %arg1: memref<256x384xbf16, #tpu.memory_space<vmem>>, %arg2: memref<128x384xbf16, #tpu.memory_space<vmem>>, %arg3: memref<128x128xbf16, #tpu.memory_space<vmem>>, %arg4: memref<128x256xbf16, #tpu.memory_space<vmem>>, %arg5: memref<768x128xbf16, #tpu.memory_space<vmem>>, %arg6: memref<1x128xf32, #tpu.memory_space<vmem>>, %arg7: memref<128x128xbf16, #tpu.memory_space<vmem>>, %arg8: memref<1x128xf32, #tpu.memory_space<vmem>>, %arg9: memref<128x128xbf16, #tpu.memory_space<vmem>>, %arg10: memref<1x128xf32, #tpu.memory_space<vmem>>, %arg11: memref<128x128xbf16, #tpu.memory_space<vmem>>, %arg12: memref<128x128xbf16, #tpu.memory_space<vmem>>) attributes {dimension_semantics = [#tpu.dimension_semantics<parallel>], iteration_bounds = array<i64: 2>, scalar_prefetch = 0 : i64, scratch_operands = 0 : i64, tpu.core_type = #tpu.core_type<tc>, window_params = [{pipeline_mode = #tpu.pipeline_mode<synchronous>, transform_indices = @transform_0, window_bounds = array<i64: 256, 384>}, {transform_indices = @transform_1, window_bounds = array<i64: 128, 384>}, {transform_indices = @transform_2, window_bounds = array<i64: 128, 128>}, {transform_indices = @transform_3, window_bounds = array<i64: 128, 256>}, {pipeline_mode = #tpu.pipeline_mode<synchronous>, transform_indices = @transform_4, window_bounds = array<i64: 768, 128>}, {pipeline_mode = #tpu.pipeline_mode<synchronous>, transform_indices = @transform_5, window_bounds = array<i64: 1, 128>}, {pipeline_mode = #tpu.pipeline_mode<synchronous>, transform_indices = @transform_6, window_bounds = array<i64: 128, 128>}, {pipeline_mode = #tpu.pipeline_mode<synchronous>, transform_indices = @transform_7, window_bounds = array<i64: 1, 128>}, {pipeline_mode = #tpu.pipeline_mode<synchronous>, transform_indices = @transform_8, window_bounds = array<i64: 128, 128>}, {pipeline_mode = #tpu.pipeline_mode<synchronous>, transform_indices = @transform_9, window_bounds = array<i64: 1, 128>}, {transform_indices = @transform_10, window_bounds = array<i64: 128, 128>}, {transform_indices = @transform_11, window_bounds = array<i64: 128, 128>}]} {
    %c0 = arith.constant 0 : index
    %c0_0 = arith.constant 0 : index
    %0 = vector.load %arg4[%c0, %c0_0] : memref<128x256xbf16, #tpu.memory_space<vmem>>, vector<128x256xbf16>
    %c0_1 = arith.constant 0 : index
    %c0_2 = arith.constant 0 : index
    %1 = vector.load %arg1[%c0_1, %c0_2] : memref<256x384xbf16, #tpu.memory_space<vmem>>, vector<256x384xbf16>
    %cst = arith.constant dense<0.000000e+00> : vector<128x384xf32>
    %2 = tpu.matmul %0, %1, %cst {dimension_numbers = #tpu.dot_dimension_numbers<[1], [0], [0], [1], [0, 0, 1, 1], [], []>} : vector<128x256xbf16>, vector<256x384xbf16>, vector<128x384xf32> -> vector<128x384xf32>
    %c0_3 = arith.constant 0 : index
    %c0_4 = arith.constant 0 : index
    %3 = vector.load %arg2[%c0_3, %c0_4] : memref<128x384xbf16, #tpu.memory_space<vmem>>, vector<128x384xbf16>
    %4 = arith.truncf %2 : vector<128x384xf32> to vector<128x384xbf16>
    %5 = tpu.concatenate %3, %4 in 1 : vector<128x384xbf16>, vector<128x384xbf16> -> vector<128x768xbf16>
    %c0_5 = arith.constant 0 : index
    %c0_6 = arith.constant 0 : index
    %6 = vector.load %arg5[%c0_5, %c0_6] : memref<768x128xbf16, #tpu.memory_space<vmem>>, vector<768x128xbf16>
    %cst_7 = arith.constant dense<0.000000e+00> : vector<128x128xf32>
    %7 = tpu.matmul %5, %6, %cst_7 {dimension_numbers = #tpu.dot_dimension_numbers<[1], [0], [0], [1], [0, 0, 1, 1], [], []>} : vector<128x768xbf16>, vector<768x128xbf16>, vector<128x128xf32> -> vector<128x128xf32>
    %c0_8 = arith.constant 0 : index
    %c0_9 = arith.constant 0 : index
    %8 = vector.load %arg6[%c0_8, %c0_9] : memref<1x128xf32, #tpu.memory_space<vmem>>, vector<1x128xf32>
    %9 = vector.broadcast %8 : vector<1x128xf32> to vector<128x128xf32>
    %10 = arith.addf %7, %9 : vector<128x128xf32>
    %cst_10 = arith.constant 0.000000e+00 : f32
    %11 = vector.broadcast %cst_10 : f32 to vector<128x128xf32>
    %12 = arith.maximumf %10, %11 : vector<128x128xf32>
    %c0_11 = arith.constant 0 : index
    %c0_12 = arith.constant 0 : index
    %13 = vector.load %arg3[%c0_11, %c0_12] : memref<128x128xbf16, #tpu.memory_space<vmem>>, vector<128x128xbf16>
    %c0_13 = arith.constant 0 : index
    %c0_14 = arith.constant 0 : index
    %14 = vector.load %arg7[%c0_13, %c0_14] : memref<128x128xbf16, #tpu.memory_space<vmem>>, vector<128x128xbf16>
    %cst_15 = arith.constant dense<0.000000e+00> : vector<128x128xf32>
    %15 = tpu.matmul %13, %14, %cst_15 {dimension_numbers = #tpu.dot_dimension_numbers<[1], [0], [0], [1], [0, 0, 1, 1], [], []>} : vector<128x128xbf16>, vector<128x128xbf16>, vector<128x128xf32> -> vector<128x128xf32>
    %c0_16 = arith.constant 0 : index
    %c0_17 = arith.constant 0 : index
    %16 = vector.load %arg8[%c0_16, %c0_17] : memref<1x128xf32, #tpu.memory_space<vmem>>, vector<1x128xf32>
    %17 = vector.broadcast %16 : vector<1x128xf32> to vector<128x128xf32>
    %18 = arith.addf %15, %17 : vector<128x128xf32>
    %cst_18 = arith.constant 0.000000e+00 : f32
    %19 = vector.broadcast %cst_18 : f32 to vector<128x128xf32>
    %20 = arith.maximumf %18, %19 : vector<128x128xf32>
    %c0_19 = arith.constant 0 : index
    %c0_20 = arith.constant 0 : index
    %21 = vector.load %arg9[%c0_19, %c0_20] : memref<128x128xbf16, #tpu.memory_space<vmem>>, vector<128x128xbf16>
    %cst_21 = arith.constant dense<0.000000e+00> : vector<128x128xf32>
    %22 = tpu.matmul %13, %21, %cst_21 {dimension_numbers = #tpu.dot_dimension_numbers<[1], [0], [0], [1], [0, 0, 1, 1], [], []>} : vector<128x128xbf16>, vector<128x128xbf16>, vector<128x128xf32> -> vector<128x128xf32>
    %c0_22 = arith.constant 0 : index
    %c0_23 = arith.constant 0 : index
    %23 = vector.load %arg10[%c0_22, %c0_23] : memref<1x128xf32, #tpu.memory_space<vmem>>, vector<1x128xf32>
    %24 = vector.broadcast %23 : vector<1x128xf32> to vector<128x128xf32>
    %25 = arith.addf %22, %24 : vector<128x128xf32>
    %cst_24 = arith.constant 0.000000e+00 : f32
    %26 = vector.broadcast %cst_24 : f32 to vector<128x128xf32>
    %27 = arith.maximumf %25, %26 : vector<128x128xf32>
    %28 = arith.addf %12, %20 : vector<128x128xf32>
    %29 = arith.truncf %28 : vector<128x128xf32> to vector<128x128xbf16>
    %c0_25 = arith.constant 0 : index
    %c0_26 = arith.constant 0 : index
    %30 = vector.load %arg11[%c0_25, %c0_26] : memref<128x128xbf16, #tpu.memory_space<vmem>>, vector<128x128xbf16>
    tpu.vector_store %arg11[%c0_25, %c0_26], %29 {strides = array<i32>} : memref<128x128xbf16, #tpu.memory_space<vmem>>, vector<128x128xbf16>,
    %31 = arith.addf %12, %27 : vector<128x128xf32>
    %32 = arith.truncf %31 : vector<128x128xf32> to vector<128x128xbf16>
    %c0_27 = arith.constant 0 : index
    %c0_28 = arith.constant 0 : index
    %33 = vector.load %arg12[%c0_27, %c0_28] : memref<128x128xbf16, #tpu.memory_space<vmem>>, vector<128x128xbf16>
    tpu.vector_store %arg12[%c0_27, %c0_28], %32 {strides = array<i32>} : memref<128x128xbf16, #tpu.memory_space<vmem>>, vector<128x128xbf16>,
    return
  }
  func.func @transform_0(%arg0: i32) -> (i32, i32) {
    %c0_i32 = arith.constant 0 : i32
    %c0_i32_0 = arith.constant 0 : i32
    %c0_i32_1 = arith.constant 0 : i32
    return %c0_i32, %c0_i32_0 : i32, i32
  }
  func.func @transform_1(%arg0: i32) -> (i32, i32) {
    %c0_i32 = arith.constant 0 : i32
    %c0_i32_0 = arith.constant 0 : i32
    return %arg0, %c0_i32 : i32, i32
  }
  func.func @transform_2(%arg0: i32) -> (i32, i32) {
    %c0_i32 = arith.constant 0 : i32
    %c0_i32_0 = arith.constant 0 : i32
    return %arg0, %c0_i32 : i32, i32
  }
  func.func @transform_3(%arg0: i32) -> (i32, i32) {
    %c0_i32 = arith.constant 0 : i32
    %c0_i32_0 = arith.constant 0 : i32
    return %arg0, %c0_i32 : i32, i32
  }
  func.func @transform_4(%arg0: i32) -> (i32, i32) {
    %c0_i32 = arith.constant 0 : i32
    %c0_i32_0 = arith.constant 0 : i32
    %c0_i32_1 = arith.constant 0 : i32
    return %c0_i32, %c0_i32_0 : i32, i32
  }
  func.func @transform_5(%arg0: i32) -> (i32, i32) {
    %c0_i32 = arith.constant 0 : i32
    %c0_i32_0 = arith.constant 0 : i32
    %c0_i32_1 = arith.constant 0 : i32
    return %c0_i32, %c0_i32_0 : i32, i32
  }
  func.func @transform_6(%arg0: i32) -> (i32, i32) {
    %c0_i32 = arith.constant 0 : i32
    %c0_i32_0 = arith.constant 0 : i32
    %c0_i32_1 = arith.constant 0 : i32
    return %c0_i32, %c0_i32_0 : i32, i32
  }
  func.func @transform_7(%arg0: i32) -> (i32, i32) {
    %c0_i32 = arith.constant 0 : i32
    %c0_i32_0 = arith.constant 0 : i32
    %c0_i32_1 = arith.constant 0 : i32
    return %c0_i32, %c0_i32_0 : i32, i32
  }
  func.func @transform_8(%arg0: i32) -> (i32, i32) {
    %c0_i32 = arith.constant 0 : i32
    %c0_i32_0 = arith.constant 0 : i32
    %c0_i32_1 = arith.constant 0 : i32
    return %c0_i32, %c0_i32_0 : i32, i32
  }
  func.func @transform_9(%arg0: i32) -> (i32, i32) {
    %c0_i32 = arith.constant 0 : i32
    %c0_i32_0 = arith.constant 0 : i32
    %c0_i32_1 = arith.constant 0 : i32
    return %c0_i32, %c0_i32_0 : i32, i32
  }
  func.func @transform_10(%arg0: i32) -> (i32, i32) {
    %c0_i32 = arith.constant 0 : i32
    %c0_i32_0 = arith.constant 0 : i32
    return %arg0, %c0_i32 : i32, i32
  }
  func.func @transform_11(%arg0: i32) -> (i32, i32) {
    %c0_i32 = arith.constant 0 : i32
    %c0_i32_0 = arith.constant 0 : i32
    return %arg0, %c0_i32 : i32, i32
  }
}

module attributes {stable_mosaic.version = 11 : i64} {
  func.func @_loss_kernel(%arg0: i32, %arg1: i32, %arg2: memref<1x2xf32, #tpu.memory_space<smem>>, %arg3: memref<128x128xbf16, #tpu.memory_space<vmem>>, %arg4: memref<128x128xbf16, #tpu.memory_space<vmem>>, %arg5: memref<128x128xbf16, #tpu.memory_space<vmem>>, %arg6: memref<128x128xbf16, #tpu.memory_space<vmem>>, %arg7: memref<1x1xf32, #tpu.memory_space<vmem>>) attributes {dimension_semantics = [#tpu.dimension_semantics<arbitrary>, #tpu.dimension_semantics<arbitrary>], iteration_bounds = array<i64: 2, 2>, scalar_prefetch = 0 : i64, scratch_operands = 0 : i64, tpu.core_type = #tpu.core_type<tc>, window_params = [{transform_indices = @transform_0, window_bounds = array<i64: 1, 2>}, {transform_indices = @transform_1, window_bounds = array<i64: 128, 128>}, {transform_indices = @transform_2, window_bounds = array<i64: 128, 128>}, {transform_indices = @transform_3, window_bounds = array<i64: 128, 128>}, {transform_indices = @transform_4, window_bounds = array<i64: 128, 128>}, {pipeline_mode = #tpu.pipeline_mode<synchronous>, transform_indices = @transform_5, window_bounds = array<i64: 1, 1>}]} {
    %c0_i32 = arith.constant 0 : i32
    %0 = arith.cmpi eq, %arg0, %c0_i32 : i32
    %c0_i32_0 = arith.constant 0 : i32
    %1 = arith.cmpi eq, %arg1, %c0_i32_0 : i32
    %2 = arith.andi %0, %1 : i1
    %3 = arith.extui %2 : i1 to i32
    %c0_i32_1 = arith.constant 0 : i32
    %4 = arith.cmpi ne, %3, %c0_i32_1 : i32
    scf.if %4 {
      %cst_25 = arith.constant 0.000000e+00 : f32
      %47 = vector.broadcast %cst_25 : f32 to vector<1x1xf32>
      %c0_26 = arith.constant 0 : index
      %c0_27 = arith.constant 0 : index
      %48 = vector.load %arg7[%c0_26, %c0_27] : memref<1x1xf32, #tpu.memory_space<vmem>>, vector<1x1xf32>
      tpu.vector_store %arg7[%c0_26, %c0_27], %47 {strides = array<i32>} : memref<1x1xf32, #tpu.memory_space<vmem>>, vector<1x1xf32>,
    } else {
    }
    %c0 = arith.constant 0 : index
    %c0_2 = arith.constant 0 : index
    %5 = vector.load %arg3[%c0, %c0_2] : memref<128x128xbf16, #tpu.memory_space<vmem>>, vector<128x128xbf16>
    %c0_3 = arith.constant 0 : index
    %c0_4 = arith.constant 0 : index
    %6 = vector.load %arg4[%c0_3, %c0_4] : memref<128x128xbf16, #tpu.memory_space<vmem>>, vector<128x128xbf16>
    %cst = arith.constant dense<0.000000e+00> : vector<128x128xf32>
    %7 = tpu.matmul %5, %6, %cst {dimension_numbers = #tpu.dot_dimension_numbers<[1], [0], [0], [1], [0, 0, 1, 1], [], []>} : vector<128x128xbf16>, vector<128x128xbf16>, vector<128x128xf32> -> vector<128x128xf32>
    %8 = math.absf %7 : vector<128x128xf32>
    %cst_5 = arith.constant 0.000000e+00 : f32
    %9 = vector.broadcast %cst_5 : f32 to vector<128x128xf32>
    %10 = arith.subf %9, %8 : vector<128x128xf32>
    %11 = math.exp %10 : vector<128x128xf32>
    %cst_6 = arith.constant 1.000000e+00 : f32
    %12 = vector.broadcast %cst_6 : f32 to vector<128x128xf32>
    %13 = arith.addf %12, %11 : vector<128x128xf32>
    %14 = math.log %13 : vector<128x128xf32>
    %c0_7 = arith.constant 0 : index
    %c0_8 = arith.constant 0 : index
    %15 = vector.load %arg5[%c0_7, %c0_8] : memref<128x128xbf16, #tpu.memory_space<vmem>>, vector<128x128xbf16>
    %16 = arith.extf %15 : vector<128x128xbf16> to vector<128x128xf32>
    %cst_9 = arith.constant 0.000000e+00 : f32
    %17 = vector.broadcast %cst_9 : f32 to vector<128x128xf32>
    %18 = arith.subf %17, %7 : vector<128x128xf32>
    %cst_10 = arith.constant 0.000000e+00 : f32
    %19 = vector.broadcast %cst_10 : f32 to vector<128x128xf32>
    %20 = arith.maximumf %18, %19 : vector<128x128xf32>
    %21 = arith.addf %20, %14 : vector<128x128xf32>
    %22 = arith.mulf %16, %21 : vector<128x128xf32>
    %c0_11 = arith.constant 0 : index
    %c0_12 = arith.constant 0 : index
    %23 = vector.load %arg6[%c0_11, %c0_12] : memref<128x128xbf16, #tpu.memory_space<vmem>>, vector<128x128xbf16>
    %24 = arith.extf %23 : vector<128x128xbf16> to vector<128x128xf32>
    %cst_13 = arith.constant 0.000000e+00 : f32
    %25 = vector.broadcast %cst_13 : f32 to vector<128x128xf32>
    %26 = arith.maximumf %7, %25 : vector<128x128xf32>
    %27 = arith.addf %26, %14 : vector<128x128xf32>
    %28 = arith.mulf %24, %27 : vector<128x128xf32>
    %c0_14 = arith.constant 0 : index
    %c0_15 = arith.constant 0 : index
    %29 = vector.load %arg7[%c0_14, %c0_15] : memref<1x1xf32, #tpu.memory_space<vmem>>, vector<1x1xf32>
    %cst_16 = arith.constant dense<0.000000e+00> : vector<128xf32>
    %30 = vector.multi_reduction <add>, %22, %cst_16 [1] : vector<128x128xf32> to vector<128xf32>
    %31 = vector.shape_cast %30 : vector<128xf32> to vector<128x1xf32>
    %cst_17 = arith.constant dense<0.000000e+00> : vector<1xf32>
    %32 = vector.multi_reduction <add>, %31, %cst_17 [0] : vector<128x1xf32> to vector<1xf32>
    %33 = vector.shape_cast %32 : vector<1xf32> to vector<1x1xf32>
    %c0_18 = arith.constant 0 : index
    %c0_19 = arith.constant 0 : index
    %34 = memref.load %arg2[%c0_18, %c0_19] : memref<1x2xf32, #tpu.memory_space<smem>>
    %35 = vector.broadcast %34 : f32 to vector<1x1xf32>
    %36 = arith.mulf %33, %35 : vector<1x1xf32>
    %cst_20 = arith.constant dense<0.000000e+00> : vector<128xf32>
    %37 = vector.multi_reduction <add>, %28, %cst_20 [1] : vector<128x128xf32> to vector<128xf32>
    %38 = vector.shape_cast %37 : vector<128xf32> to vector<128x1xf32>
    %cst_21 = arith.constant dense<0.000000e+00> : vector<1xf32>
    %39 = vector.multi_reduction <add>, %38, %cst_21 [0] : vector<128x1xf32> to vector<1xf32>
    %40 = vector.shape_cast %39 : vector<1xf32> to vector<1x1xf32>
    %c0_22 = arith.constant 0 : index
    %c1 = arith.constant 1 : index
    %41 = memref.load %arg2[%c0_22, %c1] : memref<1x2xf32, #tpu.memory_space<smem>>
    %42 = vector.broadcast %41 : f32 to vector<1x1xf32>
    %43 = arith.mulf %40, %42 : vector<1x1xf32>
    %44 = arith.addf %36, %43 : vector<1x1xf32>
    %45 = arith.addf %29, %44 : vector<1x1xf32>
    %c0_23 = arith.constant 0 : index
    %c0_24 = arith.constant 0 : index
    %46 = vector.load %arg7[%c0_23, %c0_24] : memref<1x1xf32, #tpu.memory_space<vmem>>, vector<1x1xf32>
    tpu.vector_store %arg7[%c0_23, %c0_24], %45 {strides = array<i32>} : memref<1x1xf32, #tpu.memory_space<vmem>>, vector<1x1xf32>,
    return
  }
  func.func @transform_0(%arg0: i32, %arg1: i32) -> (i32, i32) {
    %c0_i32 = arith.constant 0 : i32
    %c0_i32_0 = arith.constant 0 : i32
    %c0_i32_1 = arith.constant 0 : i32
    return %c0_i32, %c0_i32_0 : i32, i32
  }
  func.func @transform_1(%arg0: i32, %arg1: i32) -> (i32, i32) {
    %c0_i32 = arith.constant 0 : i32
    %c0_i32_0 = arith.constant 0 : i32
    return %arg0, %c0_i32 : i32, i32
  }
  func.func @transform_2(%arg0: i32, %arg1: i32) -> (i32, i32) {
    %c0_i32 = arith.constant 0 : i32
    %c0_i32_0 = arith.constant 0 : i32
    return %c0_i32, %arg1 : i32, i32
  }
  func.func @transform_3(%arg0: i32, %arg1: i32) -> (i32, i32) {
    %c0_i32 = arith.constant 0 : i32
    return %arg0, %arg1 : i32, i32
  }
  func.func @transform_4(%arg0: i32, %arg1: i32) -> (i32, i32) {
    %c0_i32 = arith.constant 0 : i32
    return %arg0, %arg1 : i32, i32
  }
  func.func @transform_5(%arg0: i32, %arg1: i32) -> (i32, i32) {
    %c0_i32 = arith.constant 0 : i32
    %c0_i32_0 = arith.constant 0 : i32
    %c0_i32_1 = arith.constant 0 : i32
    return %c0_i32, %c0_i32_0 : i32, i32
  }
}

module attributes {stable_mosaic.version = 11 : i64} {
  func.func @_conv3_kernel(%arg0: i32, %arg1: memref<256x128xbf16, #tpu.memory_space<vmem>>, %arg2: memref<128x128xbf16, #tpu.memory_space<vmem>>, %arg3: memref<128x256xbf16, #tpu.memory_space<vmem>>, %arg4: memref<256x128xbf16, #tpu.memory_space<vmem>>, %arg5: memref<1x128xf32, #tpu.memory_space<vmem>>, %arg6: memref<128x128xf32, #tpu.memory_space<vmem>>) attributes {dimension_semantics = [#tpu.dimension_semantics<parallel>], iteration_bounds = array<i64: 2>, scalar_prefetch = 0 : i64, scratch_operands = 0 : i64, tpu.core_type = #tpu.core_type<tc>, window_params = [{pipeline_mode = #tpu.pipeline_mode<synchronous>, transform_indices = @transform_0, window_bounds = array<i64: 256, 128>}, {transform_indices = @transform_1, window_bounds = array<i64: 128, 128>}, {transform_indices = @transform_2, window_bounds = array<i64: 128, 256>}, {pipeline_mode = #tpu.pipeline_mode<synchronous>, transform_indices = @transform_3, window_bounds = array<i64: 256, 128>}, {pipeline_mode = #tpu.pipeline_mode<synchronous>, transform_indices = @transform_4, window_bounds = array<i64: 1, 128>}, {transform_indices = @transform_5, window_bounds = array<i64: 128, 128>}]} {
    %c0 = arith.constant 0 : index
    %c0_0 = arith.constant 0 : index
    %0 = vector.load %arg3[%c0, %c0_0] : memref<128x256xbf16, #tpu.memory_space<vmem>>, vector<128x256xbf16>
    %c0_1 = arith.constant 0 : index
    %c0_2 = arith.constant 0 : index
    %1 = vector.load %arg1[%c0_1, %c0_2] : memref<256x128xbf16, #tpu.memory_space<vmem>>, vector<256x128xbf16>
    %cst = arith.constant dense<0.000000e+00> : vector<128x128xf32>
    %2 = tpu.matmul %0, %1, %cst {dimension_numbers = #tpu.dot_dimension_numbers<[1], [0], [0], [1], [0, 0, 1, 1], [], []>} : vector<128x256xbf16>, vector<256x128xbf16>, vector<128x128xf32> -> vector<128x128xf32>
    %c0_3 = arith.constant 0 : index
    %c0_4 = arith.constant 0 : index
    %3 = vector.load %arg2[%c0_3, %c0_4] : memref<128x128xbf16, #tpu.memory_space<vmem>>, vector<128x128xbf16>
    %4 = arith.truncf %2 : vector<128x128xf32> to vector<128x128xbf16>
    %5 = tpu.concatenate %3, %4 in 1 : vector<128x128xbf16>, vector<128x128xbf16> -> vector<128x256xbf16>
    %c0_5 = arith.constant 0 : index
    %c0_6 = arith.constant 0 : index
    %6 = vector.load %arg4[%c0_5, %c0_6] : memref<256x128xbf16, #tpu.memory_space<vmem>>, vector<256x128xbf16>
    %cst_7 = arith.constant dense<0.000000e+00> : vector<128x128xf32>
    %7 = tpu.matmul %5, %6, %cst_7 {dimension_numbers = #tpu.dot_dimension_numbers<[1], [0], [0], [1], [0, 0, 1, 1], [], []>} : vector<128x256xbf16>, vector<256x128xbf16>, vector<128x128xf32> -> vector<128x128xf32>
    %c0_8 = arith.constant 0 : index
    %c0_9 = arith.constant 0 : index
    %8 = vector.load %arg5[%c0_8, %c0_9] : memref<1x128xf32, #tpu.memory_space<vmem>>, vector<1x128xf32>
    %9 = vector.broadcast %8 : vector<1x128xf32> to vector<128x128xf32>
    %10 = arith.addf %7, %9 : vector<128x128xf32>
    %c0_10 = arith.constant 0 : index
    %c0_11 = arith.constant 0 : index
    %11 = vector.load %arg6[%c0_10, %c0_11] : memref<128x128xf32, #tpu.memory_space<vmem>>, vector<128x128xf32>
    tpu.vector_store %arg6[%c0_10, %c0_11], %10 {strides = array<i32>} : memref<128x128xf32, #tpu.memory_space<vmem>>, vector<128x128xf32>,
    return
  }
  func.func @transform_0(%arg0: i32) -> (i32, i32) {
    %c0_i32 = arith.constant 0 : i32
    %c0_i32_0 = arith.constant 0 : i32
    %c0_i32_1 = arith.constant 0 : i32
    return %c0_i32, %c0_i32_0 : i32, i32
  }
  func.func @transform_1(%arg0: i32) -> (i32, i32) {
    %c0_i32 = arith.constant 0 : i32
    %c0_i32_0 = arith.constant 0 : i32
    return %arg0, %c0_i32 : i32, i32
  }
  func.func @transform_2(%arg0: i32) -> (i32, i32) {
    %c0_i32 = arith.constant 0 : i32
    %c0_i32_0 = arith.constant 0 : i32
    return %arg0, %c0_i32 : i32, i32
  }
  func.func @transform_3(%arg0: i32) -> (i32, i32) {
    %c0_i32 = arith.constant 0 : i32
    %c0_i32_0 = arith.constant 0 : i32
    %c0_i32_1 = arith.constant 0 : i32
    return %c0_i32, %c0_i32_0 : i32, i32
  }
  func.func @transform_4(%arg0: i32) -> (i32, i32) {
    %c0_i32 = arith.constant 0 : i32
    %c0_i32_0 = arith.constant 0 : i32
    %c0_i32_1 = arith.constant 0 : i32
    return %c0_i32, %c0_i32_0 : i32, i32
  }
  func.func @transform_5(%arg0: i32) -> (i32, i32) {
    %c0_i32 = arith.constant 0 : i32
    %c0_i32_0 = arith.constant 0 : i32
    return %arg0, %c0_i32 : i32, i32
  }
}

</mosaic_0001>

<llo_original>
// kernel: chebnet_forward.4
$region0: #{chebnet_forward.4}
  #allocation0 [shape = 'u32[]', space=smem, size = 0x4, offset = 0x4, fixed_abs, tag = 'smem constant byte address 0x4 - core index']
  #allocation1 [shape = 'u32[144,128]{1,0:T(1,128)}', space=vmem, size = 0x12000, scoped, tag = 'internal scratch']
  %s0 = inlined_call_operand.vmem [shape: bf16[256,128], index: 0, kind: input, shape index: {}, may-alias: {0,1}]
  %s1 = inlined_call_operand.vmem [shape: bf16[256,128], index: 1, kind: input, shape index: {}, may-alias: {0,1}]
  %s2 = inlined_call_operand.vmem [shape: bf16[256,256], index: 2, kind: input, shape index: {}]
  %s3 = inlined_call_operand.vmem [shape: bf16[256,384], index: 3, kind: input, shape index: {}]
  %s4 = inlined_call_operand.vmem [shape: f32[1,384], index: 4, kind: input, shape index: {}]
  %s5 = inlined_call_operand.vmem [shape: bf16[256,384], index: 5, kind: output, shape index: {}]
  %s6 = sld [smem:[#allocation0]]
  $region53: #{chebnet_forward.4} parent=0
    _
  %s8 = ssub.s32 1, %s6
  %s9 = scalar_select 0, %s8, %s6
  loop: start=0, step=1, limit=4
  $region2: #{chebnet_forward.4} parent=0 // loop_pre_header
    _
  $region3: #{chebnet_forward.4} parent=0 // loop_header
    %s11 = sphi 0, %s15
    %p12 = scmp.ge.s32.totalorder %s11, 4
    %s19 = sphi 0, %s19
    %s21 = sphi 0, %s19
    %s22 = sphi 0, %s21
    %s36 = sphi 0, %s22
    %s42 = sphi 0, %s44
    %s45 = sphi 0, %s42
    %s46 = sphi 0, %s45
    %s62 = sphi 0, %s46
    %s68 = sphi 0, %s70
    %s71 = sphi 0, %s68
    %s72 = sphi 0, %s71
    %s88 = sphi 0, %s72
    %s92 = sphi 0, %s92
    %s94 = sphi 0, %s92
    %s95 = sphi 0, %s94
    %s109 = sphi 0, %s95
    %s113 = sphi 0, %s113
    %s115 = sphi 0, %s113
    %s116 = sphi 0, %s115
    %s130 = sphi 0, %s116
    %s136 = sphi 0, %s138
    %s139 = sphi 0, %s136
    %s140 = sphi 0, %s139
    %s156 = sphi 0, %s140
  $region4: #{chebnet_forward.4} parent=0 // loop_header_branch
    %14 = sbr.rel (%p12) target = $region8
  $region5: #{chebnet_forward.4} parent=0 // loop_body
    %s16 = ssub.s32 %s11, 1
    %s17 = ssub.s32 %s11, 2
    %s18 = sadd.s32 %s11, 1
    %s20 = sadd.s32 %s19, 1
    %p23 = scmp.eq.s32.totalorder %s11, 1
    %p24 = scmp.ne.s32.totalorder %s19, %s21
    %p25 = scmp.eq.s32.totalorder %s11, 0
    %p26 = por %p24, %p25
    %p27 = scmp.ne.s32.totalorder %s19, %s21
    %p28 = scmp.eq.s32.totalorder %s16, 1
    %p29 = por %p27, %p28
    %p30 = scmp.ne.s32.totalorder %s21, %s22
    %p31 = scmp.eq.s32.totalorder %s16, 0
    %p32 = por %p30, %p31
    %p33 = scmp.ne.s32.totalorder %s21, %s22
    %p34 = scmp.eq.s32.totalorder %s17, 1
    %p35 = por %p33, %p34
    %p37 = scmp.ne.s32.totalorder %s22, %s36
    %p38 = scmp.eq.s32.totalorder %s17, 0
    %p39 = por %p37, %p38
    %s40 = ssub.s32 %s11, %s18
    %p41 = scmp.eq.s32.totalorder %s40, 0
    %s43 = sadd.s32 %s42, 1
    %s44 = scalar_select %p41, %s42, %s43
    %p47 = pneg %p41
    %p48 = scmp.eq.s32.totalorder %s11, 1
    %p49 = por %p47, %p48
    %p50 = scmp.ne.s32.totalorder %s42, %s45
    %p51 = scmp.eq.s32.totalorder %s11, 0
    %p52 = por %p50, %p51
    %p53 = scmp.ne.s32.totalorder %s42, %s45
    %p54 = scmp.eq.s32.totalorder %s16, 1
    %p55 = por %p53, %p54
    %p56 = scmp.ne.s32.totalorder %s45, %s46
    %p57 = scmp.eq.s32.totalorder %s16, 0
    %p58 = por %p56, %p57
    %p59 = scmp.ne.s32.totalorder %s45, %s46
    %p60 = scmp.eq.s32.totalorder %s17, 1
    %p61 = por %p59, %p60
    %p63 = scmp.ne.s32.totalorder %s46, %s62
    %p64 = scmp.eq.s32.totalorder %s17, 0
    %p65 = por %p63, %p64
    %s66 = ssub.s32 %s11, %s18
    %p67 = scmp.eq.s32.totalorder %s66, 0
    %s69 = sadd.s32 %s68, 1
    %s70 = scalar_select %p67, %s68, %s69
    %p73 = pneg %p67
    %p74 = scmp.eq.s32.totalorder %s11, 1
    %p75 = por %p73, %p74
    %p76 = scmp.ne.s32.totalorder %s68, %s71
    %p77 = scmp.eq.s32.totalorder %s11, 0
    %p78 = por %p76, %p77
    %p79 = scmp.ne.s32.totalorder %s68, %s71
    %p80 = scmp.eq.s32.totalorder %s16, 1
    %p81 = por %p79, %p80
    %p82 = scmp.ne.s32.totalorder %s71, %s72
    %p83 = scmp.eq.s32.totalorder %s16, 0
    %p84 = por %p82, %p83
    %p85 = scmp.ne.s32.totalorder %s71, %s72
    %p86 = scmp.eq.s32.totalorder %s17, 1
    %p87 = por %p85, %p86
    %p89 = scmp.ne.s32.totalorder %s72, %s88
    %p90 = scmp.eq.s32.totalorder %s17, 0
    %p91 = por %p89, %p90
    %s93 = sadd.s32 %s92, 1
    %p96 = scmp.eq.s32.totalorder %s11, 1
    %p97 = scmp.ne.s32.totalorder %s92, %s94
    %p98 = scmp.eq.s32.totalorder %s11, 0
    %p99 = por %p97, %p98
    %p100 = scmp.ne.s32.totalorder %s92, %s94
    %p101 = scmp.eq.s32.totalorder %s16, 1
    %p102 = por %p100, %p101
    %p103 = scmp.ne.s32.totalorder %s94, %s95
    %p104 = scmp.eq.s32.totalorder %s16, 0
    %p105 = por %p103, %p104
    %p106 = scmp.ne.s32.totalorder %s94, %s95
    %p107 = scmp.eq.s32.totalorder %s17, 1
    %p108 = por %p106, %p107
    %p110 = scmp.ne.s32.totalorder %s95, %s109
    %p111 = scmp.eq.s32.totalorder %s17, 0
    %p112 = por %p110, %p111
    %s114 = sadd.s32 %s113, 1
    %p117 = scmp.eq.s32.totalorder %s11, 1
    %p118 = scmp.ne.s32.totalorder %s113, %s115
    %p119 = scmp.eq.s32.totalorder %s11, 0
    %p120 = por %p118, %p119
    %p121 = scmp.ne.s32.totalorder %s113, %s115
    %p122 = scmp.eq.s32.totalorder %s16, 1
    %p123 = por %p121, %p122
    %p124 = scmp.ne.s32.totalorder %s115, %s116
    %p125 = scmp.eq.s32.totalorder %s16, 0
    %p126 = por %p124, %p125
    %p127 = scmp.ne.s32.totalorder %s115, %s116
    %p128 = scmp.eq.s32.totalorder %s17, 1
    %p129 = por %p127, %p128
    %p131 = scmp.ne.s32.totalorder %s116, %s130
    %p132 = scmp.eq.s32.totalorder %s17, 0
    %p133 = por %p131, %p132
    %s134 = ssub.s32 %s11, %s18
    %p135 = scmp.eq.s32.totalorder %s134, 0
    %s137 = sadd.s32 %s136, 1
    %s138 = scalar_select %p135, %s136, %s137
    %p141 = pneg %p135
    %p142 = scmp.eq.s32.totalorder %s11, 1
    %p143 = por %p141, %p142
    %p144 = scmp.ne.s32.totalorder %s136, %s139
    %p145 = scmp.eq.s32.totalorder %s11, 0
    %p146 = por %p144, %p145
    %p147 = scmp.ne.s32.totalorder %s136, %s139
    %p148 = scmp.eq.s32.totalorder %s16, 1
    %p149 = por %p147, %p148
    %p150 = scmp.ne.s32.totalorder %s139, %s140
    %p151 = scmp.eq.s32.totalorder %s16, 0
    %p152 = por %p150, %p151
    %p153 = scmp.ne.s32.totalorder %s139, %s140
    %p154 = scmp.eq.s32.totalorder %s17, 1
    %p155 = por %p153, %p154
    %p157 = scmp.ne.s32.totalorder %s140, %s156
    %p158 = scmp.eq.s32.totalorder %s17, 0
    %p159 = por %p157, %p158
    %p160 = scmp.le.s32.totalorder 1, %s11
    %p161 = scmp.lt.s32.totalorder %s11, 3
    %p162 = pnand %p160, %p161
    %p163 = pneg %p162
    // Predicated region
    $region9: #{chebnet_forward.4} parent=5 // pred_check
      _
    $region10: #{chebnet_forward.4} parent=5 // pred_check_branch
      %165 = sbr.rel (%p162) target = $region12
    $region11: #{chebnet_forward.4} parent=5 // pred_region
      %s166 = ssub.s32 %s11, 1
      // Predicated region
      $region13: #{chebnet_forward.4} parent=11 // pred_check
        %p167 = pneg %p32
      $region14: #{chebnet_forward.4} parent=11 // pred_check_branch
        %169 = sbr.rel (%p167) target = $region16
      $region15: #{chebnet_forward.4} parent=11 // pred_region
        _
      $region16: #{chebnet_forward.4} parent=11 // pred_fallthru
        _
      // Predicated region
      $region17: #{chebnet_forward.4} parent=11 // pred_check
        %p170 = pneg %p105
      $region18: #{chebnet_forward.4} parent=11 // pred_check_branch
        %172 = sbr.rel (%p170) target = $region20
      $region19: #{chebnet_forward.4} parent=11 // pred_region
        _
      $region20: #{chebnet_forward.4} parent=11 // pred_fallthru
        _
      // Predicated region
      $region21: #{chebnet_forward.4} parent=11 // pred_check
        %p173 = pneg %p126
      $region22: #{chebnet_forward.4} parent=11 // pred_check_branch
        %175 = sbr.rel (%p173) target = $region24
      $region23: #{chebnet_forward.4} parent=11 // pred_region
        _
      $region24: #{chebnet_forward.4} parent=11 // pred_fallthru
        _
    $region12: #{chebnet_forward.4} parent=5 // pred_fallthru
      _
    %p176 = scmp.lt.s32.totalorder %s11, 2
    // Predicated region
    $region25: #{chebnet_forward.4} parent=5 // pred_check
      %p177 = pneg %p176
    $region26: #{chebnet_forward.4} parent=5 // pred_check_branch
      %179 = sbr.rel (%p177) target = $region28
    $region27: #{chebnet_forward.4} parent=5 // pred_region
      // Predicated region
      $region29: #{chebnet_forward.4} parent=27 // pred_check
        %p180 = pneg %p52
      $region30: #{chebnet_forward.4} parent=27 // pred_check_branch
        %182 = sbr.rel (%p180) target = $region32
      $region31: #{chebnet_forward.4} parent=27 // pred_region
        %s183 = smul.u32 16, %s11
        %p184 = scmp.lt.s32.totalorder %s183, 31
        %s185 = scalar_select %p184, %s183, 31
        %s186 = smul.addr %s185, 4
        %s187 = scalar_lea.vmem %s1, %s186
        %s188 = smul.u32 16, %s11
      $region32: #{chebnet_forward.4} parent=27 // pred_fallthru
        _
      // Predicated region
      $region33: #{chebnet_forward.4} parent=27 // pred_check
        %p189 = pneg %p78
      $region34: #{chebnet_forward.4} parent=27 // pred_check_branch
        %191 = sbr.rel (%p189) target = $region36
      $region35: #{chebnet_forward.4} parent=27 // pred_region
        %s192 = smul.u32 16, %s11
        %p193 = scmp.lt.s32.totalorder %s192, 31
        %s194 = scalar_select %p193, %s192, 31
        %s195 = smul.addr %s194, 2
        %s196 = smul.addr %s195, 4
        %s197 = scalar_lea.vmem %s2, %s196
        %s198 = smul.u32 16, %s11
      $region36: #{chebnet_forward.4} parent=27 // pred_fallthru
        _
    $region28: #{chebnet_forward.4} parent=5 // pred_fallthru
      _
    %p199 = scmp.le.s32.totalorder 1, %s11
    %p200 = scmp.lt.s32.totalorder %s11, 3
    %p201 = pnand %p199, %p200
    %p202 = pneg %p201
    // Predicated region
    $region37: #{chebnet_forward.4} parent=5 // pred_check
      _
    $region38: #{chebnet_forward.4} parent=5 // pred_check_branch
      %204 = sbr.rel (%p201) target = $region40
    $region39: #{chebnet_forward.4} parent=5 // pred_region
      %s205 = ssub.s32 %s11, 1
      %p206 = pneg %p32
      %p207 = pneg %p29
      %s208 = smul.u32 16, %s16
      %p209 = scmp.lt.s32.totalorder %s208, 31
      %s210 = scalar_select %p209, %s208, 31
      %s211 = smul.addr %s210, 4
      %s212 = scalar_lea.vmem %s1, %s211
      %p213 = pneg %p58
      %p214 = pneg %p55
      %s215 = smul.u32 16, %s16
      %p216 = scmp.lt.s32.totalorder %s215, 31
      %s217 = scalar_select %p216, %s215, 31
      %s218 = smul.addr %s217, 2
      %s219 = smul.addr %s218, 4
      %s220 = scalar_lea.vmem %s2, %s219
      %p221 = pneg %p84
      %p222 = pneg %p81
      %p223 = pneg %p105
      %p224 = pneg %p102
      %p225 = pneg %p126
      %p226 = pneg %p123
      %p227 = pneg %p152
      %p228 = pneg %p149
      %s229 = smul.u32 16, %s16
      %p230 = scmp.lt.s32.totalorder %s229, 31
      %s231 = scalar_select %p230, %s229, 31
      %s232 = smul.addr %s231, 3
      %s233 = smul.addr %s232, 4
      %s234 = scalar_lea.vmem %s5, %s233
      %s235 = smul.u32 16, %s16
      %p236 = scmp.lt.s32.totalorder %s235, 31
      %s237 = scalar_select %p236, %s235, 31
      %s238 = smul.addr %s237, 4
      %s239 = scalar_lea.vmem %s1, %s238
      %s240 = smul.u32 16, %s16
      %s241 = smul.u32 16, %s16
      %p242 = scmp.lt.s32.totalorder %s241, 31
      %s243 = scalar_select %p242, %s241, 31
      %s244 = smul.addr %s243, 2
      %s245 = smul.addr %s244, 4
      %s246 = scalar_lea.vmem %s2, %s245
      %s247 = smul.u32 16, %s16
      %s248 = smul.u32 16, %s16
      %p249 = scmp.lt.s32.totalorder %s248, 31
      %s250 = scalar_select %p249, %s248, 31
      %s251 = smul.addr %s250, 3
      %s252 = smul.addr %s251, 4
      %s253 = scalar_lea.vmem %s5, %s252
      %s254 = smul.u32 16, %s16
      %v256 = vld [vmem:[%s246] sm:$0xff]
      %v257 = vld [vmem:[%s246 + $0x8] sm:$0xff]
      %v258 = vld [vmem:[%s246 + $0x10] sm:$0xff]
      %v259 = vld [vmem:[%s246 + $0x18] sm:$0xff]
      %v260 = vld [vmem:[%s246 + $0x20] sm:$0xff]
      %v261 = vld [vmem:[%s246 + $0x28] sm:$0xff]
      %v262 = vld [vmem:[%s246 + $0x30] sm:$0xff]
      %v263 = vld [vmem:[%s246 + $0x38] sm:$0xff]
      %v264 = vld [vmem:[%s246 + $0x40] sm:$0xff]
      %v265 = vld [vmem:[%s246 + $0x48] sm:$0xff]
      %v266 = vld [vmem:[%s246 + $0x50] sm:$0xff]
      %v267 = vld [vmem:[%s246 + $0x58] sm:$0xff]
      %v268 = vld [vmem:[%s246 + $0x60] sm:$0xff]
      %v269 = vld [vmem:[%s246 + $0x68] sm:$0xff]
      %v270 = vld [vmem:[%s246 + $0x70] sm:$0xff]
      %v271 = vld [vmem:[%s246 + $0x78] sm:$0xff]
      %v272 = vld [vmem:[%s0] sm:$0xf]
      %v273 = vld [vmem:[%s0 + $0x4] sm:$0xf]
      %v274 = vld [vmem:[%s0 + $0x8] sm:$0xf]
      %v275 = vld [vmem:[%s0 + $0xc] sm:$0xf]
      %v276 = vld [vmem:[%s0 + $0x10] sm:$0xf]
      %v277 = vld [vmem:[%s0 + $0x14] sm:$0xf]
      %v278 = vld [vmem:[%s0 + $0x18] sm:$0xf]
      %v279 = vld [vmem:[%s0 + $0x1c] sm:$0xf]
      %v280 = vld [vmem:[%s0 + $0x20] sm:$0xf]
      %v281 = vld [vmem:[%s0 + $0x24] sm:$0xf]
      %v282 = vld [vmem:[%s0 + $0x28] sm:$0xf]
      %v283 = vld [vmem:[%s0 + $0x2c] sm:$0xf]
      %v284 = vld [vmem:[%s0 + $0x30] sm:$0xf]
      %v285 = vld [vmem:[%s0 + $0x34] sm:$0xf]
      %v286 = vld [vmem:[%s0 + $0x38] sm:$0xf]
      %v287 = vld [vmem:[%s0 + $0x3c] sm:$0xf]
      %v288 = vld [vmem:[%s0 + $0x40] sm:$0xf]
      %v289 = vld [vmem:[%s0 + $0x44] sm:$0xf]
      %v290 = vld [vmem:[%s0 + $0x48] sm:$0xf]
      %v291 = vld [vmem:[%s0 + $0x4c] sm:$0xf]
      %v292 = vld [vmem:[%s0 + $0x50] sm:$0xf]
      %v293 = vld [vmem:[%s0 + $0x54] sm:$0xf]
      %v294 = vld [vmem:[%s0 + $0x58] sm:$0xf]
      %v295 = vld [vmem:[%s0 + $0x5c] sm:$0xf]
      %v296 = vld [vmem:[%s0 + $0x60] sm:$0xf]
      %v297 = vld [vmem:[%s0 + $0x64] sm:$0xf]
      %v298 = vld [vmem:[%s0 + $0x68] sm:$0xf]
      %v299 = vld [vmem:[%s0 + $0x6c] sm:$0xf]
      %v300 = vld [vmem:[%s0 + $0x70] sm:$0xf]
      %v301 = vld [vmem:[%s0 + $0x74] sm:$0xf]
      %v302 = vld [vmem:[%s0 + $0x78] sm:$0xf]
      %v303 = vld [vmem:[%s0 + $0x7c] sm:$0xf]
      %v320 = vunpack.c.l.b16 %v256
      %v321 = vunpack.c.h.b16 %v256
      %v322 = vunpack.c.l.b16 %v257
      %v323 = vunpack.c.h.b16 %v257
      %v324 = vunpack.c.l.b16 %v258
      %v325 = vunpack.c.h.b16 %v258
      %v326 = vunpack.c.l.b16 %v259
      %v327 = vunpack.c.h.b16 %v259
      %v328 = vunpack.c.l.b16 %v260
      %v329 = vunpack.c.h.b16 %v260
      %v330 = vunpack.c.l.b16 %v261
      %v331 = vunpack.c.h.b16 %v261
      %v332 = vunpack.c.l.b16 %v262
      %v333 = vunpack.c.h.b16 %v262
      %v334 = vunpack.c.l.b16 %v263
      %v335 = vunpack.c.h.b16 %v263
      %v336 = vunpack.c.l.b16 %v264
      %v337 = vunpack.c.h.b16 %v264
      %v338 = vunpack.c.l.b16 %v265
      %v339 = vunpack.c.h.b16 %v265
      %v340 = vunpack.c.l.b16 %v266
      %v341 = vunpack.c.h.b16 %v266
      %v342 = vunpack.c.l.b16 %v267
      %v343 = vunpack.c.h.b16 %v267
      %v344 = vunpack.c.l.b16 %v268
      %v345 = vunpack.c.h.b16 %v268
      %v346 = vunpack.c.l.b16 %v269
      %v347 = vunpack.c.h.b16 %v269
      %v348 = vunpack.c.l.b16 %v270
      %v349 = vunpack.c.h.b16 %v270
      %v350 = vunpack.c.l.b16 %v271
      %v351 = vunpack.c.h.b16 %v271
      %v352 = vpack.c.b16 %v322, %v320
      %v353 = vpack.c.b16 %v323, %v321
      %v354 = vpack.c.b16 %v326, %v324
      %v355 = vpack.c.b16 %v327, %v325
      %v356 = vpack.c.b16 %v330, %v328
      %v357 = vpack.c.b16 %v331, %v329
      %v358 = vpack.c.b16 %v334, %v332
      %v359 = vpack.c.b16 %v335, %v333
      %v360 = vpack.c.b16 %v338, %v336
      %v361 = vpack.c.b16 %v339, %v337
      %v362 = vpack.c.b16 %v342, %v340
      %v363 = vpack.c.b16 %v343, %v341
      %v364 = vpack.c.b16 %v346, %v344
      %v365 = vpack.c.b16 %v347, %v345
      %v366 = vpack.c.b16 %v350, %v348
      %v367 = vpack.c.b16 %v351, %v349
      %v416 = vunpack.c.l.b16 %v272
      %v417 = vunpack.c.l.b16 %v273
      %v418 = vunpack.c.l.b16 %v274
      %v419 = vunpack.c.l.b16 %v275
      %v420 = vunpack.c.l.b16 %v276
      %v421 = vunpack.c.l.b16 %v277
      %v422 = vunpack.c.l.b16 %v278
      %v423 = vunpack.c.l.b16 %v279
      %v424 = vunpack.c.l.b16 %v280
      %v425 = vunpack.c.l.b16 %v281
      %v426 = vunpack.c.l.b16 %v282
      %v427 = vunpack.c.l.b16 %v283
      %v428 = vunpack.c.l.b16 %v284
      %v429 = vunpack.c.l.b16 %v285
      %v430 = vunpack.c.l.b16 %v286
      %v431 = vunpack.c.l.b16 %v287
      %v432 = vunpack.c.l.b16 %v288
      %v433 = vunpack.c.l.b16 %v289
      %v434 = vunpack.c.l.b16 %v290
      %v435 = vunpack.c.l.b16 %v291
      %v436 = vunpack.c.l.b16 %v292
      %v437 = vunpack.c.l.b16 %v293
      %v438 = vunpack.c.l.b16 %v294
      %v439 = vunpack.c.l.b16 %v295
      %v440 = vunpack.c.l.b16 %v296
      %v441 = vunpack.c.l.b16 %v297
      %v442 = vunpack.c.l.b16 %v298
      %v443 = vunpack.c.l.b16 %v299
      %v444 = vunpack.c.l.b16 %v300
      %v445 = vunpack.c.l.b16 %v301
      %v446 = vunpack.c.l.b16 %v302
      %v447 = vunpack.c.l.b16 %v303
      %v448 = vpack.c.b16 %v417, %v416
      %v449 = vpack.c.b16 %v419, %v418
      %v450 = vpack.c.b16 %v421, %v420
      %v451 = vpack.c.b16 %v423, %v422
      %v452 = vpack.c.b16 %v425, %v424
      %v453 = vpack.c.b16 %v427, %v426
      %v454 = vpack.c.b16 %v429, %v428
      %v455 = vpack.c.b16 %v431, %v430
      %v456 = vpack.c.b16 %v433, %v432
      %v457 = vpack.c.b16 %v435, %v434
      %v458 = vpack.c.b16 %v437, %v436
      %v459 = vpack.c.b16 %v439, %v438
      %v460 = vpack.c.b16 %v441, %v440
      %v461 = vpack.c.b16 %v443, %v442
      %v462 = vpack.c.b16 %v445, %v444
      %v463 = vpack.c.b16 %v447, %v446
      %480 = vmatprep.subr.bf16.mxu0 0
      %481 = vmatpush1.bf16.msra.mxu0 %v448
      %482 = vmatprep.subr.bf16.mxu0 0
      %483 = vmatpush1.bf16.msra.mxu0 %v449
      %484 = vmatprep.subr.bf16.mxu0 0
      %485 = vmatpush1.bf16.msra.mxu0 %v450
      %486 = vmatprep.subr.bf16.mxu0 0
      %487 = vmatpush1.bf16.msra.mxu0 %v451
      %488 = vmatprep.subr.bf16.mxu0 0
      %489 = vmatpush1.bf16.msra.mxu0 %v452
      %490 = vmatprep.subr.bf16.mxu0 0
      %491 = vmatpush1.bf16.msra.mxu0 %v453
      %492 = vmatprep.subr.bf16.mxu0 0
      %493 = vmatpush1.bf16.msra.mxu0 %v454
      %494 = vmatprep.subr.bf16.mxu0 0
      %495 = vmatpush1.bf16.msra.mxu0 %v455
      %496 = vmatprep.subr.bf16.mxu0 0
      %497 = vmatpush1.bf16.msra.mxu0 %v456
      %498 = vmatprep.subr.bf16.mxu0 0
      %499 = vmatpush1.bf16.msra.mxu0 %v457
      %500 = vmatprep.subr.bf16.mxu0 0
      %501 = vmatpush1.bf16.msra.mxu0 %v458
      %502 = vmatprep.subr.bf16.mxu0 0
      %503 = vmatpush1.bf16.msra.mxu0 %v459
      %504 = vmatprep.subr.bf16.mxu0 0
      %505 = vmatpush1.bf16.msra.mxu0 %v460
      %506 = vmatprep.subr.bf16.mxu0 0
      %507 = vmatpush1.bf16.msra.mxu0 %v461
      %508 = vmatprep.subr.bf16.mxu0 0
      %509 = vmatpush1.bf16.msra.mxu0 %v462
      %510 = vmatprep.subr.bf16.mxu0 0
      %511 = vmatpush1.bf16.msra.mxu0 %v463
      %512 = vmatprep.mubr.bf16.mxu0 %v353
      %513 = vmatmul.mubr.bf16.gmra.mrb[0].mxu0 %v352
      %v514 = vpop.f32.mrb[0].mxu0
      %v515 = vadd.f32 0.0, %v514
      %v516 = vpop.f32.mrb[0].mxu0
      %v517 = vpop.f32.mrb[0].mxu0
      %v518 = vadd.f32 0.0, %v517
      %v519 = vpop.f32.mrb[0].mxu0
      %520 = vmatprep.mubr.bf16.mxu0 %v355
      %521 = vmatmul.mubr.bf16.gmra.mrb[0].mxu0 %v354
      %v522 = vpop.f32.mrb[0].mxu0
      %v523 = vadd.f32 0.0, %v522
      %v524 = vpop.f32.mrb[0].mxu0
      %v525 = vpop.f32.mrb[0].mxu0
      %v526 = vadd.f32 0.0, %v525
      %v527 = vpop.f32.mrb[0].mxu0
      %528 = vmatprep.mubr.bf16.mxu0 %v357
      %529 = vmatmul.mubr.bf16.gmra.mrb[0].mxu0 %v356
      %v530 = vpop.f32.mrb[0].mxu0
      %v531 = vadd.f32 0.0, %v530
      %v532 = vpop.f32.mrb[0].mxu0
      %v533 = vpop.f32.mrb[0].mxu0
      %v534 = vadd.f32 0.0, %v533
      %v535 = vpop.f32.mrb[0].mxu0
      %536 = vmatprep.mubr.bf16.mxu0 %v359
      %537 = vmatmul.mubr.bf16.gmra.mrb[0].mxu0 %v358
      %v538 = vpop.f32.mrb[0].mxu0
      %v539 = vadd.f32 0.0, %v538
      %v540 = vpop.f32.mrb[0].mxu0
      %v541 = vpop.f32.mrb[0].mxu0
      %v542 = vadd.f32 0.0, %v541
      %v543 = vpop.f32.mrb[0].mxu0
      %544 = vmatprep.mubr.bf16.mxu0 %v361
      %545 = vmatmul.mubr.bf16.gmra.mrb[0].mxu0 %v360
      %v546 = vpop.f32.mrb[0].mxu0
      %v547 = vadd.f32 0.0, %v546
      %v548 = vpop.f32.mrb[0].mxu0
      %v549 = vpop.f32.mrb[0].mxu0
      %v550 = vadd.f32 0.0, %v549
      %v551 = vpop.f32.mrb[0].mxu0
      %552 = vmatprep.mubr.bf16.mxu0 %v363
      %553 = vmatmul.mubr.bf16.gmra.mrb[0].mxu0 %v362
      %v554 = vpop.f32.mrb[0].mxu0
      %v555 = vadd.f32 0.0, %v554
      %v556 = vpop.f32.mrb[0].mxu0
      %v557 = vpop.f32.mrb[0].mxu0
      %v558 = vadd.f32 0.0, %v557
      %v559 = vpop.f32.mrb[0].mxu0
      %560 = vmatprep.mubr.bf16.mxu0 %v365
      %561 = vmatmul.mubr.bf16.gmra.mrb[0].mxu0 %v364
      %v562 = vpop.f32.mrb[0].mxu0
      %v563 = vadd.f32 0.0, %v562
      %v564 = vpop.f32.mrb[0].mxu0
      %v565 = vpop.f32.mrb[0].mxu0
      %v566 = vadd.f32 0.0, %v565
      %v567 = vpop.f32.mrb[0].mxu0
      %568 = vmatprep.mubr.bf16.mxu0 %v367
      %569 = vmatmul.mubr.bf16.gmra.mrb[0].mxu0 %v366
      %v570 = vpop.f32.mrb[0].mxu0
      %v571 = vadd.f32 0.0, %v570
      %v572 = vpop.f32.mrb[0].mxu0
      %v573 = vpop.f32.mrb[0].mxu0
      %v574 = vadd.f32 0.0, %v573
      %v575 = vpop.f32.mrb[0].mxu0
      %576 = vdwg.mxu0
      %v577 = vld [vmem:[%s239] sm:$0xf]
      %v578 = vld [vmem:[%s239 + $0x4] sm:$0xf]
      %v579 = vld [vmem:[%s239 + $0x8] sm:$0xf]
      %v580 = vld [vmem:[%s239 + $0xc] sm:$0xf]
      %v581 = vld [vmem:[%s239 + $0x10] sm:$0xf]
      %v582 = vld [vmem:[%s239 + $0x14] sm:$0xf]
      %v583 = vld [vmem:[%s239 + $0x18] sm:$0xf]
      %v584 = vld [vmem:[%s239 + $0x1c] sm:$0xf]
      %v585 = vld [vmem:[%s239 + $0x20] sm:$0xf]
      %v586 = vld [vmem:[%s239 + $0x24] sm:$0xf]
      %v587 = vld [vmem:[%s239 + $0x28] sm:$0xf]
      %v588 = vld [vmem:[%s239 + $0x2c] sm:$0xf]
      %v589 = vld [vmem:[%s239 + $0x30] sm:$0xf]
      %v590 = vld [vmem:[%s239 + $0x34] sm:$0xf]
      %v591 = vld [vmem:[%s239 + $0x38] sm:$0xf]
      %v592 = vld [vmem:[%s239 + $0x3c] sm:$0xf]
      %v593 = vpack.c.bf16 %v518, %v515
      %v594 = vpack.c.bf16 %v526, %v523
      %v595 = vpack.c.bf16 %v534, %v531
      %v596 = vpack.c.bf16 %v542, %v539
      %v597 = vpack.c.bf16 %v550, %v547
      %v598 = vpack.c.bf16 %v558, %v555
      %v599 = vpack.c.bf16 %v566, %v563
      %v600 = vpack.c.bf16 %v574, %v571
      %v617 = vunpack.c.l.b16 %v577
      %v618 = vunpack.c.l.b16 %v578
      %v619 = vunpack.c.l.b16 %v579
      %v620 = vunpack.c.l.b16 %v580
      %v621 = vunpack.c.l.b16 %v581
      %v622 = vunpack.c.l.b16 %v582
      %v623 = vunpack.c.l.b16 %v583
      %v624 = vunpack.c.l.b16 %v584
      %v625 = vunpack.c.l.b16 %v585
      %v626 = vunpack.c.l.b16 %v586
      %v627 = vunpack.c.l.b16 %v587
      %v628 = vunpack.c.l.b16 %v588
      %v629 = vunpack.c.l.b16 %v589
      %v630 = vunpack.c.l.b16 %v590
      %v631 = vunpack.c.l.b16 %v591
      %v632 = vunpack.c.l.b16 %v592
      %v633 = vpack.c.b16 %v618, %v617
      %v634 = vpack.c.b16 %v620, %v619
      %v635 = vpack.c.b16 %v622, %v621
      %v636 = vpack.c.b16 %v624, %v623
      %v637 = vpack.c.b16 %v626, %v625
      %v638 = vpack.c.b16 %v628, %v627
      %v639 = vpack.c.b16 %v630, %v629
      %v640 = vpack.c.b16 %v632, %v631
      %v649 = vld [vmem:[%s3] sm:$0xff]
      %v650 = vld [vmem:[%s3 + $0x8] sm:$0xf]
      %v651 = vld [vmem:[%s3 + $0xc] sm:$0xff]
      %v652 = vld [vmem:[%s3 + $0x14] sm:$0xf]
      %v653 = vld [vmem:[%s3 + $0x18] sm:$0xff]
      %v654 = vld [vmem:[%s3 + $0x20] sm:$0xf]
      %v655 = vld [vmem:[%s3 + $0x24] sm:$0xff]
      %v656 = vld [vmem:[%s3 + $0x2c] sm:$0xf]
      %v657 = vld [vmem:[%s3 + $0x30] sm:$0xff]
      %v658 = vld [vmem:[%s3 + $0x38] sm:$0xf]
      %v659 = vld [vmem:[%s3 + $0x3c] sm:$0xff]
      %v660 = vld [vmem:[%s3 + $0x44] sm:$0xf]
      %v661 = vld [vmem:[%s3 + $0x48] sm:$0xff]
      %v662 = vld [vmem:[%s3 + $0x50] sm:$0xf]
      %v663 = vld [vmem:[%s3 + $0x54] sm:$0xff]
      %v664 = vld [vmem:[%s3 + $0x5c] sm:$0xf]
      %v665 = vld [vmem:[%s3 + $0x60] sm:$0xff]
      %v666 = vld [vmem:[%s3 + $0x68] sm:$0xf]
      %v667 = vld [vmem:[%s3 + $0x6c] sm:$0xff]
      %v668 = vld [vmem:[%s3 + $0x74] sm:$0xf]
      %v669 = vld [vmem:[%s3 + $0x78] sm:$0xff]
      %v670 = vld [vmem:[%s3 + $0x80] sm:$0xf]
      %v671 = vld [vmem:[%s3 + $0x84] sm:$0xff]
      %v672 = vld [vmem:[%s3 + $0x8c] sm:$0xf]
      %v673 = vld [vmem:[%s3 + $0x90] sm:$0xff]
      %v674 = vld [vmem:[%s3 + $0x98] sm:$0xf]
      %v675 = vld [vmem:[%s3 + $0x9c] sm:$0xff]
      %v676 = vld [vmem:[%s3 + $0xa4] sm:$0xf]
      %v677 = vld [vmem:[%s3 + $0xa8] sm:$0xff]
      %v678 = vld [vmem:[%s3 + $0xb0] sm:$0xf]
      %v679 = vld [vmem:[%s3 + $0xb4] sm:$0xff]
      %v680 = vld [vmem:[%s3 + $0xbc] sm:$0xf]
      %v681 = vld [vmem:[%s3 + $0xc0] sm:$0xff]
      %v682 = vld [vmem:[%s3 + $0xc8] sm:$0xf]
      %v683 = vld [vmem:[%s3 + $0xcc] sm:$0xff]
      %v684 = vld [vmem:[%s3 + $0xd4] sm:$0xf]
      %v685 = vld [vmem:[%s3 + $0xd8] sm:$0xff]
      %v686 = vld [vmem:[%s3 + $0xe0] sm:$0xf]
      %v687 = vld [vmem:[%s3 + $0xe4] sm:$0xff]
      %v688 = vld [vmem:[%s3 + $0xec] sm:$0xf]
      %v689 = vld [vmem:[%s3 + $0xf0] sm:$0xff]
      %v690 = vld [vmem:[%s3 + $0xf8] sm:$0xf]
      %v691 = vld [vmem:[%s3 + $0xfc] sm:$0xff]
      %v692 = vld [vmem:[%s3 + $0x104] sm:$0xf]
      %v693 = vld [vmem:[%s3 + $0x108] sm:$0xff]
      %v694 = vld [vmem:[%s3 + $0x110] sm:$0xf]
      %v695 = vld [vmem:[%s3 + $0x114] sm:$0xff]
      %v696 = vld [vmem:[%s3 + $0x11c] sm:$0xf]
      %v697 = vld [vmem:[%s3 + $0x120] sm:$0xff]
      %v698 = vld [vmem:[%s3 + $0x128] sm:$0xf]
      %v699 = vld [vmem:[%s3 + $0x12c] sm:$0xff]
      %v700 = vld [vmem:[%s3 + $0x134] sm:$0xf]
      %v701 = vld [vmem:[%s3 + $0x138] sm:$0xff]
      %v702 = vld [vmem:[%s3 + $0x140] sm:$0xf]
      %v703 = vld [vmem:[%s3 + $0x144] sm:$0xff]
      %v704 = vld [vmem:[%s3 + $0x14c] sm:$0xf]
      %v705 = vld [vmem:[%s3 + $0x150] sm:$0xff]
      %v706 = vld [vmem:[%s3 + $0x158] sm:$0xf]
      %v707 = vld [vmem:[%s3 + $0x15c] sm:$0xff]
      %v708 = vld [vmem:[%s3 + $0x164] sm:$0xf]
      %v709 = vld [vmem:[%s3 + $0x168] sm:$0xff]
      %v710 = vld [vmem:[%s3 + $0x170] sm:$0xf]
      %v711 = vld [vmem:[%s3 + $0x174] sm:$0xff]
      %v712 = vld [vmem:[%s3 + $0x17c] sm:$0xf]
      %v713 = vld [vmem:[%s4] sm:$0x7]
      %v715 = vlaneseq
      %v716 = vshrl.u32 %v715, 7
      %v717 = vsub.s32 0, %v716
      %v718 = vrot.slane %v713, %v717
      %v719 = vlaneseq
      %v720 = vshrl.u32 %v719, 7
      %v721 = vsub.s32 1, %v720
      %v722 = vrot.slane %v713, %v721
      %v723 = vlaneseq
      %v724 = vshrl.u32 %v723, 7
      %v725 = vsub.s32 2, %v724
      %v726 = vrot.slane %v713, %v725
      %v794 = vunpack.c.l.b16 %v649
      %v795 = vunpack.c.h.b16 %v649
      %v796 = vunpack.c.l.b16 %v650
      %v797 = vunpack.c.l.b16 %v651
      %v798 = vunpack.c.h.b16 %v651
      %v799 = vunpack.c.l.b16 %v652
      %v800 = vunpack.c.l.b16 %v653
      %v801 = vunpack.c.h.b16 %v653
      %v802 = vunpack.c.l.b16 %v654
      %v803 = vunpack.c.l.b16 %v655
      %v804 = vunpack.c.h.b16 %v655
      %v805 = vunpack.c.l.b16 %v656
      %v806 = vunpack.c.l.b16 %v657
      %v807 = vunpack.c.h.b16 %v657
      %v808 = vunpack.c.l.b16 %v658
      %v809 = vunpack.c.l.b16 %v659
      %v810 = vunpack.c.h.b16 %v659
      %v811 = vunpack.c.l.b16 %v660
      %v812 = vunpack.c.l.b16 %v661
      %v813 = vunpack.c.h.b16 %v661
      %v814 = vunpack.c.l.b16 %v662
      %v815 = vunpack.c.l.b16 %v663
      %v816 = vunpack.c.h.b16 %v663
      %v817 = vunpack.c.l.b16 %v664
      %v818 = vunpack.c.l.b16 %v665
      %v819 = vunpack.c.h.b16 %v665
      %v820 = vunpack.c.l.b16 %v666
      %v821 = vunpack.c.l.b16 %v667
      %v822 = vunpack.c.h.b16 %v667
      %v823 = vunpack.c.l.b16 %v668
      %v824 = vunpack.c.l.b16 %v669
      %v825 = vunpack.c.h.b16 %v669
      %v826 = vunpack.c.l.b16 %v670
      %v827 = vunpack.c.l.b16 %v671
      %v828 = vunpack.c.h.b16 %v671
      %v829 = vunpack.c.l.b16 %v672
      %v830 = vunpack.c.l.b16 %v673
      %v831 = vunpack.c.h.b16 %v673
      %v832 = vunpack.c.l.b16 %v674
      %v833 = vunpack.c.l.b16 %v675
      %v834 = vunpack.c.h.b16 %v675
      %v835 = vunpack.c.l.b16 %v676
      %v836 = vunpack.c.l.b16 %v677
      %v837 = vunpack.c.h.b16 %v677
      %v838 = vunpack.c.l.b16 %v678
      %v839 = vunpack.c.l.b16 %v679
      %v840 = vunpack.c.h.b16 %v679
      %v841 = vunpack.c.l.b16 %v680
      %v842 = vunpack.c.l.b16 %v681
      %v843 = vunpack.c.h.b16 %v681
      %v844 = vunpack.c.l.b16 %v682
      %v845 = vunpack.c.l.b16 %v683
      %v846 = vunpack.c.h.b16 %v683
      %v847 = vunpack.c.l.b16 %v684
      %v848 = vunpack.c.l.b16 %v685
      %v849 = vunpack.c.h.b16 %v685
      %v850 = vunpack.c.l.b16 %v686
      %v851 = vunpack.c.l.b16 %v687
      %v852 = vunpack.c.h.b16 %v687
      %v853 = vunpack.c.l.b16 %v688
      %v854 = vunpack.c.l.b16 %v689
      %v855 = vunpack.c.h.b16 %v689
      %v856 = vunpack.c.l.b16 %v690
      %v857 = vunpack.c.l.b16 %v691
      %v858 = vunpack.c.h.b16 %v691
      %v859 = vunpack.c.l.b16 %v692
      %v860 = vunpack.c.l.b16 %v693
      %v861 = vunpack.c.h.b16 %v693
      %v862 = vunpack.c.l.b16 %v694
      %v863 = vunpack.c.l.b16 %v695
      %v864 = vunpack.c.h.b16 %v695
      %v865 = vunpack.c.l.b16 %v696
      %v866 = vunpack.c.l.b16 %v697
      %v867 = vunpack.c.h.b16 %v697
      %v868 = vunpack.c.l.b16 %v698
      %v869 = vunpack.c.l.b16 %v699
      %v870 = vunpack.c.h.b16 %v699
      %v871 = vunpack.c.l.b16 %v700
      %v872 = vunpack.c.l.b16 %v701
      %v873 = vunpack.c.h.b16 %v701
      %v874 = vunpack.c.l.b16 %v702
      %v875 = vunpack.c.l.b16 %v703
      %v876 = vunpack.c.h.b16 %v703
      %v877 = vunpack.c.l.b16 %v704
      %v878 = vunpack.c.l.b16 %v705
      %v879 = vunpack.c.h.b16 %v705
      %v880 = vunpack.c.l.b16 %v706
      %v881 = vunpack.c.l.b16 %v707
      %v882 = vunpack.c.h.b16 %v707
      %v883 = vunpack.c.l.b16 %v708
      %v884 = vunpack.c.l.b16 %v709
      %v885 = vunpack.c.h.b16 %v709
      %v886 = vunpack.c.l.b16 %v710
      %v887 = vunpack.c.l.b16 %v711
      %v888 = vunpack.c.h.b16 %v711
      %v889 = vunpack.c.l.b16 %v712
      %v890 = vpack.c.b16 %v797, %v794
      %v891 = vpack.c.b16 %v798, %v795
      %v892 = vpack.c.b16 %v799, %v796
      %v893 = vpack.c.b16 %v803, %v800
      %v894 = vpack.c.b16 %v804, %v801
      %v895 = vpack.c.b16 %v805, %v802
      %v896 = vpack.c.b16 %v809, %v806
      %v897 = vpack.c.b16 %v810, %v807
      %v898 = vpack.c.b16 %v811, %v808
      %v899 = vpack.c.b16 %v815, %v812
      %v900 = vpack.c.b16 %v816, %v813
      %v901 = vpack.c.b16 %v817, %v814
      %v902 = vpack.c.b16 %v821, %v818
      %v903 = vpack.c.b16 %v822, %v819
      %v904 = vpack.c.b16 %v823, %v820
      %v905 = vpack.c.b16 %v827, %v824
      %v906 = vpack.c.b16 %v828, %v825
      %v907 = vpack.c.b16 %v829, %v826
      %v908 = vpack.c.b16 %v833, %v830
      %v909 = vpack.c.b16 %v834, %v831
      %v910 = vpack.c.b16 %v835, %v832
      %v911 = vpack.c.b16 %v839, %v836
      %v912 = vpack.c.b16 %v840, %v837
      %v913 = vpack.c.b16 %v841, %v838
      %v914 = vpack.c.b16 %v845, %v842
      %v915 = vpack.c.b16 %v846, %v843
      %v916 = vpack.c.b16 %v847, %v844
      %v917 = vpack.c.b16 %v851, %v848
      %v918 = vpack.c.b16 %v852, %v849
      %v919 = vpack.c.b16 %v853, %v850
      %v920 = vpack.c.b16 %v857, %v854
      %v921 = vpack.c.b16 %v858, %v855
      %v922 = vpack.c.b16 %v859, %v856
      %v923 = vpack.c.b16 %v863, %v860
      %v924 = vpack.c.b16 %v864, %v861
      %v925 = vpack.c.b16 %v865, %v862
      %v926 = vpack.c.b16 %v869, %v866
      %v927 = vpack.c.b16 %v870, %v867
      %v928 = vpack.c.b16 %v871, %v868
      %v929 = vpack.c.b16 %v875, %v872
      %v930 = vpack.c.b16 %v876, %v873
      %v931 = vpack.c.b16 %v877, %v874
      %v932 = vpack.c.b16 %v881, %v878
      %v933 = vpack.c.b16 %v882, %v879
      %v934 = vpack.c.b16 %v883, %v880
      %v935 = vpack.c.b16 %v887, %v884
      %v936 = vpack.c.b16 %v888, %v885
      %v937 = vpack.c.b16 %v889, %v886
      %986 = vmatprep.subr.bf16.mxu0 %v891
      %987 = vmatpush1.bf16.msra.mxu0 %v890
      %988 = vmatprep.subr.bf16.mxu0 %v894
      %989 = vmatpush1.bf16.msra.mxu0 %v893
      %990 = vmatprep.subr.bf16.mxu0 %v897
      %991 = vmatpush1.bf16.msra.mxu0 %v896
      %992 = vmatprep.subr.bf16.mxu0 %v900
      %993 = vmatpush1.bf16.msra.mxu0 %v899
      %994 = vmatprep.subr.bf16.mxu0 %v903
      %995 = vmatpush1.bf16.msra.mxu0 %v902
      %996 = vmatprep.subr.bf16.mxu0 %v906
      %997 = vmatpush1.bf16.msra.mxu0 %v905
      %998 = vmatprep.subr.bf16.mxu0 %v909
      %999 = vmatpush1.bf16.msra.mxu0 %v908
      %1000 = vmatprep.subr.bf16.mxu0 %v912
      %1001 = vmatpush1.bf16.msra.mxu0 %v911
      %1002 = vmatprep.subr.bf16.mxu0 %v915
      %1003 = vmatpush1.bf16.msra.mxu0 %v914
      %1004 = vmatprep.subr.bf16.mxu0 %v918
      %1005 = vmatpush1.bf16.msra.mxu0 %v917
      %1006 = vmatprep.subr.bf16.mxu0 %v921
      %1007 = vmatpush1.bf16.msra.mxu0 %v920
      %1008 = vmatprep.subr.bf16.mxu0 %v924
      %1009 = vmatpush1.bf16.msra.mxu0 %v923
      %1010 = vmatprep.subr.bf16.mxu0 %v927
      %1011 = vmatpush1.bf16.msra.mxu0 %v926
      %1012 = vmatprep.subr.bf16.mxu0 %v930
      %1013 = vmatpush1.bf16.msra.mxu0 %v929
      %1014 = vmatprep.subr.bf16.mxu0 %v933
      %1015 = vmatpush1.bf16.msra.mxu0 %v932
      %1016 = vmatprep.subr.bf16.mxu0 %v936
      %1017 = vmatpush1.bf16.msra.mxu0 %v935
      %1018 = vmatprep.mubr.bf16.mxu0 %v593
      %1019 = vmatmul.mubr.bf16.gmra.mrb[0].mxu0 %v633
      %v1020 = vpop.f32.mrb[0].mxu0
      %v1021 = vadd.f32 %v718, %v1020
      %v1022 = vpop.f32.mrb[0].mxu0
      %v1023 = vadd.f32 %v722, %v1022
      %v1024 = vpop.f32.mrb[0].mxu0
      %v1025 = vadd.f32 %v718, %v1024
      %v1026 = vpop.f32.mrb[0].mxu0
      %v1027 = vadd.f32 %v722, %v1026
      %1028 = vmatprep.mubr.bf16.mxu0 %v594
      %1029 = vmatmul.mubr.bf16.gmra.mrb[0].mxu0 %v634
      %v1030 = vpop.f32.mrb[0].mxu0
      %v1031 = vadd.f32 %v718, %v1030
      %v1032 = vpop.f32.mrb[0].mxu0
      %v1033 = vadd.f32 %v722, %v1032
      %v1034 = vpop.f32.mrb[0].mxu0
      %v1035 = vadd.f32 %v718, %v1034
      %v1036 = vpop.f32.mrb[0].mxu0
      %v1037 = vadd.f32 %v722, %v1036
      %1038 = vmatprep.mubr.bf16.mxu0 %v595
      %1039 = vmatmul.mubr.bf16.gmra.mrb[0].mxu0 %v635
      %v1040 = vpop.f32.mrb[0].mxu0
      %v1041 = vadd.f32 %v718, %v1040
      %v1042 = vpop.f32.mrb[0].mxu0
      %v1043 = vadd.f32 %v722, %v1042
      %v1044 = vpop.f32.mrb[0].mxu0
      %v1045 = vadd.f32 %v718, %v1044
      %v1046 = vpop.f32.mrb[0].mxu0
      %v1047 = vadd.f32 %v722, %v1046
      %1048 = vmatprep.mubr.bf16.mxu0 %v596
      %1049 = vmatmul.mubr.bf16.gmra.mrb[0].mxu0 %v636
      %v1050 = vpop.f32.mrb[0].mxu0
      %v1051 = vadd.f32 %v718, %v1050
      %v1052 = vpop.f32.mrb[0].mxu0
      %v1053 = vadd.f32 %v722, %v1052
      %v1054 = vpop.f32.mrb[0].mxu0
      %v1055 = vadd.f32 %v718, %v1054
      %v1056 = vpop.f32.mrb[0].mxu0
      %v1057 = vadd.f32 %v722, %v1056
      %1058 = vmatprep.mubr.bf16.mxu0 %v597
      %1059 = vmatmul.mubr.bf16.gmra.mrb[0].mxu0 %v637
      %v1060 = vpop.f32.mrb[0].mxu0
      %v1061 = vadd.f32 %v718, %v1060
      %v1062 = vpop.f32.mrb[0].mxu0
      %v1063 = vadd.f32 %v722, %v1062
      %v1064 = vpop.f32.mrb[0].mxu0
      %v1065 = vadd.f32 %v718, %v1064
      %v1066 = vpop.f32.mrb[0].mxu0
      %v1067 = vadd.f32 %v722, %v1066
      %1068 = vmatprep.mubr.bf16.mxu0 %v598
      %1069 = vmatmul.mubr.bf16.gmra.mrb[0].mxu0 %v638
      %v1070 = vpop.f32.mrb[0].mxu0
      %v1071 = vadd.f32 %v718, %v1070
      %v1072 = vpop.f32.mrb[0].mxu0
      %v1073 = vadd.f32 %v722, %v1072
      %v1074 = vpop.f32.mrb[0].mxu0
      %v1075 = vadd.f32 %v718, %v1074
      %v1076 = vpop.f32.mrb[0].mxu0
      %v1077 = vadd.f32 %v722, %v1076
      %1078 = vmatprep.mubr.bf16.mxu0 %v599
      %1079 = vmatmul.mubr.bf16.gmra.mrb[0].mxu0 %v639
      %v1080 = vpop.f32.mrb[0].mxu0
      %v1081 = vadd.f32 %v718, %v1080
      %v1082 = vpop.f32.mrb[0].mxu0
      %v1083 = vadd.f32 %v722, %v1082
      %v1084 = vpop.f32.mrb[0].mxu0
      %v1085 = vadd.f32 %v718, %v1084
      %v1086 = vpop.f32.mrb[0].mxu0
      %v1087 = vadd.f32 %v722, %v1086
      %1088 = vmatprep.mubr.bf16.mxu0 %v600
      %1089 = vmatmul.mubr.bf16.gmra.mrb[0].mxu0 %v640
      %v1090 = vpop.f32.mrb[0].mxu0
      %v1091 = vadd.f32 %v718, %v1090
      %v1092 = vpop.f32.mrb[0].mxu0
      %v1093 = vadd.f32 %v722, %v1092
      %v1094 = vpop.f32.mrb[0].mxu0
      %v1095 = vadd.f32 %v718, %v1094
      %v1096 = vpop.f32.mrb[0].mxu0
      %v1097 = vadd.f32 %v722, %v1096
      %1098 = vdwg.mxu0
      %1099 = vmatprep.subr.bf16.mxu0 0
      %1100 = vmatpush1.bf16.msra.mxu0 %v892
      %1101 = vmatprep.subr.bf16.mxu0 0
      %1102 = vmatpush1.bf16.msra.mxu0 %v895
      %1103 = vmatprep.subr.bf16.mxu0 0
      %1104 = vmatpush1.bf16.msra.mxu0 %v898
      %1105 = vmatprep.subr.bf16.mxu0 0
      %1106 = vmatpush1.bf16.msra.mxu0 %v901
      %1107 = vmatprep.subr.bf16.mxu0 0
      %1108 = vmatpush1.bf16.msra.mxu0 %v904
      %1109 = vmatprep.subr.bf16.mxu0 0
      %1110 = vmatpush1.bf16.msra.mxu0 %v907
      %1111 = vmatprep.subr.bf16.mxu0 0
      %1112 = vmatpush1.bf16.msra.mxu0 %v910
      %1113 = vmatprep.subr.bf16.mxu0 0
      %1114 = vmatpush1.bf16.msra.mxu0 %v913
      %1115 = vmatprep.subr.bf16.mxu0 0
      %1116 = vmatpush1.bf16.msra.mxu0 %v916
      %1117 = vmatprep.subr.bf16.mxu0 0
      %1118 = vmatpush1.bf16.msra.mxu0 %v919
      %1119 = vmatprep.subr.bf16.mxu0 0
      %1120 = vmatpush1.bf16.msra.mxu0 %v922
      %1121 = vmatprep.subr.bf16.mxu0 0
      %1122 = vmatpush1.bf16.msra.mxu0 %v925
      %1123 = vmatprep.subr.bf16.mxu0 0
      %1124 = vmatpush1.bf16.msra.mxu0 %v928
      %1125 = vmatprep.subr.bf16.mxu0 0
      %1126 = vmatpush1.bf16.msra.mxu0 %v931
      %1127 = vmatprep.subr.bf16.mxu0 0
      %1128 = vmatpush1.bf16.msra.mxu0 %v934
      %1129 = vmatprep.subr.bf16.mxu0 0
      %1130 = vmatpush1.bf16.msra.mxu0 %v937
      %1131 = vmatprep.mubr.bf16.mxu0 %v593
      %1132 = vmatmul.mubr.bf16.gmra.mrb[0].mxu0 %v633
      %v1133 = vpop.f32.mrb[0].mxu0
      %v1134 = vadd.f32 %v726, %v1133
      %v1135 = vpop.f32.mrb[0].mxu0
      %v1136 = vpop.f32.mrb[0].mxu0
      %v1137 = vadd.f32 %v726, %v1136
      %v1138 = vpop.f32.mrb[0].mxu0
      %1139 = vmatprep.mubr.bf16.mxu0 %v594
      %1140 = vmatmul.mubr.bf16.gmra.mrb[0].mxu0 %v634
      %v1141 = vpop.f32.mrb[0].mxu0
      %v1142 = vadd.f32 %v726, %v1141
      %v1143 = vpop.f32.mrb[0].mxu0
      %v1144 = vpop.f32.mrb[0].mxu0
      %v1145 = vadd.f32 %v726, %v1144
      %v1146 = vpop.f32.mrb[0].mxu0
      %1147 = vmatprep.mubr.bf16.mxu0 %v595
      %1148 = vmatmul.mubr.bf16.gmra.mrb[0].mxu0 %v635
      %v1149 = vpop.f32.mrb[0].mxu0
      %v1150 = vadd.f32 %v726, %v1149
      %v1151 = vpop.f32.mrb[0].mxu0
      %v1152 = vpop.f32.mrb[0].mxu0
      %v1153 = vadd.f32 %v726, %v1152
      %v1154 = vpop.f32.mrb[0].mxu0
      %1155 = vmatprep.mubr.bf16.mxu0 %v596
      %1156 = vmatmul.mubr.bf16.gmra.mrb[0].mxu0 %v636
      %v1157 = vpop.f32.mrb[0].mxu0
      %v1158 = vadd.f32 %v726, %v1157
      %v1159 = vpop.f32.mrb[0].mxu0
      %v1160 = vpop.f32.mrb[0].mxu0
      %v1161 = vadd.f32 %v726, %v1160
      %v1162 = vpop.f32.mrb[0].mxu0
      %1163 = vmatprep.mubr.bf16.mxu0 %v597
      %1164 = vmatmul.mubr.bf16.gmra.mrb[0].mxu0 %v637
      %v1165 = vpop.f32.mrb[0].mxu0
      %v1166 = vadd.f32 %v726, %v1165
      %v1167 = vpop.f32.mrb[0].mxu0
      %v1168 = vpop.f32.mrb[0].mxu0
      %v1169 = vadd.f32 %v726, %v1168
      %v1170 = vpop.f32.mrb[0].mxu0
      %1171 = vmatprep.mubr.bf16.mxu0 %v598
      %1172 = vmatmul.mubr.bf16.gmra.mrb[0].mxu0 %v638
      %v1173 = vpop.f32.mrb[0].mxu0
      %v1174 = vadd.f32 %v726, %v1173
      %v1175 = vpop.f32.mrb[0].mxu0
      %v1176 = vpop.f32.mrb[0].mxu0
      %v1177 = vadd.f32 %v726, %v1176
      %v1178 = vpop.f32.mrb[0].mxu0
      %1179 = vmatprep.mubr.bf16.mxu0 %v599
      %1180 = vmatmul.mubr.bf16.gmra.mrb[0].mxu0 %v639
      %v1181 = vpop.f32.mrb[0].mxu0
      %v1182 = vadd.f32 %v726, %v1181
      %v1183 = vpop.f32.mrb[0].mxu0
      %v1184 = vpop.f32.mrb[0].mxu0
      %v1185 = vadd.f32 %v726, %v1184
      %v1186 = vpop.f32.mrb[0].mxu0
      %1187 = vmatprep.mubr.bf16.mxu0 %v600
      %1188 = vmatmul.mubr.bf16.gmra.mrb[0].mxu0 %v640
      %v1189 = vpop.f32.mrb[0].mxu0
      %v1190 = vadd.f32 %v726, %v1189
      %v1191 = vpop.f32.mrb[0].mxu0
      %v1192 = vpop.f32.mrb[0].mxu0
      %v1193 = vadd.f32 %v726, %v1192
      %v1194 = vpop.f32.mrb[0].mxu0
      %1195 = vdwg.mxu0
      %v1196 = vmax.f32 %v1021, 0.0
      %v1197 = vmax.f32 %v1023, 0.0
      %v1198 = vmax.f32 %v1134, 0.0
      %v1199 = vmax.f32 %v1025, 0.0
      %v1200 = vmax.f32 %v1027, 0.0
      %v1201 = vmax.f32 %v1137, 0.0
      %v1202 = vmax.f32 %v1031, 0.0
      %v1203 = vmax.f32 %v1033, 0.0
      %v1204 = vmax.f32 %v1142, 0.0
      %v1205 = vmax.f32 %v1035, 0.0
      %v1206 = vmax.f32 %v1037, 0.0
      %v1207 = vmax.f32 %v1145, 0.0
      %v1208 = vmax.f32 %v1041, 0.0
      %v1209 = vmax.f32 %v1043, 0.0
      %v1210 = vmax.f32 %v1150, 0.0
      %v1211 = vmax.f32 %v1045, 0.0
      %v1212 = vmax.f32 %v1047, 0.0
      %v1213 = vmax.f32 %v1153, 0.0
      %v1214 = vmax.f32 %v1051, 0.0
      %v1215 = vmax.f32 %v1053, 0.0
      %v1216 = vmax.f32 %v1158, 0.0
      %v1217 = vmax.f32 %v1055, 0.0
      %v1218 = vmax.f32 %v1057, 0.0
      %v1219 = vmax.f32 %v1161, 0.0
      %v1220 = vmax.f32 %v1061, 0.0
      %v1221 = vmax.f32 %v1063, 0.0
      %v1222 = vmax.f32 %v1166, 0.0
      %v1223 = vmax.f32 %v1065, 0.0
      %v1224 = vmax.f32 %v1067, 0.0
      %v1225 = vmax.f32 %v1169, 0.0
      %v1226 = vmax.f32 %v1071, 0.0
      %v1227 = vmax.f32 %v1073, 0.0
      %v1228 = vmax.f32 %v1174, 0.0
      %v1229 = vmax.f32 %v1075, 0.0
      %v1230 = vmax.f32 %v1077, 0.0
      %v1231 = vmax.f32 %v1177, 0.0
      %v1232 = vmax.f32 %v1081, 0.0
      %v1233 = vmax.f32 %v1083, 0.0
      %v1234 = vmax.f32 %v1182, 0.0
      %v1235 = vmax.f32 %v1085, 0.0
      %v1236 = vmax.f32 %v1087, 0.0
      %v1237 = vmax.f32 %v1185, 0.0
      %v1238 = vmax.f32 %v1091, 0.0
      %v1239 = vmax.f32 %v1093, 0.0
      %v1240 = vmax.f32 %v1190, 0.0
      %v1241 = vmax.f32 %v1095, 0.0
      %v1242 = vmax.f32 %v1097, 0.0
      %v1243 = vmax.f32 %v1193, 0.0
      %v1244 = vpack.c.bf16 %v1199, %v1196
      %v1245 = vpack.c.bf16 %v1200, %v1197
      %v1246 = vpack.c.bf16 %v1201, %v1198
      %v1247 = vpack.c.bf16 %v1205, %v1202
      %v1248 = vpack.c.bf16 %v1206, %v1203
      %v1249 = vpack.c.bf16 %v1207, %v1204
      %v1250 = vpack.c.bf16 %v1211, %v1208
      %v1251 = vpack.c.bf16 %v1212, %v1209
      %v1252 = vpack.c.bf16 %v1213, %v1210
      %v1253 = vpack.c.bf16 %v1217, %v1214
      %v1254 = vpack.c.bf16 %v1218, %v1215
      %v1255 = vpack.c.bf16 %v1219, %v1216
      %v1256 = vpack.c.bf16 %v1223, %v1220
      %v1257 = vpack.c.bf16 %v1224, %v1221
      %v1258 = vpack.c.bf16 %v1225, %v1222
      %v1259 = vpack.c.bf16 %v1229, %v1226
      %v1260 = vpack.c.bf16 %v1230, %v1227
      %v1261 = vpack.c.bf16 %v1231, %v1228
      %v1262 = vpack.c.bf16 %v1235, %v1232
      %v1263 = vpack.c.bf16 %v1236, %v1233
      %v1264 = vpack.c.bf16 %v1237, %v1234
      %v1265 = vpack.c.bf16 %v1241, %v1238
      %v1266 = vpack.c.bf16 %v1242, %v1239
      %v1267 = vpack.c.bf16 %v1243, %v1240
      %v1292 = vunpack.c.l.b16 %v1244
      %v1293 = vunpack.c.l.b16 %v1245
      %v1294 = vunpack.c.l.b16 %v1246
      %v1295 = vunpack.c.h.b16 %v1244
      %v1296 = vunpack.c.h.b16 %v1245
      %v1297 = vunpack.c.h.b16 %v1246
      %v1298 = vunpack.c.l.b16 %v1247
      %v1299 = vunpack.c.l.b16 %v1248
      %v1300 = vunpack.c.l.b16 %v1249
      %v1301 = vunpack.c.h.b16 %v1247
      %v1302 = vunpack.c.h.b16 %v1248
      %v1303 = vunpack.c.h.b16 %v1249
      %v1304 = vunpack.c.l.b16 %v1250
      %v1305 = vunpack.c.l.b16 %v1251
      %v1306 = vunpack.c.l.b16 %v1252
      %v1307 = vunpack.c.h.b16 %v1250
      %v1308 = vunpack.c.h.b16 %v1251
      %v1309 = vunpack.c.h.b16 %v1252
      %v1310 = vunpack.c.l.b16 %v1253
      %v1311 = vunpack.c.l.b16 %v1254
      %v1312 = vunpack.c.l.b16 %v1255
      %v1313 = vunpack.c.h.b16 %v1253
      %v1314 = vunpack.c.h.b16 %v1254
      %v1315 = vunpack.c.h.b16 %v1255
      %v1316 = vunpack.c.l.b16 %v1256
      %v1317 = vunpack.c.l.b16 %v1257
      %v1318 = vunpack.c.l.b16 %v1258
      %v1319 = vunpack.c.h.b16 %v1256
      %v1320 = vunpack.c.h.b16 %v1257
      %v1321 = vunpack.c.h.b16 %v1258
      %v1322 = vunpack.c.l.b16 %v1259
      %v1323 = vunpack.c.l.b16 %v1260
      %v1324 = vunpack.c.l.b16 %v1261
      %v1325 = vunpack.c.h.b16 %v1259
      %v1326 = vunpack.c.h.b16 %v1260
      %v1327 = vunpack.c.h.b16 %v1261
      %v1328 = vunpack.c.l.b16 %v1262
      %v1329 = vunpack.c.l.b16 %v1263
      %v1330 = vunpack.c.l.b16 %v1264
      %v1331 = vunpack.c.h.b16 %v1262
      %v1332 = vunpack.c.h.b16 %v1263
      %v1333 = vunpack.c.h.b16 %v1264
      %v1334 = vunpack.c.l.b16 %v1265
      %v1335 = vunpack.c.l.b16 %v1266
      %v1336 = vunpack.c.l.b16 %v1267
      %v1337 = vunpack.c.h.b16 %v1265
      %v1338 = vunpack.c.h.b16 %v1266
      %v1339 = vunpack.c.h.b16 %v1267
      %v1340 = vpack.c.b16 %v1293, %v1292
      %v1341 = vpack.c.b16 %v1294, %v1294
      %v1342 = vpack.c.b16 %v1296, %v1295
      %v1343 = vpack.c.b16 %v1297, %v1297
      %v1344 = vpack.c.b16 %v1299, %v1298
      %v1345 = vpack.c.b16 %v1300, %v1300
      %v1346 = vpack.c.b16 %v1302, %v1301
      %v1347 = vpack.c.b16 %v1303, %v1303
      %v1348 = vpack.c.b16 %v1305, %v1304
      %v1349 = vpack.c.b16 %v1306, %v1306
      %v1350 = vpack.c.b16 %v1308, %v1307
      %v1351 = vpack.c.b16 %v1309, %v1309
      %v1352 = vpack.c.b16 %v1311, %v1310
      %v1353 = vpack.c.b16 %v1312, %v1312
      %v1354 = vpack.c.b16 %v1314, %v1313
      %v1355 = vpack.c.b16 %v1315, %v1315
      %v1356 = vpack.c.b16 %v1317, %v1316
      %v1357 = vpack.c.b16 %v1318, %v1318
      %v1358 = vpack.c.b16 %v1320, %v1319
      %v1359 = vpack.c.b16 %v1321, %v1321
      %v1360 = vpack.c.b16 %v1323, %v1322
      %v1361 = vpack.c.b16 %v1324, %v1324
      %v1362 = vpack.c.b16 %v1326, %v1325
      %v1363 = vpack.c.b16 %v1327, %v1327
      %v1364 = vpack.c.b16 %v1329, %v1328
      %v1365 = vpack.c.b16 %v1330, %v1330
      %v1366 = vpack.c.b16 %v1332, %v1331
      %v1367 = vpack.c.b16 %v1333, %v1333
      %v1368 = vpack.c.b16 %v1335, %v1334
      %v1369 = vpack.c.b16 %v1336, %v1336
      %v1370 = vpack.c.b16 %v1338, %v1337
      %v1371 = vpack.c.b16 %v1339, %v1339
      %1404 = vst [vmem:[%s253] sm:$0xff] %v1340
      %1405 = vst [vmem:[%s253 + $0x8] sm:$0xf] %v1341
      %1406 = vst [vmem:[%s253 + $0xc] sm:$0xff] %v1342
      %1407 = vst [vmem:[%s253 + $0x14] sm:$0xf] %v1343
      %1408 = vst [vmem:[%s253 + $0x18] sm:$0xff] %v1344
      %1409 = vst [vmem:[%s253 + $0x20] sm:$0xf] %v1345
      %1410 = vst [vmem:[%s253 + $0x24] sm:$0xff] %v1346
      %1411 = vst [vmem:[%s253 + $0x2c] sm:$0xf] %v1347
      %1412 = vst [vmem:[%s253 + $0x30] sm:$0xff] %v1348
      %1413 = vst [vmem:[%s253 + $0x38] sm:$0xf] %v1349
      %1414 = vst [vmem:[%s253 + $0x3c] sm:$0xff] %v1350
      %1415 = vst [vmem:[%s253 + $0x44] sm:$0xf] %v1351
      %1416 = vst [vmem:[%s253 + $0x48] sm:$0xff] %v1352
      %1417 = vst [vmem:[%s253 + $0x50] sm:$0xf] %v1353
      %1418 = vst [vmem:[%s253 + $0x54] sm:$0xff] %v1354
      %1419 = vst [vmem:[%s253 + $0x5c] sm:$0xf] %v1355
      %1420 = vst [vmem:[%s253 + $0x60] sm:$0xff] %v1356
      %1421 = vst [vmem:[%s253 + $0x68] sm:$0xf] %v1357
      %1422 = vst [vmem:[%s253 + $0x6c] sm:$0xff] %v1358
      %1423 = vst [vmem:[%s253 + $0x74] sm:$0xf] %v1359
      %1424 = vst [vmem:[%s253 + $0x78] sm:$0xff] %v1360
      %1425 = vst [vmem:[%s253 + $0x80] sm:$0xf] %v1361
      %1426 = vst [vmem:[%s253 + $0x84] sm:$0xff] %v1362
      %1427 = vst [vmem:[%s253 + $0x8c] sm:$0xf] %v1363
      %1428 = vst [vmem:[%s253 + $0x90] sm:$0xff] %v1364
      %1429 = vst [vmem:[%s253 + $0x98] sm:$0xf] %v1365
      %1430 = vst [vmem:[%s253 + $0x9c] sm:$0xff] %v1366
      %1431 = vst [vmem:[%s253 + $0xa4] sm:$0xf] %v1367
      %1432 = vst [vmem:[%s253 + $0xa8] sm:$0xff] %v1368
      %1433 = vst [vmem:[%s253 + $0xb0] sm:$0xf] %v1369
      %1434 = vst [vmem:[%s253 + $0xb4] sm:$0xff] %v1370
      %1435 = vst [vmem:[%s253 + $0xbc] sm:$0xf] %v1371
      %s1436 = smul.u32 16, %s16
      %p1437 = scmp.lt.s32.totalorder %s1436, 31
      %s1438 = scalar_select %p1437, %s1436, 31
      %s1439 = smul.addr %s1438, 3
      %s1440 = smul.addr %s1439, 4
      %s1441 = scalar_lea.vmem %s5, %s1440
      // Predicated region
      $region41: #{chebnet_forward.4} parent=39 // pred_check
        %p1442 = pneg %p149
      $region42: #{chebnet_forward.4} parent=39 // pred_check_branch
        %1444 = sbr.rel (%p1442) target = $region44
      $region43: #{chebnet_forward.4} parent=39 // pred_region
        %s1445 = smul.u32 16, %s16
      $region44: #{chebnet_forward.4} parent=39 // pred_fallthru
        _
    $region40: #{chebnet_forward.4} parent=5 // pred_fallthru
      _
    %p1446 = scmp.le.s32.totalorder 2, %s11
    // Predicated region
    $region45: #{chebnet_forward.4} parent=5 // pred_check
      %p1447 = pneg %p1446
    $region46: #{chebnet_forward.4} parent=5 // pred_check_branch
      %1449 = sbr.rel (%p1447) target = $region48
    $region47: #{chebnet_forward.4} parent=5 // pred_region
      %s1450 = ssub.s32 %s11, 2
      // Predicated region
      $region49: #{chebnet_forward.4} parent=47 // pred_check
        %p1451 = pneg %p155
      $region50: #{chebnet_forward.4} parent=47 // pred_check_branch
        %1453 = sbr.rel (%p1451) target = $region52
      $region51: #{chebnet_forward.4} parent=47 // pred_region
        %s1454 = smul.u32 16, %s17
        %p1455 = scmp.lt.s32.totalorder %s1454, 31
        %s1456 = scalar_select %p1455, %s1454, 31
        %s1457 = smul.addr %s1456, 3
        %s1458 = smul.addr %s1457, 4
        %s1459 = scalar_lea.vmem %s5, %s1458
      $region52: #{chebnet_forward.4} parent=47 // pred_fallthru
        _
    $region48: #{chebnet_forward.4} parent=5 // pred_fallthru
      _
  $region6: #{chebnet_forward.4} parent=0 // loop_footer
    %s15 = sadd.s32 1, %s11
  $region7: #{chebnet_forward.4} parent=0 // loop_footer_branch
    %10 = sbr.rel target = $region3
  $region8: #{chebnet_forward.4} parent=0 // loop_exit
    _

// kernel: chebnet_forward.5
$region0: #{chebnet_forward.5}
  #allocation0 [shape = 'u32[]', space=smem, size = 0x4, offset = 0x4, fixed_abs, tag = 'smem constant byte address 0x4 - core index']
  #allocation1 [shape = 'u32[144,128]{1,0:T(1,128)}', space=vmem, size = 0x12000, scoped, tag = 'internal scratch']
  %s0 = inlined_call_operand.vmem [shape: bf16[256,384], index: 0, kind: input, shape index: {}, may-alias: {0,1}]
  %s1 = inlined_call_operand.vmem [shape: bf16[256,384], index: 1, kind: input, shape index: {}, may-alias: {0,1}]
  %s2 = inlined_call_operand.vmem [shape: bf16[256,128], index: 2, kind: input, shape index: {}]
  %s3 = inlined_call_operand.vmem [shape: bf16[256,256], index: 3, kind: input, shape index: {}]
  %s4 = inlined_call_operand.vmem [shape: bf16[768,128], index: 4, kind: input, shape index: {}]
  %s5 = inlined_call_operand.vmem [shape: f32[1,128], index: 5, kind: input, shape index: {}]
  %s6 = inlined_call_operand.vmem [shape: bf16[128,128], index: 6, kind: input, shape index: {}]
  %s7 = inlined_call_operand.vmem [shape: f32[1,128], index: 7, kind: input, shape index: {}]
  %s8 = inlined_call_operand.vmem [shape: bf16[128,128], index: 8, kind: input, shape index: {}]
  %s9 = inlined_call_operand.vmem [shape: f32[1,128], index: 9, kind: input, shape index: {}]
  %s10 = inlined_call_operand.vmem [shape: bf16[256,128], index: 10, kind: output, shape index: {0}]
  %s11 = inlined_call_operand.vmem [shape: bf16[256,128], index: 11, kind: output, shape index: {1}]
  %12 = xla_tuple %s10, %s11
  %s13 = sld [smem:[#allocation0]]
  $region81: #{chebnet_forward.5} parent=0
    _
  %s15 = ssub.s32 1, %s13
  %s16 = scalar_select 0, %s15, %s13
  loop: start=0, step=1, limit=4
  $region2: #{chebnet_forward.5} parent=0 // loop_pre_header
    _
  $region3: #{chebnet_forward.5} parent=0 // loop_header
    %s18 = sphi 0, %s22
    %p19 = scmp.ge.s32.totalorder %s18, 4
    %s26 = sphi 0, %s26
    %s28 = sphi 0, %s26
    %s29 = sphi 0, %s28
    %s43 = sphi 0, %s29
    %s49 = sphi 0, %s51
    %s52 = sphi 0, %s49
    %s53 = sphi 0, %s52
    %s69 = sphi 0, %s53
    %s75 = sphi 0, %s77
    %s78 = sphi 0, %s75
    %s79 = sphi 0, %s78
    %s95 = sphi 0, %s79
    %s101 = sphi 0, %s103
    %s104 = sphi 0, %s101
    %s105 = sphi 0, %s104
    %s121 = sphi 0, %s105
    %s125 = sphi 0, %s125
    %s127 = sphi 0, %s125
    %s128 = sphi 0, %s127
    %s142 = sphi 0, %s128
    %s146 = sphi 0, %s146
    %s148 = sphi 0, %s146
    %s149 = sphi 0, %s148
    %s163 = sphi 0, %s149
    %s167 = sphi 0, %s167
    %s169 = sphi 0, %s167
    %s170 = sphi 0, %s169
    %s184 = sphi 0, %s170
    %s188 = sphi 0, %s188
    %s190 = sphi 0, %s188
    %s191 = sphi 0, %s190
    %s205 = sphi 0, %s191
    %s209 = sphi 0, %s209
    %s211 = sphi 0, %s209
    %s212 = sphi 0, %s211
    %s226 = sphi 0, %s212
    %s230 = sphi 0, %s230
    %s232 = sphi 0, %s230
    %s233 = sphi 0, %s232
    %s247 = sphi 0, %s233
    %s253 = sphi 0, %s255
    %s256 = sphi 0, %s253
    %s257 = sphi 0, %s256
    %s273 = sphi 0, %s257
    %s279 = sphi 0, %s281
    %s282 = sphi 0, %s279
    %s283 = sphi 0, %s282
    %s299 = sphi 0, %s283
  $region4: #{chebnet_forward.5} parent=0 // loop_header_branch
    %21 = sbr.rel (%p19) target = $region8
  $region5: #{chebnet_forward.5} parent=0 // loop_body
    %s23 = ssub.s32 %s18, 1
    %s24 = ssub.s32 %s18, 2
    %s25 = sadd.s32 %s18, 1
    %s27 = sadd.s32 %s26, 1
    %p30 = scmp.eq.s32.totalorder %s18, 1
    %p31 = scmp.ne.s32.totalorder %s26, %s28
    %p32 = scmp.eq.s32.totalorder %s18, 0
    %p33 = por %p31, %p32
    %p34 = scmp.ne.s32.totalorder %s26, %s28
    %p35 = scmp.eq.s32.totalorder %s23, 1
    %p36 = por %p34, %p35
    %p37 = scmp.ne.s32.totalorder %s28, %s29
    %p38 = scmp.eq.s32.totalorder %s23, 0
    %p39 = por %p37, %p38
    %p40 = scmp.ne.s32.totalorder %s28, %s29
    %p41 = scmp.eq.s32.totalorder %s24, 1
    %p42 = por %p40, %p41
    %p44 = scmp.ne.s32.totalorder %s29, %s43
    %p45 = scmp.eq.s32.totalorder %s24, 0
    %p46 = por %p44, %p45
    %s47 = ssub.s32 %s18, %s25
    %p48 = scmp.eq.s32.totalorder %s47, 0
    %s50 = sadd.s32 %s49, 1
    %s51 = scalar_select %p48, %s49, %s50
    %p54 = pneg %p48
    %p55 = scmp.eq.s32.totalorder %s18, 1
    %p56 = por %p54, %p55
    %p57 = scmp.ne.s32.totalorder %s49, %s52
    %p58 = scmp.eq.s32.totalorder %s18, 0
    %p59 = por %p57, %p58
    %p60 = scmp.ne.s32.totalorder %s49, %s52
    %p61 = scmp.eq.s32.totalorder %s23, 1
    %p62 = por %p60, %p61
    %p63 = scmp.ne.s32.totalorder %s52, %s53
    %p64 = scmp.eq.s32.totalorder %s23, 0
    %p65 = por %p63, %p64
    %p66 = scmp.ne.s32.totalorder %s52, %s53
    %p67 = scmp.eq.s32.totalorder %s24, 1
    %p68 = por %p66, %p67
    %p70 = scmp.ne.s32.totalorder %s53, %s69
    %p71 = scmp.eq.s32.totalorder %s24, 0
    %p72 = por %p70, %p71
    %s73 = ssub.s32 %s18, %s25
    %p74 = scmp.eq.s32.totalorder %s73, 0
    %s76 = sadd.s32 %s75, 1
    %s77 = scalar_select %p74, %s75, %s76
    %p80 = pneg %p74
    %p81 = scmp.eq.s32.totalorder %s18, 1
    %p82 = por %p80, %p81
    %p83 = scmp.ne.s32.totalorder %s75, %s78
    %p84 = scmp.eq.s32.totalorder %s18, 0
    %p85 = por %p83, %p84
    %p86 = scmp.ne.s32.totalorder %s75, %s78
    %p87 = scmp.eq.s32.totalorder %s23, 1
    %p88 = por %p86, %p87
    %p89 = scmp.ne.s32.totalorder %s78, %s79
    %p90 = scmp.eq.s32.totalorder %s23, 0
    %p91 = por %p89, %p90
    %p92 = scmp.ne.s32.totalorder %s78, %s79
    %p93 = scmp.eq.s32.totalorder %s24, 1
    %p94 = por %p92, %p93
    %p96 = scmp.ne.s32.totalorder %s79, %s95
    %p97 = scmp.eq.s32.totalorder %s24, 0
    %p98 = por %p96, %p97
    %s99 = ssub.s32 %s18, %s25
    %p100 = scmp.eq.s32.totalorder %s99, 0
    %s102 = sadd.s32 %s101, 1
    %s103 = scalar_select %p100, %s101, %s102
    %p106 = pneg %p100
    %p107 = scmp.eq.s32.totalorder %s18, 1
    %p108 = por %p106, %p107
    %p109 = scmp.ne.s32.totalorder %s101, %s104
    %p110 = scmp.eq.s32.totalorder %s18, 0
    %p111 = por %p109, %p110
    %p112 = scmp.ne.s32.totalorder %s101, %s104
    %p113 = scmp.eq.s32.totalorder %s23, 1
    %p114 = por %p112, %p113
    %p115 = scmp.ne.s32.totalorder %s104, %s105
    %p116 = scmp.eq.s32.totalorder %s23, 0
    %p117 = por %p115, %p116
    %p118 = scmp.ne.s32.totalorder %s104, %s105
    %p119 = scmp.eq.s32.totalorder %s24, 1
    %p120 = por %p118, %p119
    %p122 = scmp.ne.s32.totalorder %s105, %s121
    %p123 = scmp.eq.s32.totalorder %s24, 0
    %p124 = por %p122, %p123
    %s126 = sadd.s32 %s125, 1
    %p129 = scmp.eq.s32.totalorder %s18, 1
    %p130 = scmp.ne.s32.totalorder %s125, %s127
    %p131 = scmp.eq.s32.totalorder %s18, 0
    %p132 = por %p130, %p131
    %p133 = scmp.ne.s32.totalorder %s125, %s127
    %p134 = scmp.eq.s32.totalorder %s23, 1
    %p135 = por %p133, %p134
    %p136 = scmp.ne.s32.totalorder %s127, %s128
    %p137 = scmp.eq.s32.totalorder %s23, 0
    %p138 = por %p136, %p137
    %p139 = scmp.ne.s32.totalorder %s127, %s128
    %p140 = scmp.eq.s32.totalorder %s24, 1
    %p141 = por %p139, %p140
    %p143 = scmp.ne.s32.totalorder %s128, %s142
    %p144 = scmp.eq.s32.totalorder %s24, 0
    %p145 = por %p143, %p144
    %s147 = sadd.s32 %s146, 1
    %p150 = scmp.eq.s32.totalorder %s18, 1
    %p151 = scmp.ne.s32.totalorder %s146, %s148
    %p152 = scmp.eq.s32.totalorder %s18, 0
    %p153 = por %p151, %p152
    %p154 = scmp.ne.s32.totalorder %s146, %s148
    %p155 = scmp.eq.s32.totalorder %s23, 1
    %p156 = por %p154, %p155
    %p157 = scmp.ne.s32.totalorder %s148, %s149
    %p158 = scmp.eq.s32.totalorder %s23, 0
    %p159 = por %p157, %p158
    %p160 = scmp.ne.s32.totalorder %s148, %s149
    %p161 = scmp.eq.s32.totalorder %s24, 1
    %p162 = por %p160, %p161
    %p164 = scmp.ne.s32.totalorder %s149, %s163
    %p165 = scmp.eq.s32.totalorder %s24, 0
    %p166 = por %p164, %p165
    %s168 = sadd.s32 %s167, 1
    %p171 = scmp.eq.s32.totalorder %s18, 1
    %p172 = scmp.ne.s32.totalorder %s167, %s169
    %p173 = scmp.eq.s32.totalorder %s18, 0
    %p174 = por %p172, %p173
    %p175 = scmp.ne.s32.totalorder %s167, %s169
    %p176 = scmp.eq.s32.totalorder %s23, 1
    %p177 = por %p175, %p176
    %p178 = scmp.ne.s32.totalorder %s169, %s170
    %p179 = scmp.eq.s32.totalorder %s23, 0
    %p180 = por %p178, %p179
    %p181 = scmp.ne.s32.totalorder %s169, %s170
    %p182 = scmp.eq.s32.totalorder %s24, 1
    %p183 = por %p181, %p182
    %p185 = scmp.ne.s32.totalorder %s170, %s184
    %p186 = scmp.eq.s32.totalorder %s24, 0
    %p187 = por %p185, %p186
    %s189 = sadd.s32 %s188, 1
    %p192 = scmp.eq.s32.totalorder %s18, 1
    %p193 = scmp.ne.s32.totalorder %s188, %s190
    %p194 = scmp.eq.s32.totalorder %s18, 0
    %p195 = por %p193, %p194
    %p196 = scmp.ne.s32.totalorder %s188, %s190
    %p197 = scmp.eq.s32.totalorder %s23, 1
    %p198 = por %p196, %p197
    %p199 = scmp.ne.s32.totalorder %s190, %s191
    %p200 = scmp.eq.s32.totalorder %s23, 0
    %p201 = por %p199, %p200
    %p202 = scmp.ne.s32.totalorder %s190, %s191
    %p203 = scmp.eq.s32.totalorder %s24, 1
    %p204 = por %p202, %p203
    %p206 = scmp.ne.s32.totalorder %s191, %s205
    %p207 = scmp.eq.s32.totalorder %s24, 0
    %p208 = por %p206, %p207
    %s210 = sadd.s32 %s209, 1
    %p213 = scmp.eq.s32.totalorder %s18, 1
    %p214 = scmp.ne.s32.totalorder %s209, %s211
    %p215 = scmp.eq.s32.totalorder %s18, 0
    %p216 = por %p214, %p215
    %p217 = scmp.ne.s32.totalorder %s209, %s211
    %p218 = scmp.eq.s32.totalorder %s23, 1
    %p219 = por %p217, %p218
    %p220 = scmp.ne.s32.totalorder %s211, %s212
    %p221 = scmp.eq.s32.totalorder %s23, 0
    %p222 = por %p220, %p221
    %p223 = scmp.ne.s32.totalorder %s211, %s212
    %p224 = scmp.eq.s32.totalorder %s24, 1
    %p225 = por %p223, %p224
    %p227 = scmp.ne.s32.totalorder %s212, %s226
    %p228 = scmp.eq.s32.totalorder %s24, 0
    %p229 = por %p227, %p228
    %s231 = sadd.s32 %s230, 1
    %p234 = scmp.eq.s32.totalorder %s18, 1
    %p235 = scmp.ne.s32.totalorder %s230, %s232
    %p236 = scmp.eq.s32.totalorder %s18, 0
    %p237 = por %p235, %p236
    %p238 = scmp.ne.s32.totalorder %s230, %s232
    %p239 = scmp.eq.s32.totalorder %s23, 1
    %p240 = por %p238, %p239
    %p241 = scmp.ne.s32.totalorder %s232, %s233
    %p242 = scmp.eq.s32.totalorder %s23, 0
    %p243 = por %p241, %p242
    %p244 = scmp.ne.s32.totalorder %s232, %s233
    %p245 = scmp.eq.s32.totalorder %s24, 1
    %p246 = por %p244, %p245
    %p248 = scmp.ne.s32.totalorder %s233, %s247
    %p249 = scmp.eq.s32.totalorder %s24, 0
    %p250 = por %p248, %p249
    %s251 = ssub.s32 %s18, %s25
    %p252 = scmp.eq.s32.totalorder %s251, 0
    %s254 = sadd.s32 %s253, 1
    %s255 = scalar_select %p252, %s253, %s254
    %p258 = pneg %p252
    %p259 = scmp.eq.s32.totalorder %s18, 1
    %p260 = por %p258, %p259
    %p261 = scmp.ne.s32.totalorder %s253, %s256
    %p262 = scmp.eq.s32.totalorder %s18, 0
    %p263 = por %p261, %p262
    %p264 = scmp.ne.s32.totalorder %s253, %s256
    %p265 = scmp.eq.s32.totalorder %s23, 1
    %p266 = por %p264, %p265
    %p267 = scmp.ne.s32.totalorder %s256, %s257
    %p268 = scmp.eq.s32.totalorder %s23, 0
    %p269 = por %p267, %p268
    %p270 = scmp.ne.s32.totalorder %s256, %s257
    %p271 = scmp.eq.s32.totalorder %s24, 1
    %p272 = por %p270, %p271
    %p274 = scmp.ne.s32.totalorder %s257, %s273
    %p275 = scmp.eq.s32.totalorder %s24, 0
    %p276 = por %p274, %p275
    %s277 = ssub.s32 %s18, %s25
    %p278 = scmp.eq.s32.totalorder %s277, 0
    %s280 = sadd.s32 %s279, 1
    %s281 = scalar_select %p278, %s279, %s280
    %p284 = pneg %p278
    %p285 = scmp.eq.s32.totalorder %s18, 1
    %p286 = por %p284, %p285
    %p287 = scmp.ne.s32.totalorder %s279, %s282
    %p288 = scmp.eq.s32.totalorder %s18, 0
    %p289 = por %p287, %p288
    %p290 = scmp.ne.s32.totalorder %s279, %s282
    %p291 = scmp.eq.s32.totalorder %s23, 1
    %p292 = por %p290, %p291
    %p293 = scmp.ne.s32.totalorder %s282, %s283
    %p294 = scmp.eq.s32.totalorder %s23, 0
    %p295 = por %p293, %p294
    %p296 = scmp.ne.s32.totalorder %s282, %s283
    %p297 = scmp.eq.s32.totalorder %s24, 1
    %p298 = por %p296, %p297
    %p300 = scmp.ne.s32.totalorder %s283, %s299
    %p301 = scmp.eq.s32.totalorder %s24, 0
    %p302 = por %p300, %p301
    %p303 = scmp.le.s32.totalorder 1, %s18
    %p304 = scmp.lt.s32.totalorder %s18, 3
    %p305 = pnand %p303, %p304
    %p306 = pneg %p305
    // Predicated region
    $region9: #{chebnet_forward.5} parent=5 // pred_check
      _
    $region10: #{chebnet_forward.5} parent=5 // pred_check_branch
      %308 = sbr.rel (%p305) target = $region12
    $region11: #{chebnet_forward.5} parent=5 // pred_region
      %s309 = ssub.s32 %s18, 1
      // Predicated region
      $region13: #{chebnet_forward.5} parent=11 // pred_check
        %p310 = pneg %p39
      $region14: #{chebnet_forward.5} parent=11 // pred_check_branch
        %312 = sbr.rel (%p310) target = $region16
      $region15: #{chebnet_forward.5} parent=11 // pred_region
        _
      $region16: #{chebnet_forward.5} parent=11 // pred_fallthru
        _
      // Predicated region
      $region17: #{chebnet_forward.5} parent=11 // pred_check
        %p313 = pneg %p138
      $region18: #{chebnet_forward.5} parent=11 // pred_check_branch
        %315 = sbr.rel (%p313) target = $region20
      $region19: #{chebnet_forward.5} parent=11 // pred_region
        _
      $region20: #{chebnet_forward.5} parent=11 // pred_fallthru
        _
      // Predicated region
      $region21: #{chebnet_forward.5} parent=11 // pred_check
        %p316 = pneg %p159
      $region22: #{chebnet_forward.5} parent=11 // pred_check_branch
        %318 = sbr.rel (%p316) target = $region24
      $region23: #{chebnet_forward.5} parent=11 // pred_region
        _
      $region24: #{chebnet_forward.5} parent=11 // pred_fallthru
        _
      // Predicated region
      $region25: #{chebnet_forward.5} parent=11 // pred_check
        %p319 = pneg %p180
      $region26: #{chebnet_forward.5} parent=11 // pred_check_branch
        %321 = sbr.rel (%p319) target = $region28
      $region27: #{chebnet_forward.5} parent=11 // pred_region
        _
      $region28: #{chebnet_forward.5} parent=11 // pred_fallthru
        _
      // Predicated region
      $region29: #{chebnet_forward.5} parent=11 // pred_check
        %p322 = pneg %p201
      $region30: #{chebnet_forward.5} parent=11 // pred_check_branch
        %324 = sbr.rel (%p322) target = $region32
      $region31: #{chebnet_forward.5} parent=11 // pred_region
        _
      $region32: #{chebnet_forward.5} parent=11 // pred_fallthru
        _
      // Predicated region
      $region33: #{chebnet_forward.5} parent=11 // pred_check
        %p325 = pneg %p222
      $region34: #{chebnet_forward.5} parent=11 // pred_check_branch
        %327 = sbr.rel (%p325) target = $region36
      $region35: #{chebnet_forward.5} parent=11 // pred_region
        _
      $region36: #{chebnet_forward.5} parent=11 // pred_fallthru
        _
      // Predicated region
      $region37: #{chebnet_forward.5} parent=11 // pred_check
        %p328 = pneg %p243
      $region38: #{chebnet_forward.5} parent=11 // pred_check_branch
        %330 = sbr.rel (%p328) target = $region40
      $region39: #{chebnet_forward.5} parent=11 // pred_region
        _
      $region40: #{chebnet_forward.5} parent=11 // pred_fallthru
        _
    $region12: #{chebnet_forward.5} parent=5 // pred_fallthru
      _
    %p331 = scmp.lt.s32.totalorder %s18, 2
    // Predicated region
    $region41: #{chebnet_forward.5} parent=5 // pred_check
      %p332 = pneg %p331
    $region42: #{chebnet_forward.5} parent=5 // pred_check_branch
      %334 = sbr.rel (%p332) target = $region44
    $region43: #{chebnet_forward.5} parent=5 // pred_region
      // Predicated region
      $region45: #{chebnet_forward.5} parent=43 // pred_check
        %p335 = pneg %p59
      $region46: #{chebnet_forward.5} parent=43 // pred_check_branch
        %337 = sbr.rel (%p335) target = $region48
      $region47: #{chebnet_forward.5} parent=43 // pred_region
        %s338 = smul.u32 16, %s18
        %p339 = scmp.lt.s32.totalorder %s338, 31
        %s340 = scalar_select %p339, %s338, 31
        %s341 = smul.addr %s340, 3
        %s342 = smul.addr %s341, 4
        %s343 = scalar_lea.vmem %s1, %s342
        %s344 = smul.u32 16, %s18
      $region48: #{chebnet_forward.5} parent=43 // pred_fallthru
        _
      // Predicated region
      $region49: #{chebnet_forward.5} parent=43 // pred_check
        %p345 = pneg %p85
      $region50: #{chebnet_forward.5} parent=43 // pred_check_branch
        %347 = sbr.rel (%p345) target = $region52
      $region51: #{chebnet_forward.5} parent=43 // pred_region
        %s348 = smul.u32 16, %s18
        %p349 = scmp.lt.s32.totalorder %s348, 31
        %s350 = scalar_select %p349, %s348, 31
        %s351 = smul.addr %s350, 4
        %s352 = scalar_lea.vmem %s2, %s351
        %s353 = smul.u32 16, %s18
      $region52: #{chebnet_forward.5} parent=43 // pred_fallthru
        _
      // Predicated region
      $region53: #{chebnet_forward.5} parent=43 // pred_check
        %p354 = pneg %p111
      $region54: #{chebnet_forward.5} parent=43 // pred_check_branch
        %356 = sbr.rel (%p354) target = $region56
      $region55: #{chebnet_forward.5} parent=43 // pred_region
        %s357 = smul.u32 16, %s18
        %p358 = scmp.lt.s32.totalorder %s357, 31
        %s359 = scalar_select %p358, %s357, 31
        %s360 = smul.addr %s359, 2
        %s361 = smul.addr %s360, 4
        %s362 = scalar_lea.vmem %s3, %s361
        %s363 = smul.u32 16, %s18
      $region56: #{chebnet_forward.5} parent=43 // pred_fallthru
        _
    $region44: #{chebnet_forward.5} parent=5 // pred_fallthru
      _
    %p364 = scmp.le.s32.totalorder 1, %s18
    %p365 = scmp.lt.s32.totalorder %s18, 3
    %p366 = pnand %p364, %p365
    %p367 = pneg %p366
    // Predicated region
    $region57: #{chebnet_forward.5} parent=5 // pred_check
      _
    $region58: #{chebnet_forward.5} parent=5 // pred_check_branch
      %369 = sbr.rel (%p366) target = $region60
    $region59: #{chebnet_forward.5} parent=5 // pred_region
      %s370 = ssub.s32 %s18, 1
      %p371 = pneg %p39
      %p372 = pneg %p36
      %s373 = smul.u32 16, %s23
      %p374 = scmp.lt.s32.totalorder %s373, 31
      %s375 = scalar_select %p374, %s373, 31
      %s376 = smul.addr %s375, 3
      %s377 = smul.addr %s376, 4
      %s378 = scalar_lea.vmem %s1, %s377
      %p379 = pneg %p65
      %p380 = pneg %p62
      %s381 = smul.u32 16, %s23
      %p382 = scmp.lt.s32.totalorder %s381, 31
      %s383 = scalar_select %p382, %s381, 31
      %s384 = smul.addr %s383, 4
      %s385 = scalar_lea.vmem %s2, %s384
      %p386 = pneg %p91
      %p387 = pneg %p88
      %s388 = smul.u32 16, %s23
      %p389 = scmp.lt.s32.totalorder %s388, 31
      %s390 = scalar_select %p389, %s388, 31
      %s391 = smul.addr %s390, 2
      %s392 = smul.addr %s391, 4
      %s393 = scalar_lea.vmem %s3, %s392
      %p394 = pneg %p117
      %p395 = pneg %p114
      %p396 = pneg %p138
      %p397 = pneg %p135
      %p398 = pneg %p159
      %p399 = pneg %p156
      %p400 = pneg %p180
      %p401 = pneg %p177
      %p402 = pneg %p201
      %p403 = pneg %p198
      %p404 = pneg %p222
      %p405 = pneg %p219
      %p406 = pneg %p243
      %p407 = pneg %p240
      %p408 = pneg %p269
      %p409 = pneg %p266
      %s410 = smul.u32 16, %s23
      %p411 = scmp.lt.s32.totalorder %s410, 31
      %s412 = scalar_select %p411, %s410, 31
      %s413 = smul.addr %s412, 4
      %s414 = scalar_lea.vmem %s10, %s413
      %p415 = pneg %p295
      %p416 = pneg %p292
      %s417 = smul.u32 16, %s23
      %p418 = scmp.lt.s32.totalorder %s417, 31
      %s419 = scalar_select %p418, %s417, 31
      %s420 = smul.addr %s419, 4
      %s421 = scalar_lea.vmem %s11, %s420
      %s422 = smul.u32 16, %s23
      %p423 = scmp.lt.s32.totalorder %s422, 31
      %s424 = scalar_select %p423, %s422, 31
      %s425 = smul.addr %s424, 3
      %s426 = smul.addr %s425, 4
      %s427 = scalar_lea.vmem %s1, %s426
      %s428 = smul.u32 16, %s23
      %s429 = smul.u32 16, %s23
      %p430 = scmp.lt.s32.totalorder %s429, 31
      %s431 = scalar_select %p430, %s429, 31
      %s432 = smul.addr %s431, 4
      %s433 = scalar_lea.vmem %s2, %s432
      %s434 = smul.u32 16, %s23
      %s435 = smul.u32 16, %s23
      %p436 = scmp.lt.s32.totalorder %s435, 31
      %s437 = scalar_select %p436, %s435, 31
      %s438 = smul.addr %s437, 2
      %s439 = smul.addr %s438, 4
      %s440 = scalar_lea.vmem %s3, %s439
      %s441 = smul.u32 16, %s23
      %s442 = smul.u32 16, %s23
      %p443 = scmp.lt.s32.totalorder %s442, 31
      %s444 = scalar_select %p443, %s442, 31
      %s445 = smul.addr %s444, 4
      %s446 = scalar_lea.vmem %s10, %s445
      %s447 = smul.u32 16, %s23
      %s448 = smul.u32 16, %s23
      %p449 = scmp.lt.s32.totalorder %s448, 31
      %s450 = scalar_select %p449, %s448, 31
      %s451 = smul.addr %s450, 4
      %s452 = scalar_lea.vmem %s11, %s451
      %s453 = smul.u32 16, %s23
      %v455 = vld [vmem:[%s440] sm:$0xff]
      %v456 = vld [vmem:[%s440 + $0x8] sm:$0xff]
      %v457 = vld [vmem:[%s440 + $0x10] sm:$0xff]
      %v458 = vld [vmem:[%s440 + $0x18] sm:$0xff]
      %v459 = vld [vmem:[%s440 + $0x20] sm:$0xff]
      %v460 = vld [vmem:[%s440 + $0x28] sm:$0xff]
      %v461 = vld [vmem:[%s440 + $0x30] sm:$0xff]
      %v462 = vld [vmem:[%s440 + $0x38] sm:$0xff]
      %v463 = vld [vmem:[%s440 + $0x40] sm:$0xff]
      %v464 = vld [vmem:[%s440 + $0x48] sm:$0xff]
      %v465 = vld [vmem:[%s440 + $0x50] sm:$0xff]
      %v466 = vld [vmem:[%s440 + $0x58] sm:$0xff]
      %v467 = vld [vmem:[%s440 + $0x60] sm:$0xff]
      %v468 = vld [vmem:[%s440 + $0x68] sm:$0xff]
      %v469 = vld [vmem:[%s440 + $0x70] sm:$0xff]
      %v470 = vld [vmem:[%s440 + $0x78] sm:$0xff]
      %v471 = vld [vmem:[%s0] sm:$0xff]
      %v472 = vld [vmem:[%s0 + $0x8] sm:$0xf]
      %v473 = vld [vmem:[%s0 + $0xc] sm:$0xff]
      %v474 = vld [vmem:[%s0 + $0x14] sm:$0xf]
      %v475 = vld [vmem:[%s0 + $0x18] sm:$0xff]
      %v476 = vld [vmem:[%s0 + $0x20] sm:$0xf]
      %v477 = vld [vmem:[%s0 + $0x24] sm:$0xff]
      %v478 = vld [vmem:[%s0 + $0x2c] sm:$0xf]
      %v479 = vld [vmem:[%s0 + $0x30] sm:$0xff]
      %v480 = vld [vmem:[%s0 + $0x38] sm:$0xf]
      %v481 = vld [vmem:[%s0 + $0x3c] sm:$0xff]
      %v482 = vld [vmem:[%s0 + $0x44] sm:$0xf]
      %v483 = vld [vmem:[%s0 + $0x48] sm:$0xff]
      %v484 = vld [vmem:[%s0 + $0x50] sm:$0xf]
      %v485 = vld [vmem:[%s0 + $0x54] sm:$0xff]
      %v486 = vld [vmem:[%s0 + $0x5c] sm:$0xf]
      %v487 = vld [vmem:[%s0 + $0x60] sm:$0xff]
      %v488 = vld [vmem:[%s0 + $0x68] sm:$0xf]
      %v489 = vld [vmem:[%s0 + $0x6c] sm:$0xff]
      %v490 = vld [vmem:[%s0 + $0x74] sm:$0xf]
      %v491 = vld [vmem:[%s0 + $0x78] sm:$0xff]
      %v492 = vld [vmem:[%s0 + $0x80] sm:$0xf]
      %v493 = vld [vmem:[%s0 + $0x84] sm:$0xff]
      %v494 = vld [vmem:[%s0 + $0x8c] sm:$0xf]
      %v495 = vld [vmem:[%s0 + $0x90] sm:$0xff]
      %v496 = vld [vmem:[%s0 + $0x98] sm:$0xf]
      %v497 = vld [vmem:[%s0 + $0x9c] sm:$0xff]
      %v498 = vld [vmem:[%s0 + $0xa4] sm:$0xf]
      %v499 = vld [vmem:[%s0 + $0xa8] sm:$0xff]
      %v500 = vld [vmem:[%s0 + $0xb0] sm:$0xf]
      %v501 = vld [vmem:[%s0 + $0xb4] sm:$0xff]
      %v502 = vld [vmem:[%s0 + $0xbc] sm:$0xf]
      %v503 = vld [vmem:[%s0 + $0xc0] sm:$0xff]
      %v504 = vld [vmem:[%s0 + $0xc8] sm:$0xf]
      %v505 = vld [vmem:[%s0 + $0xcc] sm:$0xff]
      %v506 = vld [vmem:[%s0 + $0xd4] sm:$0xf]
      %v507 = vld [vmem:[%s0 + $0xd8] sm:$0xff]
      %v508 = vld [vmem:[%s0 + $0xe0] sm:$0xf]
      %v509 = vld [vmem:[%s0 + $0xe4] sm:$0xff]
      %v510 = vld [vmem:[%s0 + $0xec] sm:$0xf]
      %v511 = vld [vmem:[%s0 + $0xf0] sm:$0xff]
      %v512 = vld [vmem:[%s0 + $0xf8] sm:$0xf]
      %v513 = vld [vmem:[%s0 + $0xfc] sm:$0xff]
      %v514 = vld [vmem:[%s0 + $0x104] sm:$0xf]
      %v515 = vld [vmem:[%s0 + $0x108] sm:$0xff]
      %v516 = vld [vmem:[%s0 + $0x110] sm:$0xf]
      %v517 = vld [vmem:[%s0 + $0x114] sm:$0xff]
      %v518 = vld [vmem:[%s0 + $0x11c] sm:$0xf]
      %v519 = vld [vmem:[%s0 + $0x120] sm:$0xff]
      %v520 = vld [vmem:[%s0 + $0x128] sm:$0xf]
      %v521 = vld [vmem:[%s0 + $0x12c] sm:$0xff]
      %v522 = vld [vmem:[%s0 + $0x134] sm:$0xf]
      %v523 = vld [vmem:[%s0 + $0x138] sm:$0xff]
      %v524 = vld [vmem:[%s0 + $0x140] sm:$0xf]
      %v525 = vld [vmem:[%s0 + $0x144] sm:$0xff]
      %v526 = vld [vmem:[%s0 + $0x14c] sm:$0xf]
      %v527 = vld [vmem:[%s0 + $0x150] sm:$0xff]
      %v528 = vld [vmem:[%s0 + $0x158] sm:$0xf]
      %v529 = vld [vmem:[%s0 + $0x15c] sm:$0xff]
      %v530 = vld [vmem:[%s0 + $0x164] sm:$0xf]
      %v531 = vld [vmem:[%s0 + $0x168] sm:$0xff]
      %v532 = vld [vmem:[%s0 + $0x170] sm:$0xf]
      %v533 = vld [vmem:[%s0 + $0x174] sm:$0xff]
      %v534 = vld [vmem:[%s0 + $0x17c] sm:$0xf]
      %v551 = vunpack.c.l.b16 %v455
      %v552 = vunpack.c.h.b16 %v455
      %v553 = vunpack.c.l.b16 %v456
      %v554 = vunpack.c.h.b16 %v456
      %v555 = vunpack.c.l.b16 %v457
      %v556 = vunpack.c.h.b16 %v457
      %v557 = vunpack.c.l.b16 %v458
      %v558 = vunpack.c.h.b16 %v458
      %v559 = vunpack.c.l.b16 %v459
      %v560 = vunpack.c.h.b16 %v459
      %v561 = vunpack.c.l.b16 %v460
      %v562 = vunpack.c.h.b16 %v460
      %v563 = vunpack.c.l.b16 %v461
      %v564 = vunpack.c.h.b16 %v461
      %v565 = vunpack.c.l.b16 %v462
      %v566 = vunpack.c.h.b16 %v462
      %v567 = vunpack.c.l.b16 %v463
      %v568 = vunpack.c.h.b16 %v463
      %v569 = vunpack.c.l.b16 %v464
      %v570 = vunpack.c.h.b16 %v464
      %v571 = vunpack.c.l.b16 %v465
      %v572 = vunpack.c.h.b16 %v465
      %v573 = vunpack.c.l.b16 %v466
      %v574 = vunpack.c.h.b16 %v466
      %v575 = vunpack.c.l.b16 %v467
      %v576 = vunpack.c.h.b16 %v467
      %v577 = vunpack.c.l.b16 %v468
      %v578 = vunpack.c.h.b16 %v468
      %v579 = vunpack.c.l.b16 %v469
      %v580 = vunpack.c.h.b16 %v469
      %v581 = vunpack.c.l.b16 %v470
      %v582 = vunpack.c.h.b16 %v470
      %v583 = vpack.c.b16 %v553, %v551
      %v584 = vpack.c.b16 %v554, %v552
      %v585 = vpack.c.b16 %v557, %v555
      %v586 = vpack.c.b16 %v558, %v556
      %v587 = vpack.c.b16 %v561, %v559
      %v588 = vpack.c.b16 %v562, %v560
      %v589 = vpack.c.b16 %v565, %v563
      %v590 = vpack.c.b16 %v566, %v564
      %v591 = vpack.c.b16 %v569, %v567
      %v592 = vpack.c.b16 %v570, %v568
      %v593 = vpack.c.b16 %v573, %v571
      %v594 = vpack.c.b16 %v574, %v572
      %v595 = vpack.c.b16 %v577, %v575
      %v596 = vpack.c.b16 %v578, %v576
      %v597 = vpack.c.b16 %v581, %v579
      %v598 = vpack.c.b16 %v582, %v580
      %v679 = vunpack.c.l.b16 %v471
      %v680 = vunpack.c.h.b16 %v471
      %v681 = vunpack.c.l.b16 %v472
      %v682 = vunpack.c.l.b16 %v473
      %v683 = vunpack.c.h.b16 %v473
      %v684 = vunpack.c.l.b16 %v474
      %v685 = vunpack.c.l.b16 %v475
      %v686 = vunpack.c.h.b16 %v475
      %v687 = vunpack.c.l.b16 %v476
      %v688 = vunpack.c.l.b16 %v477
      %v689 = vunpack.c.h.b16 %v477
      %v690 = vunpack.c.l.b16 %v478
      %v691 = vunpack.c.l.b16 %v479
      %v692 = vunpack.c.h.b16 %v479
      %v693 = vunpack.c.l.b16 %v480
      %v694 = vunpack.c.l.b16 %v481
      %v695 = vunpack.c.h.b16 %v481
      %v696 = vunpack.c.l.b16 %v482
      %v697 = vunpack.c.l.b16 %v483
      %v698 = vunpack.c.h.b16 %v483
      %v699 = vunpack.c.l.b16 %v484
      %v700 = vunpack.c.l.b16 %v485
      %v701 = vunpack.c.h.b16 %v485
      %v702 = vunpack.c.l.b16 %v486
      %v703 = vunpack.c.l.b16 %v487
      %v704 = vunpack.c.h.b16 %v487
      %v705 = vunpack.c.l.b16 %v488
      %v706 = vunpack.c.l.b16 %v489
      %v707 = vunpack.c.h.b16 %v489
      %v708 = vunpack.c.l.b16 %v490
      %v709 = vunpack.c.l.b16 %v491
      %v710 = vunpack.c.h.b16 %v491
      %v711 = vunpack.c.l.b16 %v492
      %v712 = vunpack.c.l.b16 %v493
      %v713 = vunpack.c.h.b16 %v493
      %v714 = vunpack.c.l.b16 %v494
      %v715 = vunpack.c.l.b16 %v495
      %v716 = vunpack.c.h.b16 %v495
      %v717 = vunpack.c.l.b16 %v496
      %v718 = vunpack.c.l.b16 %v497
      %v719 = vunpack.c.h.b16 %v497
      %v720 = vunpack.c.l.b16 %v498
      %v721 = vunpack.c.l.b16 %v499
      %v722 = vunpack.c.h.b16 %v499
      %v723 = vunpack.c.l.b16 %v500
      %v724 = vunpack.c.l.b16 %v501
      %v725 = vunpack.c.h.b16 %v501
      %v726 = vunpack.c.l.b16 %v502
      %v727 = vunpack.c.l.b16 %v503
      %v728 = vunpack.c.h.b16 %v503
      %v729 = vunpack.c.l.b16 %v504
      %v730 = vunpack.c.l.b16 %v505
      %v731 = vunpack.c.h.b16 %v505
      %v732 = vunpack.c.l.b16 %v506
      %v733 = vunpack.c.l.b16 %v507
      %v734 = vunpack.c.h.b16 %v507
      %v735 = vunpack.c.l.b16 %v508
      %v736 = vunpack.c.l.b16 %v509
      %v737 = vunpack.c.h.b16 %v509
      %v738 = vunpack.c.l.b16 %v510
      %v739 = vunpack.c.l.b16 %v511
      %v740 = vunpack.c.h.b16 %v511
      %v741 = vunpack.c.l.b16 %v512
      %v742 = vunpack.c.l.b16 %v513
      %v743 = vunpack.c.h.b16 %v513
      %v744 = vunpack.c.l.b16 %v514
      %v745 = vunpack.c.l.b16 %v515
      %v746 = vunpack.c.h.b16 %v515
      %v747 = vunpack.c.l.b16 %v516
      %v748 = vunpack.c.l.b16 %v517
      %v749 = vunpack.c.h.b16 %v517
      %v750 = vunpack.c.l.b16 %v518
      %v751 = vunpack.c.l.b16 %v519
      %v752 = vunpack.c.h.b16 %v519
      %v753 = vunpack.c.l.b16 %v520
      %v754 = vunpack.c.l.b16 %v521
      %v755 = vunpack.c.h.b16 %v521
      %v756 = vunpack.c.l.b16 %v522
      %v757 = vunpack.c.l.b16 %v523
      %v758 = vunpack.c.h.b16 %v523
      %v759 = vunpack.c.l.b16 %v524
      %v760 = vunpack.c.l.b16 %v525
      %v761 = vunpack.c.h.b16 %v525
      %v762 = vunpack.c.l.b16 %v526
      %v763 = vunpack.c.l.b16 %v527
      %v764 = vunpack.c.h.b16 %v527
      %v765 = vunpack.c.l.b16 %v528
      %v766 = vunpack.c.l.b16 %v529
      %v767 = vunpack.c.h.b16 %v529
      %v768 = vunpack.c.l.b16 %v530
      %v769 = vunpack.c.l.b16 %v531
      %v770 = vunpack.c.h.b16 %v531
      %v771 = vunpack.c.l.b16 %v532
      %v772 = vunpack.c.l.b16 %v533
      %v773 = vunpack.c.h.b16 %v533
      %v774 = vunpack.c.l.b16 %v534
      %v775 = vpack.c.b16 %v682, %v679
      %v776 = vpack.c.b16 %v683, %v680
      %v777 = vpack.c.b16 %v684, %v681
      %v778 = vpack.c.b16 %v688, %v685
      %v779 = vpack.c.b16 %v689, %v686
      %v780 = vpack.c.b16 %v690, %v687
      %v781 = vpack.c.b16 %v694, %v691
      %v782 = vpack.c.b16 %v695, %v692
      %v783 = vpack.c.b16 %v696, %v693
      %v784 = vpack.c.b16 %v700, %v697
      %v785 = vpack.c.b16 %v701, %v698
      %v786 = vpack.c.b16 %v702, %v699
      %v787 = vpack.c.b16 %v706, %v703
      %v788 = vpack.c.b16 %v707, %v704
      %v789 = vpack.c.b16 %v708, %v705
      %v790 = vpack.c.b16 %v712, %v709
      %v791 = vpack.c.b16 %v713, %v710
      %v792 = vpack.c.b16 %v714, %v711
      %v793 = vpack.c.b16 %v718, %v715
      %v794 = vpack.c.b16 %v719, %v716
      %v795 = vpack.c.b16 %v720, %v717
      %v796 = vpack.c.b16 %v724, %v721
      %v797 = vpack.c.b16 %v725, %v722
      %v798 = vpack.c.b16 %v726, %v723
      %v799 = vpack.c.b16 %v730, %v727
      %v800 = vpack.c.b16 %v731, %v728
      %v801 = vpack.c.b16 %v732, %v729
      %v802 = vpack.c.b16 %v736, %v733
      %v803 = vpack.c.b16 %v737, %v734
      %v804 = vpack.c.b16 %v738, %v735
      %v805 = vpack.c.b16 %v742, %v739
      %v806 = vpack.c.b16 %v743, %v740
      %v807 = vpack.c.b16 %v744, %v741
      %v808 = vpack.c.b16 %v748, %v745
      %v809 = vpack.c.b16 %v749, %v746
      %v810 = vpack.c.b16 %v750, %v747
      %v811 = vpack.c.b16 %v754, %v751
      %v812 = vpack.c.b16 %v755, %v752
      %v813 = vpack.c.b16 %v756, %v753
      %v814 = vpack.c.b16 %v760, %v757
      %v815 = vpack.c.b16 %v761, %v758
      %v816 = vpack.c.b16 %v762, %v759
      %v817 = vpack.c.b16 %v766, %v763
      %v818 = vpack.c.b16 %v767, %v764
      %v819 = vpack.c.b16 %v768, %v765
      %v820 = vpack.c.b16 %v772, %v769
      %v821 = vpack.c.b16 %v773, %v770
      %v822 = vpack.c.b16 %v774, %v771
      %871 = vmatprep.subr.bf16.mxu0 %v776
      %872 = vmatpush1.bf16.msra.mxu0 %v775
      %873 = vmatprep.subr.bf16.mxu0 %v779
      %874 = vmatpush1.bf16.msra.mxu0 %v778
      %875 = vmatprep.subr.bf16.mxu0 %v782
      %876 = vmatpush1.bf16.msra.mxu0 %v781
      %877 = vmatprep.subr.bf16.mxu0 %v785
      %878 = vmatpush1.bf16.msra.mxu0 %v784
      %879 = vmatprep.subr.bf16.mxu0 %v788
      %880 = vmatpush1.bf16.msra.mxu0 %v787
      %881 = vmatprep.subr.bf16.mxu0 %v791
      %882 = vmatpush1.bf16.msra.mxu0 %v790
      %883 = vmatprep.subr.bf16.mxu0 %v794
      %884 = vmatpush1.bf16.msra.mxu0 %v793
      %885 = vmatprep.subr.bf16.mxu0 %v797
      %886 = vmatpush1.bf16.msra.mxu0 %v796
      %887 = vmatprep.subr.bf16.mxu0 %v800
      %888 = vmatpush1.bf16.msra.mxu0 %v799
      %889 = vmatprep.subr.bf16.mxu0 %v803
      %890 = vmatpush1.bf16.msra.mxu0 %v802
      %891 = vmatprep.subr.bf16.mxu0 %v806
      %892 = vmatpush1.bf16.msra.mxu0 %v805
      %893 = vmatprep.subr.bf16.mxu0 %v809
      %894 = vmatpush1.bf16.msra.mxu0 %v808
      %895 = vmatprep.subr.bf16.mxu0 %v812
      %896 = vmatpush1.bf16.msra.mxu0 %v811
      %897 = vmatprep.subr.bf16.mxu0 %v815
      %898 = vmatpush1.bf16.msra.mxu0 %v814
      %899 = vmatprep.subr.bf16.mxu0 %v818
      %900 = vmatpush1.bf16.msra.mxu0 %v817
      %901 = vmatprep.subr.bf16.mxu0 %v821
      %902 = vmatpush1.bf16.msra.mxu0 %v820
      %903 = vmatprep.mubr.bf16.mxu0 %v584
      %904 = vmatmul.mubr.bf16.gmra.mrb[0].mxu0 %v583
      %v905 = vpop.f32.mrb[0].mxu0
      %v906 = vadd.f32 0.0, %v905
      %v907 = vpop.f32.mrb[0].mxu0
      %v908 = vadd.f32 0.0, %v907
      %v909 = vpop.f32.mrb[0].mxu0
      %v910 = vadd.f32 0.0, %v909
      %v911 = vpop.f32.mrb[0].mxu0
      %v912 = vadd.f32 0.0, %v911
      %913 = vmatprep.mubr.bf16.mxu0 %v586
      %914 = vmatmul.mubr.bf16.gmra.mrb[0].mxu0 %v585
      %v915 = vpop.f32.mrb[0].mxu0
      %v916 = vadd.f32 0.0, %v915
      %v917 = vpop.f32.mrb[0].mxu0
      %v918 = vadd.f32 0.0, %v917
      %v919 = vpop.f32.mrb[0].mxu0
      %v920 = vadd.f32 0.0, %v919
      %v921 = vpop.f32.mrb[0].mxu0
      %v922 = vadd.f32 0.0, %v921
      %923 = vmatprep.mubr.bf16.mxu0 %v588
      %924 = vmatmul.mubr.bf16.gmra.mrb[0].mxu0 %v587
      %v925 = vpop.f32.mrb[0].mxu0
      %v926 = vadd.f32 0.0, %v925
      %v927 = vpop.f32.mrb[0].mxu0
      %v928 = vadd.f32 0.0, %v927
      %v929 = vpop.f32.mrb[0].mxu0
      %v930 = vadd.f32 0.0, %v929
      %v931 = vpop.f32.mrb[0].mxu0
      %v932 = vadd.f32 0.0, %v931
      %933 = vmatprep.mubr.bf16.mxu0 %v590
      %934 = vmatmul.mubr.bf16.gmra.mrb[0].mxu0 %v589
      %v935 = vpop.f32.mrb[0].mxu0
      %v936 = vadd.f32 0.0, %v935
      %v937 = vpop.f32.mrb[0].mxu0
      %v938 = vadd.f32 0.0, %v937
      %v939 = vpop.f32.mrb[0].mxu0
      %v940 = vadd.f32 0.0, %v939
      %v941 = vpop.f32.mrb[0].mxu0
      %v942 = vadd.f32 0.0, %v941
      %943 = vmatprep.mubr.bf16.mxu0 %v592
      %944 = vmatmul.mubr.bf16.gmra.mrb[0].mxu0 %v591
      %v945 = vpop.f32.mrb[0].mxu0
      %v946 = vadd.f32 0.0, %v945
      %v947 = vpop.f32.mrb[0].mxu0
      %v948 = vadd.f32 0.0, %v947
      %v949 = vpop.f32.mrb[0].mxu0
      %v950 = vadd.f32 0.0, %v949
      %v951 = vpop.f32.mrb[0].mxu0
      %v952 = vadd.f32 0.0, %v951
      %953 = vmatprep.mubr.bf16.mxu0 %v594
      %954 = vmatmul.mubr.bf16.gmra.mrb[0].mxu0 %v593
      %v955 = vpop.f32.mrb[0].mxu0
      %v956 = vadd.f32 0.0, %v955
      %v957 = vpop.f32.mrb[0].mxu0
      %v958 = vadd.f32 0.0, %v957
      %v959 = vpop.f32.mrb[0].mxu0
      %v960 = vadd.f32 0.0, %v959
      %v961 = vpop.f32.mrb[0].mxu0
      %v962 = vadd.f32 0.0, %v961
      %963 = vmatprep.mubr.bf16.mxu0 %v596
      %964 = vmatmul.mubr.bf16.gmra.mrb[0].mxu0 %v595
      %v965 = vpop.f32.mrb[0].mxu0
      %v966 = vadd.f32 0.0, %v965
      %v967 = vpop.f32.mrb[0].mxu0
      %v968 = vadd.f32 0.0, %v967
      %v969 = vpop.f32.mrb[0].mxu0
      %v970 = vadd.f32 0.0, %v969
      %v971 = vpop.f32.mrb[0].mxu0
      %v972 = vadd.f32 0.0, %v971
      %973 = vmatprep.mubr.bf16.mxu0 %v598
      %974 = vmatmul.mubr.bf16.gmra.mrb[0].mxu0 %v597
      %v975 = vpop.f32.mrb[0].mxu0
      %v976 = vadd.f32 0.0, %v975
      %v977 = vpop.f32.mrb[0].mxu0
      %v978 = vadd.f32 0.0, %v977
      %v979 = vpop.f32.mrb[0].mxu0
      %v980 = vadd.f32 0.0, %v979
      %v981 = vpop.f32.mrb[0].mxu0
      %v982 = vadd.f32 0.0, %v981
      %983 = vdwg.mxu0
      %984 = vmatprep.subr.bf16.mxu0 0
      %985 = vmatpush1.bf16.msra.mxu0 %v777
      %986 = vmatprep.subr.bf16.mxu0 0
      %987 = vmatpush1.bf16.msra.mxu0 %v780
      %988 = vmatprep.subr.bf16.mxu0 0
      %989 = vmatpush1.bf16.msra.mxu0 %v783
      %990 = vmatprep.subr.bf16.mxu0 0
      %991 = vmatpush1.bf16.msra.mxu0 %v786
      %992 = vmatprep.subr.bf16.mxu0 0
      %993 = vmatpush1.bf16.msra.mxu0 %v789
      %994 = vmatprep.subr.bf16.mxu0 0
      %995 = vmatpush1.bf16.msra.mxu0 %v792
      %996 = vmatprep.subr.bf16.mxu0 0
      %997 = vmatpush1.bf16.msra.mxu0 %v795
      %998 = vmatprep.subr.bf16.mxu0 0
      %999 = vmatpush1.bf16.msra.mxu0 %v798
      %1000 = vmatprep.subr.bf16.mxu0 0
      %1001 = vmatpush1.bf16.msra.mxu0 %v801
      %1002 = vmatprep.subr.bf16.mxu0 0
      %1003 = vmatpush1.bf16.msra.mxu0 %v804
      %1004 = vmatprep.subr.bf16.mxu0 0
      %1005 = vmatpush1.bf16.msra.mxu0 %v807
      %1006 = vmatprep.subr.bf16.mxu0 0
      %1007 = vmatpush1.bf16.msra.mxu0 %v810
      %1008 = vmatprep.subr.bf16.mxu0 0
      %1009 = vmatpush1.bf16.msra.mxu0 %v813
      %1010 = vmatprep.subr.bf16.mxu0 0
      %1011 = vmatpush1.bf16.msra.mxu0 %v816
      %1012 = vmatprep.subr.bf16.mxu0 0
      %1013 = vmatpush1.bf16.msra.mxu0 %v819
      %1014 = vmatprep.subr.bf16.mxu0 0
      %1015 = vmatpush1.bf16.msra.mxu0 %v822
      %1016 = vmatprep.mubr.bf16.mxu0 %v584
      %1017 = vmatmul.mubr.bf16.gmra.mrb[0].mxu0 %v583
      %v1018 = vpop.f32.mrb[0].mxu0
      %v1019 = vadd.f32 0.0, %v1018
      %v1020 = vpop.f32.mrb[0].mxu0
      %v1021 = vpop.f32.mrb[0].mxu0
      %v1022 = vadd.f32 0.0, %v1021
      %v1023 = vpop.f32.mrb[0].mxu0
      %1024 = vmatprep.mubr.bf16.mxu0 %v586
      %1025 = vmatmul.mubr.bf16.gmra.mrb[0].mxu0 %v585
      %v1026 = vpop.f32.mrb[0].mxu0
      %v1027 = vadd.f32 0.0, %v1026
      %v1028 = vpop.f32.mrb[0].mxu0
      %v1029 = vpop.f32.mrb[0].mxu0
      %v1030 = vadd.f32 0.0, %v1029
      %v1031 = vpop.f32.mrb[0].mxu0
      %1032 = vmatprep.mubr.bf16.mxu0 %v588
      %1033 = vmatmul.mubr.bf16.gmra.mrb[0].mxu0 %v587
      %v1034 = vpop.f32.mrb[0].mxu0
      %v1035 = vadd.f32 0.0, %v1034
      %v1036 = vpop.f32.mrb[0].mxu0
      %v1037 = vpop.f32.mrb[0].mxu0
      %v1038 = vadd.f32 0.0, %v1037
      %v1039 = vpop.f32.mrb[0].mxu0
      %1040 = vmatprep.mubr.bf16.mxu0 %v590
      %1041 = vmatmul.mubr.bf16.gmra.mrb[0].mxu0 %v589
      %v1042 = vpop.f32.mrb[0].mxu0
      %v1043 = vadd.f32 0.0, %v1042
      %v1044 = vpop.f32.mrb[0].mxu0
      %v1045 = vpop.f32.mrb[0].mxu0
      %v1046 = vadd.f32 0.0, %v1045
      %v1047 = vpop.f32.mrb[0].mxu0
      %1048 = vmatprep.mubr.bf16.mxu0 %v592
      %1049 = vmatmul.mubr.bf16.gmra.mrb[0].mxu0 %v591
      %v1050 = vpop.f32.mrb[0].mxu0
      %v1051 = vadd.f32 0.0, %v1050
      %v1052 = vpop.f32.mrb[0].mxu0
      %v1053 = vpop.f32.mrb[0].mxu0
      %v1054 = vadd.f32 0.0, %v1053
      %v1055 = vpop.f32.mrb[0].mxu0
      %1056 = vmatprep.mubr.bf16.mxu0 %v594
      %1057 = vmatmul.mubr.bf16.gmra.mrb[0].mxu0 %v593
      %v1058 = vpop.f32.mrb[0].mxu0
      %v1059 = vadd.f32 0.0, %v1058
      %v1060 = vpop.f32.mrb[0].mxu0
      %v1061 = vpop.f32.mrb[0].mxu0
      %v1062 = vadd.f32 0.0, %v1061
      %v1063 = vpop.f32.mrb[0].mxu0
      %1064 = vmatprep.mubr.bf16.mxu0 %v596
      %1065 = vmatmul.mubr.bf16.gmra.mrb[0].mxu0 %v595
      %v1066 = vpop.f32.mrb[0].mxu0
      %v1067 = vadd.f32 0.0, %v1066
      %v1068 = vpop.f32.mrb[0].mxu0
      %v1069 = vpop.f32.mrb[0].mxu0
      %v1070 = vadd.f32 0.0, %v1069
      %v1071 = vpop.f32.mrb[0].mxu0
      %1072 = vmatprep.mubr.bf16.mxu0 %v598
      %1073 = vmatmul.mubr.bf16.gmra.mrb[0].mxu0 %v597
      %v1074 = vpop.f32.mrb[0].mxu0
      %v1075 = vadd.f32 0.0, %v1074
      %v1076 = vpop.f32.mrb[0].mxu0
      %v1077 = vpop.f32.mrb[0].mxu0
      %v1078 = vadd.f32 0.0, %v1077
      %v1079 = vpop.f32.mrb[0].mxu0
      %1080 = vdwg.mxu0
      %v1081 = vld [vmem:[%s427] sm:$0xff]
      %v1082 = vld [vmem:[%s427 + $0x8] sm:$0xf]
      %v1083 = vld [vmem:[%s427 + $0xc] sm:$0xff]
      %v1084 = vld [vmem:[%s427 + $0x14] sm:$0xf]
      %v1085 = vld [vmem:[%s427 + $0x18] sm:$0xff]
      %v1086 = vld [vmem:[%s427 + $0x20] sm:$0xf]
      %v1087 = vld [vmem:[%s427 + $0x24] sm:$0xff]
      %v1088 = vld [vmem:[%s427 + $0x2c] sm:$0xf]
      %v1089 = vld [vmem:[%s427 + $0x30] sm:$0xff]
      %v1090 = vld [vmem:[%s427 + $0x38] sm:$0xf]
      %v1091 = vld [vmem:[%s427 + $0x3c] sm:$0xff]
      %v1092 = vld [vmem:[%s427 + $0x44] sm:$0xf]
      %v1093 = vld [vmem:[%s427 + $0x48] sm:$0xff]
      %v1094 = vld [vmem:[%s427 + $0x50] sm:$0xf]
      %v1095 = vld [vmem:[%s427 + $0x54] sm:$0xff]
      %v1096 = vld [vmem:[%s427 + $0x5c] sm:$0xf]
      %v1097 = vld [vmem:[%s427 + $0x60] sm:$0xff]
      %v1098 = vld [vmem:[%s427 + $0x68] sm:$0xf]
      %v1099 = vld [vmem:[%s427 + $0x6c] sm:$0xff]
      %v1100 = vld [vmem:[%s427 + $0x74] sm:$0xf]
      %v1101 = vld [vmem:[%s427 + $0x78] sm:$0xff]
      %v1102 = vld [vmem:[%s427 + $0x80] sm:$0xf]
      %v1103 = vld [vmem:[%s427 + $0x84] sm:$0xff]
      %v1104 = vld [vmem:[%s427 + $0x8c] sm:$0xf]
      %v1105 = vld [vmem:[%s427 + $0x90] sm:$0xff]
      %v1106 = vld [vmem:[%s427 + $0x98] sm:$0xf]
      %v1107 = vld [vmem:[%s427 + $0x9c] sm:$0xff]
      %v1108 = vld [vmem:[%s427 + $0xa4] sm:$0xf]
      %v1109 = vld [vmem:[%s427 + $0xa8] sm:$0xff]
      %v1110 = vld [vmem:[%s427 + $0xb0] sm:$0xf]
      %v1111 = vld [vmem:[%s427 + $0xb4] sm:$0xff]
      %v1112 = vld [vmem:[%s427 + $0xbc] sm:$0xf]
      %v1113 = vpack.c.bf16 %v910, %v906
      %v1114 = vpack.c.bf16 %v912, %v908
      %v1115 = vpack.c.bf16 %v1022, %v1019
      %v1116 = vpack.c.bf16 %v920, %v916
      %v1117 = vpack.c.bf16 %v922, %v918
      %v1118 = vpack.c.bf16 %v1030, %v1027
      %v1119 = vpack.c.bf16 %v930, %v926
      %v1120 = vpack.c.bf16 %v932, %v928
      %v1121 = vpack.c.bf16 %v1038, %v1035
      %v1122 = vpack.c.bf16 %v940, %v936
      %v1123 = vpack.c.bf16 %v942, %v938
      %v1124 = vpack.c.bf16 %v1046, %v1043
      %v1125 = vpack.c.bf16 %v950, %v946
      %v1126 = vpack.c.bf16 %v952, %v948
      %v1127 = vpack.c.bf16 %v1054, %v1051
      %v1128 = vpack.c.bf16 %v960, %v956
      %v1129 = vpack.c.bf16 %v962, %v958
      %v1130 = vpack.c.bf16 %v1062, %v1059
      %v1131 = vpack.c.bf16 %v970, %v966
      %v1132 = vpack.c.bf16 %v972, %v968
      %v1133 = vpack.c.bf16 %v1070, %v1067
      %v1134 = vpack.c.bf16 %v980, %v976
      %v1135 = vpack.c.bf16 %v982, %v978
      %v1136 = vpack.c.bf16 %v1078, %v1075
      %v1169 = vunpack.c.l.b16 %v1081
      %v1170 = vunpack.c.h.b16 %v1081
      %v1171 = vunpack.c.l.b16 %v1082
      %v1172 = vunpack.c.l.b16 %v1083
      %v1173 = vunpack.c.h.b16 %v1083
      %v1174 = vunpack.c.l.b16 %v1084
      %v1175 = vunpack.c.l.b16 %v1085
      %v1176 = vunpack.c.h.b16 %v1085
      %v1177 = vunpack.c.l.b16 %v1086
      %v1178 = vunpack.c.l.b16 %v1087
      %v1179 = vunpack.c.h.b16 %v1087
      %v1180 = vunpack.c.l.b16 %v1088
      %v1181 = vunpack.c.l.b16 %v1089
      %v1182 = vunpack.c.h.b16 %v1089
      %v1183 = vunpack.c.l.b16 %v1090
      %v1184 = vunpack.c.l.b16 %v1091
      %v1185 = vunpack.c.h.b16 %v1091
      %v1186 = vunpack.c.l.b16 %v1092
      %v1187 = vunpack.c.l.b16 %v1093
      %v1188 = vunpack.c.h.b16 %v1093
      %v1189 = vunpack.c.l.b16 %v1094
      %v1190 = vunpack.c.l.b16 %v1095
      %v1191 = vunpack.c.h.b16 %v1095
      %v1192 = vunpack.c.l.b16 %v1096
      %v1193 = vunpack.c.l.b16 %v1097
      %v1194 = vunpack.c.h.b16 %v1097
      %v1195 = vunpack.c.l.b16 %v1098
      %v1196 = vunpack.c.l.b16 %v1099
      %v1197 = vunpack.c.h.b16 %v1099
      %v1198 = vunpack.c.l.b16 %v1100
      %v1199 = vunpack.c.l.b16 %v1101
      %v1200 = vunpack.c.h.b16 %v1101
      %v1201 = vunpack.c.l.b16 %v1102
      %v1202 = vunpack.c.l.b16 %v1103
      %v1203 = vunpack.c.h.b16 %v1103
      %v1204 = vunpack.c.l.b16 %v1104
      %v1205 = vunpack.c.l.b16 %v1105
      %v1206 = vunpack.c.h.b16 %v1105
      %v1207 = vunpack.c.l.b16 %v1106
      %v1208 = vunpack.c.l.b16 %v1107
      %v1209 = vunpack.c.h.b16 %v1107
      %v1210 = vunpack.c.l.b16 %v1108
      %v1211 = vunpack.c.l.b16 %v1109
      %v1212 = vunpack.c.h.b16 %v1109
      %v1213 = vunpack.c.l.b16 %v1110
      %v1214 = vunpack.c.l.b16 %v1111
      %v1215 = vunpack.c.h.b16 %v1111
      %v1216 = vunpack.c.l.b16 %v1112
      %v1217 = vpack.c.b16 %v1172, %v1169
      %v1218 = vpack.c.b16 %v1173, %v1170
      %v1219 = vpack.c.b16 %v1174, %v1171
      %v1220 = vpack.c.b16 %v1178, %v1175
      %v1221 = vpack.c.b16 %v1179, %v1176
      %v1222 = vpack.c.b16 %v1180, %v1177
      %v1223 = vpack.c.b16 %v1184, %v1181
      %v1224 = vpack.c.b16 %v1185, %v1182
      %v1225 = vpack.c.b16 %v1186, %v1183
      %v1226 = vpack.c.b16 %v1190, %v1187
      %v1227 = vpack.c.b16 %v1191, %v1188
      %v1228 = vpack.c.b16 %v1192, %v1189
      %v1229 = vpack.c.b16 %v1196, %v1193
      %v1230 = vpack.c.b16 %v1197, %v1194
      %v1231 = vpack.c.b16 %v1198, %v1195
      %v1232 = vpack.c.b16 %v1202, %v1199
      %v1233 = vpack.c.b16 %v1203, %v1200
      %v1234 = vpack.c.b16 %v1204, %v1201
      %v1235 = vpack.c.b16 %v1208, %v1205
      %v1236 = vpack.c.b16 %v1209, %v1206
      %v1237 = vpack.c.b16 %v1210, %v1207
      %v1238 = vpack.c.b16 %v1214, %v1211
      %v1239 = vpack.c.b16 %v1215, %v1212
      %v1240 = vpack.c.b16 %v1216, %v1213
      %v1265 = vld [vmem:[%s4] sm:$0xf]
      %v1266 = vld [vmem:[%s4 + $0x4] sm:$0xf]
      %v1267 = vld [vmem:[%s4 + $0x8] sm:$0xf]
      %v1268 = vld [vmem:[%s4 + $0xc] sm:$0xf]
      %v1269 = vld [vmem:[%s4 + $0x10] sm:$0xf]
      %v1270 = vld [vmem:[%s4 + $0x14] sm:$0xf]
      %v1271 = vld [vmem:[%s4 + $0x18] sm:$0xf]
      %v1272 = vld [vmem:[%s4 + $0x1c] sm:$0xf]
      %v1273 = vld [vmem:[%s4 + $0x20] sm:$0xf]
      %v1274 = vld [vmem:[%s4 + $0x24] sm:$0xf]
      %v1275 = vld [vmem:[%s4 + $0x28] sm:$0xf]
      %v1276 = vld [vmem:[%s4 + $0x2c] sm:$0xf]
      %v1277 = vld [vmem:[%s4 + $0x30] sm:$0xf]
      %v1278 = vld [vmem:[%s4 + $0x34] sm:$0xf]
      %v1279 = vld [vmem:[%s4 + $0x38] sm:$0xf]
      %v1280 = vld [vmem:[%s4 + $0x3c] sm:$0xf]
      %v1281 = vld [vmem:[%s4 + $0x40] sm:$0xf]
      %v1282 = vld [vmem:[%s4 + $0x44] sm:$0xf]
      %v1283 = vld [vmem:[%s4 + $0x48] sm:$0xf]
      %v1284 = vld [vmem:[%s4 + $0x4c] sm:$0xf]
      %v1285 = vld [vmem:[%s4 + $0x50] sm:$0xf]
      %v1286 = vld [vmem:[%s4 + $0x54] sm:$0xf]
      %v1287 = vld [vmem:[%s4 + $0x58] sm:$0xf]
      %v1288 = vld [vmem:[%s4 + $0x5c] sm:$0xf]
      %v1289 = vld [vmem:[%s4 + $0x60] sm:$0xf]
      %v1290 = vld [vmem:[%s4 + $0x64] sm:$0xf]
      %v1291 = vld [vmem:[%s4 + $0x68] sm:$0xf]
      %v1292 = vld [vmem:[%s4 + $0x6c] sm:$0xf]
      %v1293 = vld [vmem:[%s4 + $0x70] sm:$0xf]
      %v1294 = vld [vmem:[%s4 + $0x74] sm:$0xf]
      %v1295 = vld [vmem:[%s4 + $0x78] sm:$0xf]
      %v1296 = vld [vmem:[%s4 + $0x7c] sm:$0xf]
      %v1297 = vld [vmem:[%s4 + $0x80] sm:$0xf]
      %v1298 = vld [vmem:[%s4 + $0x84] sm:$0xf]
      %v1299 = vld [vmem:[%s4 + $0x88] sm:$0xf]
      %v1300 = vld [vmem:[%s4 + $0x8c] sm:$0xf]
      %v1301 = vld [vmem:[%s4 + $0x90] sm:$0xf]
      %v1302 = vld [vmem:[%s4 + $0x94] sm:$0xf]
      %v1303 = vld [vmem:[%s4 + $0x98] sm:$0xf]
      %v1304 = vld [vmem:[%s4 + $0x9c] sm:$0xf]
      %v1305 = vld [vmem:[%s4 + $0xa0] sm:$0xf]
      %v1306 = vld [vmem:[%s4 + $0xa4] sm:$0xf]
      %v1307 = vld [vmem:[%s4 + $0xa8] sm:$0xf]
      %v1308 = vld [vmem:[%s4 + $0xac] sm:$0xf]
      %v1309 = vld [vmem:[%s4 + $0xb0] sm:$0xf]
      %v1310 = vld [vmem:[%s4 + $0xb4] sm:$0xf]
      %v1311 = vld [vmem:[%s4 + $0xb8] sm:$0xf]
      %v1312 = vld [vmem:[%s4 + $0xbc] sm:$0xf]
      %v1313 = vld [vmem:[%s4 + $0xc0] sm:$0xf]
      %v1314 = vld [vmem:[%s4 + $0xc4] sm:$0xf]
      %v1315 = vld [vmem:[%s4 + $0xc8] sm:$0xf]
      %v1316 = vld [vmem:[%s4 + $0xcc] sm:$0xf]
      %v1317 = vld [vmem:[%s4 + $0xd0] sm:$0xf]
      %v1318 = vld [vmem:[%s4 + $0xd4] sm:$0xf]
      %v1319 = vld [vmem:[%s4 + $0xd8] sm:$0xf]
      %v1320 = vld [vmem:[%s4 + $0xdc] sm:$0xf]
      %v1321 = vld [vmem:[%s4 + $0xe0] sm:$0xf]
      %v1322 = vld [vmem:[%s4 + $0xe4] sm:$0xf]
      %v1323 = vld [vmem:[%s4 + $0xe8] sm:$0xf]
      %v1324 = vld [vmem:[%s4 + $0xec] sm:$0xf]
      %v1325 = vld [vmem:[%s4 + $0xf0] sm:$0xf]
      %v1326 = vld [vmem:[%s4 + $0xf4] sm:$0xf]
      %v1327 = vld [vmem:[%s4 + $0xf8] sm:$0xf]
      %v1328 = vld [vmem:[%s4 + $0xfc] sm:$0xf]
      %v1329 = vld [vmem:[%s4 + $0x100] sm:$0xf]
      %v1330 = vld [vmem:[%s4 + $0x104] sm:$0xf]
      %v1331 = vld [vmem:[%s4 + $0x108] sm:$0xf]
      %v1332 = vld [vmem:[%s4 + $0x10c] sm:$0xf]
      %v1333 = vld [vmem:[%s4 + $0x110] sm:$0xf]
      %v1334 = vld [vmem:[%s4 + $0x114] sm:$0xf]
      %v1335 = vld [vmem:[%s4 + $0x118] sm:$0xf]
      %v1336 = vld [vmem:[%s4 + $0x11c] sm:$0xf]
      %v1337 = vld [vmem:[%s4 + $0x120] sm:$0xf]
      %v1338 = vld [vmem:[%s4 + $0x124] sm:$0xf]
      %v1339 = vld [vmem:[%s4 + $0x128] sm:$0xf]
      %v1340 = vld [vmem:[%s4 + $0x12c] sm:$0xf]
      %v1341 = vld [vmem:[%s4 + $0x130] sm:$0xf]
      %v1342 = vld [vmem:[%s4 + $0x134] sm:$0xf]
      %v1343 = vld [vmem:[%s4 + $0x138] sm:$0xf]
      %v1344 = vld [vmem:[%s4 + $0x13c] sm:$0xf]
      %v1345 = vld [vmem:[%s4 + $0x140] sm:$0xf]
      %v1346 = vld [vmem:[%s4 + $0x144] sm:$0xf]
      %v1347 = vld [vmem:[%s4 + $0x148] sm:$0xf]
      %v1348 = vld [vmem:[%s4 + $0x14c] sm:$0xf]
      %v1349 = vld [vmem:[%s4 + $0x150] sm:$0xf]
      %v1350 = vld [vmem:[%s4 + $0x154] sm:$0xf]
      %v1351 = vld [vmem:[%s4 + $0x158] sm:$0xf]
      %v1352 = vld [vmem:[%s4 + $0x15c] sm:$0xf]
      %v1353 = vld [vmem:[%s4 + $0x160] sm:$0xf]
      %v1354 = vld [vmem:[%s4 + $0x164] sm:$0xf]
      %v1355 = vld [vmem:[%s4 + $0x168] sm:$0xf]
      %v1356 = vld [vmem:[%s4 + $0x16c] sm:$0xf]
      %v1357 = vld [vmem:[%s4 + $0x170] sm:$0xf]
      %v1358 = vld [vmem:[%s4 + $0x174] sm:$0xf]
      %v1359 = vld [vmem:[%s4 + $0x178] sm:$0xf]
      %v1360 = vld [vmem:[%s4 + $0x17c] sm:$0xf]
      %v1361 = vld [vmem:[%s5] sm:$0x1]
      %v1363 = vlaneseq
      %v1364 = vshrl.u32 %v1363, 7
      %v1365 = vsub.s32 0, %v1364
      %v1366 = vrot.slane %v1361, %v1365
      %v1464 = vunpack.c.l.b16 %v1265
      %v1465 = vunpack.c.l.b16 %v1266
      %v1466 = vunpack.c.l.b16 %v1267
      %v1467 = vunpack.c.l.b16 %v1268
      %v1468 = vunpack.c.l.b16 %v1269
      %v1469 = vunpack.c.l.b16 %v1270
      %v1470 = vunpack.c.l.b16 %v1271
      %v1471 = vunpack.c.l.b16 %v1272
      %v1472 = vunpack.c.l.b16 %v1273
      %v1473 = vunpack.c.l.b16 %v1274
      %v1474 = vunpack.c.l.b16 %v1275
      %v1475 = vunpack.c.l.b16 %v1276
      %v1476 = vunpack.c.l.b16 %v1277
      %v1477 = vunpack.c.l.b16 %v1278
      %v1478 = vunpack.c.l.b16 %v1279
      %v1479 = vunpack.c.l.b16 %v1280
      %v1480 = vunpack.c.l.b16 %v1281
      %v1481 = vunpack.c.l.b16 %v1282
      %v1482 = vunpack.c.l.b16 %v1283
      %v1483 = vunpack.c.l.b16 %v1284
      %v1484 = vunpack.c.l.b16 %v1285
      %v1485 = vunpack.c.l.b16 %v1286
      %v1486 = vunpack.c.l.b16 %v1287
      %v1487 = vunpack.c.l.b16 %v1288
      %v1488 = vunpack.c.l.b16 %v1289
      %v1489 = vunpack.c.l.b16 %v1290
      %v1490 = vunpack.c.l.b16 %v1291
      %v1491 = vunpack.c.l.b16 %v1292
      %v1492 = vunpack.c.l.b16 %v1293
      %v1493 = vunpack.c.l.b16 %v1294
      %v1494 = vunpack.c.l.b16 %v1295
      %v1495 = vunpack.c.l.b16 %v1296
      %v1496 = vunpack.c.l.b16 %v1297
      %v1497 = vunpack.c.l.b16 %v1298
      %v1498 = vunpack.c.l.b16 %v1299
      %v1499 = vunpack.c.l.b16 %v1300
      %v1500 = vunpack.c.l.b16 %v1301
      %v1501 = vunpack.c.l.b16 %v1302
      %v1502 = vunpack.c.l.b16 %v1303
      %v1503 = vunpack.c.l.b16 %v1304
      %v1504 = vunpack.c.l.b16 %v1305
      %v1505 = vunpack.c.l.b16 %v1306
      %v1506 = vunpack.c.l.b16 %v1307
      %v1507 = vunpack.c.l.b16 %v1308
      %v1508 = vunpack.c.l.b16 %v1309
      %v1509 = vunpack.c.l.b16 %v1310
      %v1510 = vunpack.c.l.b16 %v1311
      %v1511 = vunpack.c.l.b16 %v1312
      %v1512 = vunpack.c.l.b16 %v1313
      %v1513 = vunpack.c.l.b16 %v1314
      %v1514 = vunpack.c.l.b16 %v1315
      %v1515 = vunpack.c.l.b16 %v1316
      %v1516 = vunpack.c.l.b16 %v1317
      %v1517 = vunpack.c.l.b16 %v1318
      %v1518 = vunpack.c.l.b16 %v1319
      %v1519 = vunpack.c.l.b16 %v1320
      %v1520 = vunpack.c.l.b16 %v1321
      %v1521 = vunpack.c.l.b16 %v1322
      %v1522 = vunpack.c.l.b16 %v1323
      %v1523 = vunpack.c.l.b16 %v1324
      %v1524 = vunpack.c.l.b16 %v1325
      %v1525 = vunpack.c.l.b16 %v1326
      %v1526 = vunpack.c.l.b16 %v1327
      %v1527 = vunpack.c.l.b16 %v1328
      %v1528 = vunpack.c.l.b16 %v1329
      %v1529 = vunpack.c.l.b16 %v1330
      %v1530 = vunpack.c.l.b16 %v1331
      %v1531 = vunpack.c.l.b16 %v1332
      %v1532 = vunpack.c.l.b16 %v1333
      %v1533 = vunpack.c.l.b16 %v1334
      %v1534 = vunpack.c.l.b16 %v1335
      %v1535 = vunpack.c.l.b16 %v1336
      %v1536 = vunpack.c.l.b16 %v1337
      %v1537 = vunpack.c.l.b16 %v1338
      %v1538 = vunpack.c.l.b16 %v1339
      %v1539 = vunpack.c.l.b16 %v1340
      %v1540 = vunpack.c.l.b16 %v1341
      %v1541 = vunpack.c.l.b16 %v1342
      %v1542 = vunpack.c.l.b16 %v1343
      %v1543 = vunpack.c.l.b16 %v1344
      %v1544 = vunpack.c.l.b16 %v1345
      %v1545 = vunpack.c.l.b16 %v1346
      %v1546 = vunpack.c.l.b16 %v1347
      %v1547 = vunpack.c.l.b16 %v1348
      %v1548 = vunpack.c.l.b16 %v1349
      %v1549 = vunpack.c.l.b16 %v1350
      %v1550 = vunpack.c.l.b16 %v1351
      %v1551 = vunpack.c.l.b16 %v1352
      %v1552 = vunpack.c.l.b16 %v1353
      %v1553 = vunpack.c.l.b16 %v1354
      %v1554 = vunpack.c.l.b16 %v1355
      %v1555 = vunpack.c.l.b16 %v1356
      %v1556 = vunpack.c.l.b16 %v1357
      %v1557 = vunpack.c.l.b16 %v1358
      %v1558 = vunpack.c.l.b16 %v1359
      %v1559 = vunpack.c.l.b16 %v1360
      %v1560 = vpack.c.b16 %v1465, %v1464
      %v1561 = vpack.c.b16 %v1467, %v1466
      %v1562 = vpack.c.b16 %v1469, %v1468
      %v1563 = vpack.c.b16 %v1471, %v1470
      %v1564 = vpack.c.b16 %v1473, %v1472
      %v1565 = vpack.c.b16 %v1475, %v1474
      %v1566 = vpack.c.b16 %v1477, %v1476
      %v1567 = vpack.c.b16 %v1479, %v1478
      %v1568 = vpack.c.b16 %v1481, %v1480
      %v1569 = vpack.c.b16 %v1483, %v1482
      %v1570 = vpack.c.b16 %v1485, %v1484
      %v1571 = vpack.c.b16 %v1487, %v1486
      %v1572 = vpack.c.b16 %v1489, %v1488
      %v1573 = vpack.c.b16 %v1491, %v1490
      %v1574 = vpack.c.b16 %v1493, %v1492
      %v1575 = vpack.c.b16 %v1495, %v1494
      %v1576 = vpack.c.b16 %v1497, %v1496
      %v1577 = vpack.c.b16 %v1499, %v1498
      %v1578 = vpack.c.b16 %v1501, %v1500
      %v1579 = vpack.c.b16 %v1503, %v1502
      %v1580 = vpack.c.b16 %v1505, %v1504
      %v1581 = vpack.c.b16 %v1507, %v1506
      %v1582 = vpack.c.b16 %v1509, %v1508
      %v1583 = vpack.c.b16 %v1511, %v1510
      %v1584 = vpack.c.b16 %v1513, %v1512
      %v1585 = vpack.c.b16 %v1515, %v1514
      %v1586 = vpack.c.b16 %v1517, %v1516
      %v1587 = vpack.c.b16 %v1519, %v1518
      %v1588 = vpack.c.b16 %v1521, %v1520
      %v1589 = vpack.c.b16 %v1523, %v1522
      %v1590 = vpack.c.b16 %v1525, %v1524
      %v1591 = vpack.c.b16 %v1527, %v1526
      %v1592 = vpack.c.b16 %v1529, %v1528
      %v1593 = vpack.c.b16 %v1531, %v1530
      %v1594 = vpack.c.b16 %v1533, %v1532
      %v1595 = vpack.c.b16 %v1535, %v1534
      %v1596 = vpack.c.b16 %v1537, %v1536
      %v1597 = vpack.c.b16 %v1539, %v1538
      %v1598 = vpack.c.b16 %v1541, %v1540
      %v1599 = vpack.c.b16 %v1543, %v1542
      %v1600 = vpack.c.b16 %v1545, %v1544
      %v1601 = vpack.c.b16 %v1547, %v1546
      %v1602 = vpack.c.b16 %v1549, %v1548
      %v1603 = vpack.c.b16 %v1551, %v1550
      %v1604 = vpack.c.b16 %v1553, %v1552
      %v1605 = vpack.c.b16 %v1555, %v1554
      %v1606 = vpack.c.b16 %v1557, %v1556
      %v1607 = vpack.c.b16 %v1559, %v1558
      %1656 = vmatprep.subr.bf16.mxu0 0
      %1657 = vmatpush1.bf16.msra.mxu0 %v1560
      %1658 = vmatprep.subr.bf16.mxu0 0
      %1659 = vmatpush1.bf16.msra.mxu0 %v1561
      %1660 = vmatprep.subr.bf16.mxu0 0
      %1661 = vmatpush1.bf16.msra.mxu0 %v1562
      %1662 = vmatprep.subr.bf16.mxu0 0
      %1663 = vmatpush1.bf16.msra.mxu0 %v1563
      %1664 = vmatprep.subr.bf16.mxu0 0
      %1665 = vmatpush1.bf16.msra.mxu0 %v1564
      %1666 = vmatprep.subr.bf16.mxu0 0
      %1667 = vmatpush1.bf16.msra.mxu0 %v1565
      %1668 = vmatprep.subr.bf16.mxu0 0
      %1669 = vmatpush1.bf16.msra.mxu0 %v1566
      %1670 = vmatprep.subr.bf16.mxu0 0
      %1671 = vmatpush1.bf16.msra.mxu0 %v1567
      %1672 = vmatprep.subr.bf16.mxu0 0
      %1673 = vmatpush1.bf16.msra.mxu0 %v1568
      %1674 = vmatprep.subr.bf16.mxu0 0
      %1675 = vmatpush1.bf16.msra.mxu0 %v1569
      %1676 = vmatprep.subr.bf16.mxu0 0
      %1677 = vmatpush1.bf16.msra.mxu0 %v1570
      %1678 = vmatprep.subr.bf16.mxu0 0
      %1679 = vmatpush1.bf16.msra.mxu0 %v1571
      %1680 = vmatprep.subr.bf16.mxu0 0
      %1681 = vmatpush1.bf16.msra.mxu0 %v1572
      %1682 = vmatprep.subr.bf16.mxu0 0
      %1683 = vmatpush1.bf16.msra.mxu0 %v1573
      %1684 = vmatprep.subr.bf16.mxu0 0
      %1685 = vmatpush1.bf16.msra.mxu0 %v1574
      %1686 = vmatprep.subr.bf16.mxu0 0
      %1687 = vmatpush1.bf16.msra.mxu0 %v1575
      %1688 = vmatprep.mubr.bf16.mxu0 %v1218
      %1689 = vmatmul.mubr.bf16.gmra.mrb[0].mxu0 %v1217
      %v1690 = vpop.f32.mrb[0].mxu0
      %v1691 = vadd.f32 %v1366, %v1690
      %v1692 = vpop.f32.mrb[0].mxu0
      %v1693 = vpop.f32.mrb[0].mxu0
      %v1694 = vadd.f32 %v1366, %v1693
      %v1695 = vpop.f32.mrb[0].mxu0
      %1696 = vmatprep.mubr.bf16.mxu0 %v1221
      %1697 = vmatmul.mubr.bf16.gmra.mrb[0].mxu0 %v1220
      %v1698 = vpop.f32.mrb[0].mxu0
      %v1699 = vadd.f32 %v1366, %v1698
      %v1700 = vpop.f32.mrb[0].mxu0
      %v1701 = vpop.f32.mrb[0].mxu0
      %v1702 = vadd.f32 %v1366, %v1701
      %v1703 = vpop.f32.mrb[0].mxu0
      %1704 = vmatprep.mubr.bf16.mxu0 %v1224
      %1705 = vmatmul.mubr.bf16.gmra.mrb[0].mxu0 %v1223
      %v1706 = vpop.f32.mrb[0].mxu0
      %v1707 = vadd.f32 %v1366, %v1706
      %v1708 = vpop.f32.mrb[0].mxu0
      %v1709 = vpop.f32.mrb[0].mxu0
      %v1710 = vadd.f32 %v1366, %v1709
      %v1711 = vpop.f32.mrb[0].mxu0
      %1712 = vmatprep.mubr.bf16.mxu0 %v1227
      %1713 = vmatmul.mubr.bf16.gmra.mrb[0].mxu0 %v1226
      %v1714 = vpop.f32.mrb[0].mxu0
      %v1715 = vadd.f32 %v1366, %v1714
      %v1716 = vpop.f32.mrb[0].mxu0
      %v1717 = vpop.f32.mrb[0].mxu0
      %v1718 = vadd.f32 %v1366, %v1717
      %v1719 = vpop.f32.mrb[0].mxu0
      %1720 = vmatprep.mubr.bf16.mxu0 %v1230
      %1721 = vmatmul.mubr.bf16.gmra.mrb[0].mxu0 %v1229
      %v1722 = vpop.f32.mrb[0].mxu0
      %v1723 = vadd.f32 %v1366, %v1722
      %v1724 = vpop.f32.mrb[0].mxu0
      %v1725 = vpop.f32.mrb[0].mxu0
      %v1726 = vadd.f32 %v1366, %v1725
      %v1727 = vpop.f32.mrb[0].mxu0
      %1728 = vmatprep.mubr.bf16.mxu0 %v1233
      %1729 = vmatmul.mubr.bf16.gmra.mrb[0].mxu0 %v1232
      %v1730 = vpop.f32.mrb[0].mxu0
      %v1731 = vadd.f32 %v1366, %v1730
      %v1732 = vpop.f32.mrb[0].mxu0
      %v1733 = vpop.f32.mrb[0].mxu0
      %v1734 = vadd.f32 %v1366, %v1733
      %v1735 = vpop.f32.mrb[0].mxu0
      %1736 = vmatprep.mubr.bf16.mxu0 %v1236
      %1737 = vmatmul.mubr.bf16.gmra.mrb[0].mxu0 %v1235
      %v1738 = vpop.f32.mrb[0].mxu0
      %v1739 = vadd.f32 %v1366, %v1738
      %v1740 = vpop.f32.mrb[0].mxu0
      %v1741 = vpop.f32.mrb[0].mxu0
      %v1742 = vadd.f32 %v1366, %v1741
      %v1743 = vpop.f32.mrb[0].mxu0
      %1744 = vmatprep.mubr.bf16.mxu0 %v1239
      %1745 = vmatmul.mubr.bf16.gmra.mrb[0].mxu0 %v1238
      %v1746 = vpop.f32.mrb[0].mxu0
      %v1747 = vadd.f32 %v1366, %v1746
      %v1748 = vpop.f32.mrb[0].mxu0
      %v1749 = vpop.f32.mrb[0].mxu0
      %v1750 = vadd.f32 %v1366, %v1749
      %v1751 = vpop.f32.mrb[0].mxu0
      %1752 = vdwg.mxu0
      %1753 = vmatprep.subr.bf16.mxu0 0
      %1754 = vmatpush1.bf16.msra.mxu0 %v1576
      %1755 = vmatprep.subr.bf16.mxu0 0
      %1756 = vmatpush1.bf16.msra.mxu0 %v1577
      %1757 = vmatprep.subr.bf16.mxu0 0
      %1758 = vmatpush1.bf16.msra.mxu0 %v1578
      %1759 = vmatprep.subr.bf16.mxu0 0
      %1760 = vmatpush1.bf16.msra.mxu0 %v1579
      %1761 = vmatprep.subr.bf16.mxu0 0
      %1762 = vmatpush1.bf16.msra.mxu0 %v1580
      %1763 = vmatprep.subr.bf16.mxu0 0
      %1764 = vmatpush1.bf16.msra.mxu0 %v1581
      %1765 = vmatprep.subr.bf16.mxu0 0
      %1766 = vmatpush1.bf16.msra.mxu0 %v1582
      %1767 = vmatprep.subr.bf16.mxu0 0
      %1768 = vmatpush1.bf16.msra.mxu0 %v1583
      %1769 = vmatprep.subr.bf16.mxu0 0
      %1770 = vmatpush1.bf16.msra.mxu0 %v1584
      %1771 = vmatprep.subr.bf16.mxu0 0
      %1772 = vmatpush1.bf16.msra.mxu0 %v1585
      %1773 = vmatprep.subr.bf16.mxu0 0
      %1774 = vmatpush1.bf16.msra.mxu0 %v1586
      %1775 = vmatprep.subr.bf16.mxu0 0
      %1776 = vmatpush1.bf16.msra.mxu0 %v1587
      %1777 = vmatprep.subr.bf16.mxu0 0
      %1778 = vmatpush1.bf16.msra.mxu0 %v1588
      %1779 = vmatprep.subr.bf16.mxu0 0
      %1780 = vmatpush1.bf16.msra.mxu0 %v1589
      %1781 = vmatprep.subr.bf16.mxu0 0
      %1782 = vmatpush1.bf16.msra.mxu0 %v1590
      %1783 = vmatprep.subr.bf16.mxu0 0
      %1784 = vmatpush1.bf16.msra.mxu0 %v1591
      %1785 = vmatprep.mubr.bf16.mxu0 %v1113
      %1786 = vmatmul.mubr.bf16.gmra.mrb[0].mxu0 %v1219
      %v1787 = vpop.f32.mrb[0].mxu0
      %v1788 = vadd.f32 %v1691, %v1787
      %v1789 = vpop.f32.mrb[0].mxu0
      %v1790 = vpop.f32.mrb[0].mxu0
      %v1791 = vadd.f32 %v1694, %v1790
      %v1792 = vpop.f32.mrb[0].mxu0
      %1793 = vmatprep.mubr.bf16.mxu0 %v1116
      %1794 = vmatmul.mubr.bf16.gmra.mrb[0].mxu0 %v1222
      %v1795 = vpop.f32.mrb[0].mxu0
      %v1796 = vadd.f32 %v1699, %v1795
      %v1797 = vpop.f32.mrb[0].mxu0
      %v1798 = vpop.f32.mrb[0].mxu0
      %v1799 = vadd.f32 %v1702, %v1798
      %v1800 = vpop.f32.mrb[0].mxu0
      %1801 = vmatprep.mubr.bf16.mxu0 %v1119
      %1802 = vmatmul.mubr.bf16.gmra.mrb[0].mxu0 %v1225
      %v1803 = vpop.f32.mrb[0].mxu0
      %v1804 = vadd.f32 %v1707, %v1803
      %v1805 = vpop.f32.mrb[0].mxu0
      %v1806 = vpop.f32.mrb[0].mxu0
      %v1807 = vadd.f32 %v1710, %v1806
      %v1808 = vpop.f32.mrb[0].mxu0
      %1809 = vmatprep.mubr.bf16.mxu0 %v1122
      %1810 = vmatmul.mubr.bf16.gmra.mrb[0].mxu0 %v1228
      %v1811 = vpop.f32.mrb[0].mxu0
      %v1812 = vadd.f32 %v1715, %v1811
      %v1813 = vpop.f32.mrb[0].mxu0
      %v1814 = vpop.f32.mrb[0].mxu0
      %v1815 = vadd.f32 %v1718, %v1814
      %v1816 = vpop.f32.mrb[0].mxu0
      %1817 = vmatprep.mubr.bf16.mxu0 %v1125
      %1818 = vmatmul.mubr.bf16.gmra.mrb[0].mxu0 %v1231
      %v1819 = vpop.f32.mrb[0].mxu0
      %v1820 = vadd.f32 %v1723, %v1819
      %v1821 = vpop.f32.mrb[0].mxu0
      %v1822 = vpop.f32.mrb[0].mxu0
      %v1823 = vadd.f32 %v1726, %v1822
      %v1824 = vpop.f32.mrb[0].mxu0
      %1825 = vmatprep.mubr.bf16.mxu0 %v1128
      %1826 = vmatmul.mubr.bf16.gmra.mrb[0].mxu0 %v1234
      %v1827 = vpop.f32.mrb[0].mxu0
      %v1828 = vadd.f32 %v1731, %v1827
      %v1829 = vpop.f32.mrb[0].mxu0
      %v1830 = vpop.f32.mrb[0].mxu0
      %v1831 = vadd.f32 %v1734, %v1830
      %v1832 = vpop.f32.mrb[0].mxu0
      %1833 = vmatprep.mubr.bf16.mxu0 %v1131
      %1834 = vmatmul.mubr.bf16.gmra.mrb[0].mxu0 %v1237
      %v1835 = vpop.f32.mrb[0].mxu0
      %v1836 = vadd.f32 %v1739, %v1835
      %v1837 = vpop.f32.mrb[0].mxu0
      %v1838 = vpop.f32.mrb[0].mxu0
      %v1839 = vadd.f32 %v1742, %v1838
      %v1840 = vpop.f32.mrb[0].mxu0
      %1841 = vmatprep.mubr.bf16.mxu0 %v1134
      %1842 = vmatmul.mubr.bf16.gmra.mrb[0].mxu0 %v1240
      %v1843 = vpop.f32.mrb[0].mxu0
      %v1844 = vadd.f32 %v1747, %v1843
      %v1845 = vpop.f32.mrb[0].mxu0
      %v1846 = vpop.f32.mrb[0].mxu0
      %v1847 = vadd.f32 %v1750, %v1846
      %v1848 = vpop.f32.mrb[0].mxu0
      %1849 = vdwg.mxu0
      %1850 = vmatprep.subr.bf16.mxu0 0
      %1851 = vmatpush1.bf16.msra.mxu0 %v1592
      %1852 = vmatprep.subr.bf16.mxu0 0
      %1853 = vmatpush1.bf16.msra.mxu0 %v1593
      %1854 = vmatprep.subr.bf16.mxu0 0
      %1855 = vmatpush1.bf16.msra.mxu0 %v1594
      %1856 = vmatprep.subr.bf16.mxu0 0
      %1857 = vmatpush1.bf16.msra.mxu0 %v1595
      %1858 = vmatprep.subr.bf16.mxu0 0
      %1859 = vmatpush1.bf16.msra.mxu0 %v1596
      %1860 = vmatprep.subr.bf16.mxu0 0
      %1861 = vmatpush1.bf16.msra.mxu0 %v1597
      %1862 = vmatprep.subr.bf16.mxu0 0
      %1863 = vmatpush1.bf16.msra.mxu0 %v1598
      %1864 = vmatprep.subr.bf16.mxu0 0
      %1865 = vmatpush1.bf16.msra.mxu0 %v1599
      %1866 = vmatprep.subr.bf16.mxu0 0
      %1867 = vmatpush1.bf16.msra.mxu0 %v1600
      %1868 = vmatprep.subr.bf16.mxu0 0
      %1869 = vmatpush1.bf16.msra.mxu0 %v1601
      %1870 = vmatprep.subr.bf16.mxu0 0
      %1871 = vmatpush1.bf16.msra.mxu0 %v1602
      %1872 = vmatprep.subr.bf16.mxu0 0
      %1873 = vmatpush1.bf16.msra.mxu0 %v1603
      %1874 = vmatprep.subr.bf16.mxu0 0
      %1875 = vmatpush1.bf16.msra.mxu0 %v1604
      %1876 = vmatprep.subr.bf16.mxu0 0
      %1877 = vmatpush1.bf16.msra.mxu0 %v1605
      %1878 = vmatprep.subr.bf16.mxu0 0
      %1879 = vmatpush1.bf16.msra.mxu0 %v1606
      %1880 = vmatprep.subr.bf16.mxu0 0
      %1881 = vmatpush1.bf16.msra.mxu0 %v1607
      %1882 = vmatprep.mubr.bf16.mxu0 %v1115
      %1883 = vmatmul.mubr.bf16.gmra.mrb[0].mxu0 %v1114
      %v1884 = vpop.f32.mrb[0].mxu0
      %v1885 = vadd.f32 %v1788, %v1884
      %v1886 = vpop.f32.mrb[0].mxu0
      %v1887 = vpop.f32.mrb[0].mxu0
      %v1888 = vadd.f32 %v1791, %v1887
      %v1889 = vpop.f32.mrb[0].mxu0
      %1890 = vmatprep.mubr.bf16.mxu0 %v1118
      %1891 = vmatmul.mubr.bf16.gmra.mrb[0].mxu0 %v1117
      %v1892 = vpop.f32.mrb[0].mxu0
      %v1893 = vadd.f32 %v1796, %v1892
      %v1894 = vpop.f32.mrb[0].mxu0
      %v1895 = vpop.f32.mrb[0].mxu0
      %v1896 = vadd.f32 %v1799, %v1895
      %v1897 = vpop.f32.mrb[0].mxu0
      %1898 = vmatprep.mubr.bf16.mxu0 %v1121
      %1899 = vmatmul.mubr.bf16.gmra.mrb[0].mxu0 %v1120
      %v1900 = vpop.f32.mrb[0].mxu0
      %v1901 = vadd.f32 %v1804, %v1900
      %v1902 = vpop.f32.mrb[0].mxu0
      %v1903 = vpop.f32.mrb[0].mxu0
      %v1904 = vadd.f32 %v1807, %v1903
      %v1905 = vpop.f32.mrb[0].mxu0
      %1906 = vmatprep.mubr.bf16.mxu0 %v1124
      %1907 = vmatmul.mubr.bf16.gmra.mrb[0].mxu0 %v1123
      %v1908 = vpop.f32.mrb[0].mxu0
      %v1909 = vadd.f32 %v1812, %v1908
      %v1910 = vpop.f32.mrb[0].mxu0
      %v1911 = vpop.f32.mrb[0].mxu0
      %v1912 = vadd.f32 %v1815, %v1911
      %v1913 = vpop.f32.mrb[0].mxu0
      %1914 = vmatprep.mubr.bf16.mxu0 %v1127
      %1915 = vmatmul.mubr.bf16.gmra.mrb[0].mxu0 %v1126
      %v1916 = vpop.f32.mrb[0].mxu0
      %v1917 = vadd.f32 %v1820, %v1916
      %v1918 = vpop.f32.mrb[0].mxu0
      %v1919 = vpop.f32.mrb[0].mxu0
      %v1920 = vadd.f32 %v1823, %v1919
      %v1921 = vpop.f32.mrb[0].mxu0
      %1922 = vmatprep.mubr.bf16.mxu0 %v1130
      %1923 = vmatmul.mubr.bf16.gmra.mrb[0].mxu0 %v1129
      %v1924 = vpop.f32.mrb[0].mxu0
      %v1925 = vadd.f32 %v1828, %v1924
      %v1926 = vpop.f32.mrb[0].mxu0
      %v1927 = vpop.f32.mrb[0].mxu0
      %v1928 = vadd.f32 %v1831, %v1927
      %v1929 = vpop.f32.mrb[0].mxu0
      %1930 = vmatprep.mubr.bf16.mxu0 %v1133
      %1931 = vmatmul.mubr.bf16.gmra.mrb[0].mxu0 %v1132
      %v1932 = vpop.f32.mrb[0].mxu0
      %v1933 = vadd.f32 %v1836, %v1932
      %v1934 = vpop.f32.mrb[0].mxu0
      %v1935 = vpop.f32.mrb[0].mxu0
      %v1936 = vadd.f32 %v1839, %v1935
      %v1937 = vpop.f32.mrb[0].mxu0
      %1938 = vmatprep.mubr.bf16.mxu0 %v1136
      %1939 = vmatmul.mubr.bf16.gmra.mrb[0].mxu0 %v1135
      %v1940 = vpop.f32.mrb[0].mxu0
      %v1941 = vadd.f32 %v1844, %v1940
      %v1942 = vpop.f32.mrb[0].mxu0
      %v1943 = vpop.f32.mrb[0].mxu0
      %v1944 = vadd.f32 %v1847, %v1943
      %v1945 = vpop.f32.mrb[0].mxu0
      %1946 = vdwg.mxu0
      %v1947 = vmax.f32 %v1885, 0.0
      %v1948 = vmax.f32 %v1888, 0.0
      %v1949 = vmax.f32 %v1893, 0.0
      %v1950 = vmax.f32 %v1896, 0.0
      %v1951 = vmax.f32 %v1901, 0.0
      %v1952 = vmax.f32 %v1904, 0.0
      %v1953 = vmax.f32 %v1909, 0.0
      %v1954 = vmax.f32 %v1912, 0.0
      %v1955 = vmax.f32 %v1917, 0.0
      %v1956 = vmax.f32 %v1920, 0.0
      %v1957 = vmax.f32 %v1925, 0.0
      %v1958 = vmax.f32 %v1928, 0.0
      %v1959 = vmax.f32 %v1933, 0.0
      %v1960 = vmax.f32 %v1936, 0.0
      %v1961 = vmax.f32 %v1941, 0.0
      %v1962 = vmax.f32 %v1944, 0.0
      %v1963 = vld [vmem:[%s433] sm:$0xf]
      %v1964 = vld [vmem:[%s433 + $0x4] sm:$0xf]
      %v1965 = vld [vmem:[%s433 + $0x8] sm:$0xf]
      %v1966 = vld [vmem:[%s433 + $0xc] sm:$0xf]
      %v1967 = vld [vmem:[%s433 + $0x10] sm:$0xf]
      %v1968 = vld [vmem:[%s433 + $0x14] sm:$0xf]
      %v1969 = vld [vmem:[%s433 + $0x18] sm:$0xf]
      %v1970 = vld [vmem:[%s433 + $0x1c] sm:$0xf]
      %v1971 = vld [vmem:[%s433 + $0x20] sm:$0xf]
      %v1972 = vld [vmem:[%s433 + $0x24] sm:$0xf]
      %v1973 = vld [vmem:[%s433 + $0x28] sm:$0xf]
      %v1974 = vld [vmem:[%s433 + $0x2c] sm:$0xf]
      %v1975 = vld [vmem:[%s433 + $0x30] sm:$0xf]
      %v1976 = vld [vmem:[%s433 + $0x34] sm:$0xf]
      %v1977 = vld [vmem:[%s433 + $0x38] sm:$0xf]
      %v1978 = vld [vmem:[%s433 + $0x3c] sm:$0xf]
      %v1979 = vld [vmem:[%s6] sm:$0xf]
      %v1980 = vld [vmem:[%s6 + $0x4] sm:$0xf]
      %v1981 = vld [vmem:[%s6 + $0x8] sm:$0xf]
      %v1982 = vld [vmem:[%s6 + $0xc] sm:$0xf]
      %v1983 = vld [vmem:[%s6 + $0x10] sm:$0xf]
      %v1984 = vld [vmem:[%s6 + $0x14] sm:$0xf]
      %v1985 = vld [vmem:[%s6 + $0x18] sm:$0xf]
      %v1986 = vld [vmem:[%s6 + $0x1c] sm:$0xf]
      %v1987 = vld [vmem:[%s6 + $0x20] sm:$0xf]
      %v1988 = vld [vmem:[%s6 + $0x24] sm:$0xf]
      %v1989 = vld [vmem:[%s6 + $0x28] sm:$0xf]
      %v1990 = vld [vmem:[%s6 + $0x2c] sm:$0xf]
      %v1991 = vld [vmem:[%s6 + $0x30] sm:$0xf]
      %v1992 = vld [vmem:[%s6 + $0x34] sm:$0xf]
      %v1993 = vld [vmem:[%s6 + $0x38] sm:$0xf]
      %v1994 = vld [vmem:[%s6 + $0x3c] sm:$0xf]
      %v1995 = vld [vmem:[%s7] sm:$0x1]
      %v1997 = vlaneseq
      %v1998 = vshrl.u32 %v1997, 7
      %v1999 = vsub.s32 0, %v1998
      %v2000 = vrot.slane %v1995, %v1999
      %v2018 = vunpack.c.l.b16 %v1963
      %v2019 = vunpack.c.l.b16 %v1964
      %v2020 = vunpack.c.l.b16 %v1965
      %v2021 = vunpack.c.l.b16 %v1966
      %v2022 = vunpack.c.l.b16 %v1967
      %v2023 = vunpack.c.l.b16 %v1968
      %v2024 = vunpack.c.l.b16 %v1969
      %v2025 = vunpack.c.l.b16 %v1970
      %v2026 = vunpack.c.l.b16 %v1971
      %v2027 = vunpack.c.l.b16 %v1972
      %v2028 = vunpack.c.l.b16 %v1973
      %v2029 = vunpack.c.l.b16 %v1974
      %v2030 = vunpack.c.l.b16 %v1975
      %v2031 = vunpack.c.l.b16 %v1976
      %v2032 = vunpack.c.l.b16 %v1977
      %v2033 = vunpack.c.l.b16 %v1978
      %v2034 = vpack.c.b16 %v2019, %v2018
      %v2035 = vpack.c.b16 %v2021, %v2020
      %v2036 = vpack.c.b16 %v2023, %v2022
      %v2037 = vpack.c.b16 %v2025, %v2024
      %v2038 = vpack.c.b16 %v2027, %v2026
      %v2039 = vpack.c.b16 %v2029, %v2028
      %v2040 = vpack.c.b16 %v2031, %v2030
      %v2041 = vpack.c.b16 %v2033, %v2032
      %v2066 = vunpack.c.l.b16 %v1979
      %v2067 = vunpack.c.l.b16 %v1980
      %v2068 = vunpack.c.l.b16 %v1981
      %v2069 = vunpack.c.l.b16 %v1982
      %v2070 = vunpack.c.l.b16 %v1983
      %v2071 = vunpack.c.l.b16 %v1984
      %v2072 = vunpack.c.l.b16 %v1985
      %v2073 = vunpack.c.l.b16 %v1986
      %v2074 = vunpack.c.l.b16 %v1987
      %v2075 = vunpack.c.l.b16 %v1988
      %v2076 = vunpack.c.l.b16 %v1989
      %v2077 = vunpack.c.l.b16 %v1990
      %v2078 = vunpack.c.l.b16 %v1991
      %v2079 = vunpack.c.l.b16 %v1992
      %v2080 = vunpack.c.l.b16 %v1993
      %v2081 = vunpack.c.l.b16 %v1994
      %v2082 = vpack.c.b16 %v2067, %v2066
      %v2083 = vpack.c.b16 %v2069, %v2068
      %v2084 = vpack.c.b16 %v2071, %v2070
      %v2085 = vpack.c.b16 %v2073, %v2072
      %v2086 = vpack.c.b16 %v2075, %v2074
      %v2087 = vpack.c.b16 %v2077, %v2076
      %v2088 = vpack.c.b16 %v2079, %v2078
      %v2089 = vpack.c.b16 %v2081, %v2080
      %2098 = vmatprep.subr.bf16.mxu0 0
      %2099 = vmatpush1.bf16.msra.mxu0 %v2082
      %2100 = vmatprep.subr.bf16.mxu0 0
      %2101 = vmatpush1.bf16.msra.mxu0 %v2083
      %2102 = vmatprep.subr.bf16.mxu0 0
      %2103 = vmatpush1.bf16.msra.mxu0 %v2084
      %2104 = vmatprep.subr.bf16.mxu0 0
      %2105 = vmatpush1.bf16.msra.mxu0 %v2085
      %2106 = vmatprep.subr.bf16.mxu0 0
      %2107 = vmatpush1.bf16.msra.mxu0 %v2086
      %2108 = vmatprep.subr.bf16.mxu0 0
      %2109 = vmatpush1.bf16.msra.mxu0 %v2087
      %2110 = vmatprep.subr.bf16.mxu0 0
      %2111 = vmatpush1.bf16.msra.mxu0 %v2088
      %2112 = vmatprep.subr.bf16.mxu0 0
      %2113 = vmatpush1.bf16.msra.mxu0 %v2089
      %2114 = vmatprep.subr.bf16.mxu0 0
      %2115 = vmatpush1.bf16.msra.mxu0 0
      %2116 = vmatprep.subr.bf16.mxu0 0
      %2117 = vmatpush1.bf16.msra.mxu0 0
      %2118 = vmatprep.subr.bf16.mxu0 0
      %2119 = vmatpush1.bf16.msra.mxu0 0
      %2120 = vmatprep.subr.bf16.mxu0 0
      %2121 = vmatpush1.bf16.msra.mxu0 0
      %2122 = vmatprep.subr.bf16.mxu0 0
      %2123 = vmatpush1.bf16.msra.mxu0 0
      %2124 = vmatprep.subr.bf16.mxu0 0
      %2125 = vmatpush1.bf16.msra.mxu0 0
      %2126 = vmatprep.subr.bf16.mxu0 0
      %2127 = vmatpush1.bf16.msra.mxu0 0
      %2128 = vmatprep.subr.bf16.mxu0 0
      %2129 = vmatpush1.bf16.msra.mxu0 0
      %2130 = vmatprep.mubr.bf16.mxu0 0
      %2131 = vmatmul.mubr.bf16.gmra.mrb[0].mxu0 %v2034
      %v2132 = vpop.f32.mrb[0].mxu0
      %v2133 = vadd.f32 %v2000, %v2132
      %v2134 = vpop.f32.mrb[0].mxu0
      %v2135 = vpop.f32.mrb[0].mxu0
      %v2136 = vadd.f32 %v2000, %v2135
      %v2137 = vpop.f32.mrb[0].mxu0
      %2138 = vmatprep.mubr.bf16.mxu0 0
      %2139 = vmatmul.mubr.bf16.gmra.mrb[0].mxu0 %v2035
      %v2140 = vpop.f32.mrb[0].mxu0
      %v2141 = vadd.f32 %v2000, %v2140
      %v2142 = vpop.f32.mrb[0].mxu0
      %v2143 = vpop.f32.mrb[0].mxu0
      %v2144 = vadd.f32 %v2000, %v2143
      %v2145 = vpop.f32.mrb[0].mxu0
      %2146 = vmatprep.mubr.bf16.mxu0 0
      %2147 = vmatmul.mubr.bf16.gmra.mrb[0].mxu0 %v2036
      %v2148 = vpop.f32.mrb[0].mxu0
      %v2149 = vadd.f32 %v2000, %v2148
      %v2150 = vpop.f32.mrb[0].mxu0
      %v2151 = vpop.f32.mrb[0].mxu0
      %v2152 = vadd.f32 %v2000, %v2151
      %v2153 = vpop.f32.mrb[0].mxu0
      %2154 = vmatprep.mubr.bf16.mxu0 0
      %2155 = vmatmul.mubr.bf16.gmra.mrb[0].mxu0 %v2037
      %v2156 = vpop.f32.mrb[0].mxu0
      %v2157 = vadd.f32 %v2000, %v2156
      %v2158 = vpop.f32.mrb[0].mxu0
      %v2159 = vpop.f32.mrb[0].mxu0
      %v2160 = vadd.f32 %v2000, %v2159
      %v2161 = vpop.f32.mrb[0].mxu0
      %2162 = vmatprep.mubr.bf16.mxu0 0
      %2163 = vmatmul.mubr.bf16.gmra.mrb[0].mxu0 %v2038
      %v2164 = vpop.f32.mrb[0].mxu0
      %v2165 = vadd.f32 %v2000, %v2164
      %v2166 = vpop.f32.mrb[0].mxu0
      %v2167 = vpop.f32.mrb[0].mxu0
      %v2168 = vadd.f32 %v2000, %v2167
      %v2169 = vpop.f32.mrb[0].mxu0
      %2170 = vmatprep.mubr.bf16.mxu0 0
      %2171 = vmatmul.mubr.bf16.gmra.mrb[0].mxu0 %v2039
      %v2172 = vpop.f32.mrb[0].mxu0
      %v2173 = vadd.f32 %v2000, %v2172
      %v2174 = vpop.f32.mrb[0].mxu0
      %v2175 = vpop.f32.mrb[0].mxu0
      %v2176 = vadd.f32 %v2000, %v2175
      %v2177 = vpop.f32.mrb[0].mxu0
      %2178 = vmatprep.mubr.bf16.mxu0 0
      %2179 = vmatmul.mubr.bf16.gmra.mrb[0].mxu0 %v2040
      %v2180 = vpop.f32.mrb[0].mxu0
      %v2181 = vadd.f32 %v2000, %v2180
      %v2182 = vpop.f32.mrb[0].mxu0
      %v2183 = vpop.f32.mrb[0].mxu0
      %v2184 = vadd.f32 %v2000, %v2183
      %v2185 = vpop.f32.mrb[0].mxu0
      %2186 = vmatprep.mubr.bf16.mxu0 0
      %2187 = vmatmul.mubr.bf16.gmra.mrb[0].mxu0 %v2041
      %v2188 = vpop.f32.mrb[0].mxu0
      %v2189 = vadd.f32 %v2000, %v2188
      %v2190 = vpop.f32.mrb[0].mxu0
      %v2191 = vpop.f32.mrb[0].mxu0
      %v2192 = vadd.f32 %v2000, %v2191
      %v2193 = vpop.f32.mrb[0].mxu0
      %2194 = vdwg.mxu0
      %v2195 = vmax.f32 %v2133, 0.0
      %v2196 = vmax.f32 %v2136, 0.0
      %v2197 = vmax.f32 %v2141, 0.0
      %v2198 = vmax.f32 %v2144, 0.0
      %v2199 = vmax.f32 %v2149, 0.0
      %v2200 = vmax.f32 %v2152, 0.0
      %v2201 = vmax.f32 %v2157, 0.0
      %v2202 = vmax.f32 %v2160, 0.0
      %v2203 = vmax.f32 %v2165, 0.0
      %v2204 = vmax.f32 %v2168, 0.0
      %v2205 = vmax.f32 %v2173, 0.0
      %v2206 = vmax.f32 %v2176, 0.0
      %v2207 = vmax.f32 %v2181, 0.0
      %v2208 = vmax.f32 %v2184, 0.0
      %v2209 = vmax.f32 %v2189, 0.0
      %v2210 = vmax.f32 %v2192, 0.0
      %v2211 = vld [vmem:[%s8] sm:$0xf]
      %v2212 = vld [vmem:[%s8 + $0x4] sm:$0xf]
      %v2213 = vld [vmem:[%s8 + $0x8] sm:$0xf]
      %v2214 = vld [vmem:[%s8 + $0xc] sm:$0xf]
      %v2215 = vld [vmem:[%s8 + $0x10] sm:$0xf]
      %v2216 = vld [vmem:[%s8 + $0x14] sm:$0xf]
      %v2217 = vld [vmem:[%s8 + $0x18] sm:$0xf]
      %v2218 = vld [vmem:[%s8 + $0x1c] sm:$0xf]
      %v2219 = vld [vmem:[%s8 + $0x20] sm:$0xf]
      %v2220 = vld [vmem:[%s8 + $0x24] sm:$0xf]
      %v2221 = vld [vmem:[%s8 + $0x28] sm:$0xf]
      %v2222 = vld [vmem:[%s8 + $0x2c] sm:$0xf]
      %v2223 = vld [vmem:[%s8 + $0x30] sm:$0xf]
      %v2224 = vld [vmem:[%s8 + $0x34] sm:$0xf]
      %v2225 = vld [vmem:[%s8 + $0x38] sm:$0xf]
      %v2226 = vld [vmem:[%s8 + $0x3c] sm:$0xf]
      %v2227 = vld [vmem:[%s9] sm:$0x1]
      %v2229 = vlaneseq
      %v2230 = vshrl.u32 %v2229, 7
      %v2231 = vsub.s32 0, %v2230
      %v2232 = vrot.slane %v2227, %v2231
      %v2250 = vunpack.c.l.b16 %v2211
      %v2251 = vunpack.c.l.b16 %v2212
      %v2252 = vunpack.c.l.b16 %v2213
      %v2253 = vunpack.c.l.b16 %v2214
      %v2254 = vunpack.c.l.b16 %v2215
      %v2255 = vunpack.c.l.b16 %v2216
      %v2256 = vunpack.c.l.b16 %v2217
      %v2257 = vunpack.c.l.b16 %v2218
      %v2258 = vunpack.c.l.b16 %v2219
      %v2259 = vunpack.c.l.b16 %v2220
      %v2260 = vunpack.c.l.b16 %v2221
      %v2261 = vunpack.c.l.b16 %v2222
      %v2262 = vunpack.c.l.b16 %v2223
      %v2263 = vunpack.c.l.b16 %v2224
      %v2264 = vunpack.c.l.b16 %v2225
      %v2265 = vunpack.c.l.b16 %v2226
      %v2266 = vpack.c.b16 %v2251, %v2250
      %v2267 = vpack.c.b16 %v2253, %v2252
      %v2268 = vpack.c.b16 %v2255, %v2254
      %v2269 = vpack.c.b16 %v2257, %v2256
      %v2270 = vpack.c.b16 %v2259, %v2258
      %v2271 = vpack.c.b16 %v2261, %v2260
      %v2272 = vpack.c.b16 %v2263, %v2262
      %v2273 = vpack.c.b16 %v2265, %v2264
      %2282 = vmatprep.subr.bf16.mxu0 0
      %2283 = vmatpush1.bf16.msra.mxu0 %v2266
      %2284 = vmatprep.subr.bf16.mxu0 0
      %2285 = vmatpush1.bf16.msra.mxu0 %v2267
      %2286 = vmatprep.subr.bf16.mxu0 0
      %2287 = vmatpush1.bf16.msra.mxu0 %v2268
      %2288 = vmatprep.subr.bf16.mxu0 0
      %2289 = vmatpush1.bf16.msra.mxu0 %v2269
      %2290 = vmatprep.subr.bf16.mxu0 0
      %2291 = vmatpush1.bf16.msra.mxu0 %v2270
      %2292 = vmatprep.subr.bf16.mxu0 0
      %2293 = vmatpush1.bf16.msra.mxu0 %v2271
      %2294 = vmatprep.subr.bf16.mxu0 0
      %2295 = vmatpush1.bf16.msra.mxu0 %v2272
      %2296 = vmatprep.subr.bf16.mxu0 0
      %2297 = vmatpush1.bf16.msra.mxu0 %v2273
      %2298 = vmatprep.subr.bf16.mxu0 0
      %2299 = vmatpush1.bf16.msra.mxu0 0
      %2300 = vmatprep.subr.bf16.mxu0 0
      %2301 = vmatpush1.bf16.msra.mxu0 0
      %2302 = vmatprep.subr.bf16.mxu0 0
      %2303 = vmatpush1.bf16.msra.mxu0 0
      %2304 = vmatprep.subr.bf16.mxu0 0
      %2305 = vmatpush1.bf16.msra.mxu0 0
      %2306 = vmatprep.subr.bf16.mxu0 0
      %2307 = vmatpush1.bf16.msra.mxu0 0
      %2308 = vmatprep.subr.bf16.mxu0 0
      %2309 = vmatpush1.bf16.msra.mxu0 0
      %2310 = vmatprep.subr.bf16.mxu0 0
      %2311 = vmatpush1.bf16.msra.mxu0 0
      %2312 = vmatprep.subr.bf16.mxu0 0
      %2313 = vmatpush1.bf16.msra.mxu0 0
      %2314 = vmatprep.mubr.bf16.mxu0 0
      %2315 = vmatmul.mubr.bf16.gmra.mrb[0].mxu0 %v2034
      %v2316 = vpop.f32.mrb[0].mxu0
      %v2317 = vadd.f32 %v2232, %v2316
      %v2318 = vpop.f32.mrb[0].mxu0
      %v2319 = vpop.f32.mrb[0].mxu0
      %v2320 = vadd.f32 %v2232, %v2319
      %v2321 = vpop.f32.mrb[0].mxu0
      %2322 = vmatprep.mubr.bf16.mxu0 0
      %2323 = vmatmul.mubr.bf16.gmra.mrb[0].mxu0 %v2035
      %v2324 = vpop.f32.mrb[0].mxu0
      %v2325 = vadd.f32 %v2232, %v2324
      %v2326 = vpop.f32.mrb[0].mxu0
      %v2327 = vpop.f32.mrb[0].mxu0
      %v2328 = vadd.f32 %v2232, %v2327
      %v2329 = vpop.f32.mrb[0].mxu0
      %2330 = vmatprep.mubr.bf16.mxu0 0
      %2331 = vmatmul.mubr.bf16.gmra.mrb[0].mxu0 %v2036
      %v2332 = vpop.f32.mrb[0].mxu0
      %v2333 = vadd.f32 %v2232, %v2332
      %v2334 = vpop.f32.mrb[0].mxu0
      %v2335 = vpop.f32.mrb[0].mxu0
      %v2336 = vadd.f32 %v2232, %v2335
      %v2337 = vpop.f32.mrb[0].mxu0
      %2338 = vmatprep.mubr.bf16.mxu0 0
      %2339 = vmatmul.mubr.bf16.gmra.mrb[0].mxu0 %v2037
      %v2340 = vpop.f32.mrb[0].mxu0
      %v2341 = vadd.f32 %v2232, %v2340
      %v2342 = vpop.f32.mrb[0].mxu0
      %v2343 = vpop.f32.mrb[0].mxu0
      %v2344 = vadd.f32 %v2232, %v2343
      %v2345 = vpop.f32.mrb[0].mxu0
      %2346 = vmatprep.mubr.bf16.mxu0 0
      %2347 = vmatmul.mubr.bf16.gmra.mrb[0].mxu0 %v2038
      %v2348 = vpop.f32.mrb[0].mxu0
      %v2349 = vadd.f32 %v2232, %v2348
      %v2350 = vpop.f32.mrb[0].mxu0
      %v2351 = vpop.f32.mrb[0].mxu0
      %v2352 = vadd.f32 %v2232, %v2351
      %v2353 = vpop.f32.mrb[0].mxu0
      %2354 = vmatprep.mubr.bf16.mxu0 0
      %2355 = vmatmul.mubr.bf16.gmra.mrb[0].mxu0 %v2039
      %v2356 = vpop.f32.mrb[0].mxu0
      %v2357 = vadd.f32 %v2232, %v2356
      %v2358 = vpop.f32.mrb[0].mxu0
      %v2359 = vpop.f32.mrb[0].mxu0
      %v2360 = vadd.f32 %v2232, %v2359
      %v2361 = vpop.f32.mrb[0].mxu0
      %2362 = vmatprep.mubr.bf16.mxu0 0
      %2363 = vmatmul.mubr.bf16.gmra.mrb[0].mxu0 %v2040
      %v2364 = vpop.f32.mrb[0].mxu0
      %v2365 = vadd.f32 %v2232, %v2364
      %v2366 = vpop.f32.mrb[0].mxu0
      %v2367 = vpop.f32.mrb[0].mxu0
      %v2368 = vadd.f32 %v2232, %v2367
      %v2369 = vpop.f32.mrb[0].mxu0
      %2370 = vmatprep.mubr.bf16.mxu0 0
      %2371 = vmatmul.mubr.bf16.gmra.mrb[0].mxu0 %v2041
      %v2372 = vpop.f32.mrb[0].mxu0
      %v2373 = vadd.f32 %v2232, %v2372
      %v2374 = vpop.f32.mrb[0].mxu0
      %v2375 = vpop.f32.mrb[0].mxu0
      %v2376 = vadd.f32 %v2232, %v2375
      %v2377 = vpop.f32.mrb[0].mxu0
      %2378 = vdwg.mxu0
      %v2379 = vmax.f32 %v2317, 0.0
      %v2380 = vmax.f32 %v2320, 0.0
      %v2381 = vmax.f32 %v2325, 0.0
      %v2382 = vmax.f32 %v2328, 0.0
      %v2383 = vmax.f32 %v2333, 0.0
      %v2384 = vmax.f32 %v2336, 0.0
      %v2385 = vmax.f32 %v2341, 0.0
      %v2386 = vmax.f32 %v2344, 0.0
      %v2387 = vmax.f32 %v2349, 0.0
      %v2388 = vmax.f32 %v2352, 0.0
      %v2389 = vmax.f32 %v2357, 0.0
      %v2390 = vmax.f32 %v2360, 0.0
      %v2391 = vmax.f32 %v2365, 0.0
      %v2392 = vmax.f32 %v2368, 0.0
      %v2393 = vmax.f32 %v2373, 0.0
      %v2394 = vmax.f32 %v2376, 0.0
      %v2395 = vadd.f32 %v1947, %v2195
      %v2396 = vadd.f32 %v1948, %v2196
      %v2397 = vadd.f32 %v1949, %v2197
      %v2398 = vadd.f32 %v1950, %v2198
      %v2399 = vadd.f32 %v1951, %v2199
      %v2400 = vadd.f32 %v1952, %v2200
      %v2401 = vadd.f32 %v1953, %v2201
      %v2402 = vadd.f32 %v1954, %v2202
      %v2403 = vadd.f32 %v1955, %v2203
      %v2404 = vadd.f32 %v1956, %v2204
      %v2405 = vadd.f32 %v1957, %v2205
      %v2406 = vadd.f32 %v1958, %v2206
      %v2407 = vadd.f32 %v1959, %v2207
      %v2408 = vadd.f32 %v1960, %v2208
      %v2409 = vadd.f32 %v1961, %v2209
      %v2410 = vadd.f32 %v1962, %v2210
      %v2411 = vpack.c.bf16 %v2396, %v2395
      %v2412 = vpack.c.bf16 %v2398, %v2397
      %v2413 = vpack.c.bf16 %v2400, %v2399
      %v2414 = vpack.c.bf16 %v2402, %v2401
      %v2415 = vpack.c.bf16 %v2404, %v2403
      %v2416 = vpack.c.bf16 %v2406, %v2405
      %v2417 = vpack.c.bf16 %v2408, %v2407
      %v2418 = vpack.c.bf16 %v2410, %v2409
      %v2427 = vunpack.c.l.b16 %v2411
      %v2428 = vunpack.c.h.b16 %v2411
      %v2429 = vunpack.c.l.b16 %v2412
      %v2430 = vunpack.c.h.b16 %v2412
      %v2431 = vunpack.c.l.b16 %v2413
      %v2432 = vunpack.c.h.b16 %v2413
      %v2433 = vunpack.c.l.b16 %v2414
      %v2434 = vunpack.c.h.b16 %v2414
      %v2435 = vunpack.c.l.b16 %v2415
      %v2436 = vunpack.c.h.b16 %v2415
      %v2437 = vunpack.c.l.b16 %v2416
      %v2438 = vunpack.c.h.b16 %v2416
      %v2439 = vunpack.c.l.b16 %v2417
      %v2440 = vunpack.c.h.b16 %v2417
      %v2441 = vunpack.c.l.b16 %v2418
      %v2442 = vunpack.c.h.b16 %v2418
      %v2443 = vpack.c.b16 %v2427, %v2427
      %v2444 = vpack.c.b16 %v2428, %v2428
      %v2445 = vpack.c.b16 %v2429, %v2429
      %v2446 = vpack.c.b16 %v2430, %v2430
      %v2447 = vpack.c.b16 %v2431, %v2431
      %v2448 = vpack.c.b16 %v2432, %v2432
      %v2449 = vpack.c.b16 %v2433, %v2433
      %v2450 = vpack.c.b16 %v2434, %v2434
      %v2451 = vpack.c.b16 %v2435, %v2435
      %v2452 = vpack.c.b16 %v2436, %v2436
      %v2453 = vpack.c.b16 %v2437, %v2437
      %v2454 = vpack.c.b16 %v2438, %v2438
      %v2455 = vpack.c.b16 %v2439, %v2439
      %v2456 = vpack.c.b16 %v2440, %v2440
      %v2457 = vpack.c.b16 %v2441, %v2441
      %v2458 = vpack.c.b16 %v2442, %v2442
      %2475 = vst [vmem:[%s446] sm:$0xf] %v2443
      %2476 = vst [vmem:[%s446 + $0x4] sm:$0xf] %v2444
      %2477 = vst [vmem:[%s446 + $0x8] sm:$0xf] %v2445
      %2478 = vst [vmem:[%s446 + $0xc] sm:$0xf] %v2446
      %2479 = vst [vmem:[%s446 + $0x10] sm:$0xf] %v2447
      %2480 = vst [vmem:[%s446 + $0x14] sm:$0xf] %v2448
      %2481 = vst [vmem:[%s446 + $0x18] sm:$0xf] %v2449
      %2482 = vst [vmem:[%s446 + $0x1c] sm:$0xf] %v2450
      %2483 = vst [vmem:[%s446 + $0x20] sm:$0xf] %v2451
      %2484 = vst [vmem:[%s446 + $0x24] sm:$0xf] %v2452
      %2485 = vst [vmem:[%s446 + $0x28] sm:$0xf] %v2453
      %2486 = vst [vmem:[%s446 + $0x2c] sm:$0xf] %v2454
      %2487 = vst [vmem:[%s446 + $0x30] sm:$0xf] %v2455
      %2488 = vst [vmem:[%s446 + $0x34] sm:$0xf] %v2456
      %2489 = vst [vmem:[%s446 + $0x38] sm:$0xf] %v2457
      %2490 = vst [vmem:[%s446 + $0x3c] sm:$0xf] %v2458
      %v2491 = vadd.f32 %v1947, %v2379
      %v2492 = vadd.f32 %v1948, %v2380
      %v2493 = vadd.f32 %v1949, %v2381
      %v2494 = vadd.f32 %v1950, %v2382
      %v2495 = vadd.f32 %v1951, %v2383
      %v2496 = vadd.f32 %v1952, %v2384
      %v2497 = vadd.f32 %v1953, %v2385
      %v2498 = vadd.f32 %v1954, %v2386
      %v2499 = vadd.f32 %v1955, %v2387
      %v2500 = vadd.f32 %v1956, %v2388
      %v2501 = vadd.f32 %v1957, %v2389
      %v2502 = vadd.f32 %v1958, %v2390
      %v2503 = vadd.f32 %v1959, %v2391
      %v2504 = vadd.f32 %v1960, %v2392
      %v2505 = vadd.f32 %v1961, %v2393
      %v2506 = vadd.f32 %v1962, %v2394
      %v2507 = vpack.c.bf16 %v2492, %v2491
      %v2508 = vpack.c.bf16 %v2494, %v2493
      %v2509 = vpack.c.bf16 %v2496, %v2495
      %v2510 = vpack.c.bf16 %v2498, %v2497
      %v2511 = vpack.c.bf16 %v2500, %v2499
      %v2512 = vpack.c.bf16 %v2502, %v2501
      %v2513 = vpack.c.bf16 %v2504, %v2503
      %v2514 = vpack.c.bf16 %v2506, %v2505
      %v2523 = vunpack.c.l.b16 %v2507
      %v2524 = vunpack.c.h.b16 %v2507
      %v2525 = vunpack.c.l.b16 %v2508
      %v2526 = vunpack.c.h.b16 %v2508
      %v2527 = vunpack.c.l.b16 %v2509
      %v2528 = vunpack.c.h.b16 %v2509
      %v2529 = vunpack.c.l.b16 %v2510
      %v2530 = vunpack.c.h.b16 %v2510
      %v2531 = vunpack.c.l.b16 %v2511
      %v2532 = vunpack.c.h.b16 %v2511
      %v2533 = vunpack.c.l.b16 %v2512
      %v2534 = vunpack.c.h.b16 %v2512
      %v2535 = vunpack.c.l.b16 %v2513
      %v2536 = vunpack.c.h.b16 %v2513
      %v2537 = vunpack.c.l.b16 %v2514
      %v2538 = vunpack.c.h.b16 %v2514
      %v2539 = vpack.c.b16 %v2523, %v2523
      %v2540 = vpack.c.b16 %v2524, %v2524
      %v2541 = vpack.c.b16 %v2525, %v2525
      %v2542 = vpack.c.b16 %v2526, %v2526
      %v2543 = vpack.c.b16 %v2527, %v2527
      %v2544 = vpack.c.b16 %v2528, %v2528
      %v2545 = vpack.c.b16 %v2529, %v2529
      %v2546 = vpack.c.b16 %v2530, %v2530
      %v2547 = vpack.c.b16 %v2531, %v2531
      %v2548 = vpack.c.b16 %v2532, %v2532
      %v2549 = vpack.c.b16 %v2533, %v2533
      %v2550 = vpack.c.b16 %v2534, %v2534
      %v2551 = vpack.c.b16 %v2535, %v2535
      %v2552 = vpack.c.b16 %v2536, %v2536
      %v2553 = vpack.c.b16 %v2537, %v2537
      %v2554 = vpack.c.b16 %v2538, %v2538
      %2571 = vst [vmem:[%s452] sm:$0xf] %v2539
      %2572 = vst [vmem:[%s452 + $0x4] sm:$0xf] %v2540
      %2573 = vst [vmem:[%s452 + $0x8] sm:$0xf] %v2541
      %2574 = vst [vmem:[%s452 + $0xc] sm:$0xf] %v2542
      %2575 = vst [vmem:[%s452 + $0x10] sm:$0xf] %v2543
      %2576 = vst [vmem:[%s452 + $0x14] sm:$0xf] %v2544
      %2577 = vst [vmem:[%s452 + $0x18] sm:$0xf] %v2545
      %2578 = vst [vmem:[%s452 + $0x1c] sm:$0xf] %v2546
      %2579 = vst [vmem:[%s452 + $0x20] sm:$0xf] %v2547
      %2580 = vst [vmem:[%s452 + $0x24] sm:$0xf] %v2548
      %2581 = vst [vmem:[%s452 + $0x28] sm:$0xf] %v2549
      %2582 = vst [vmem:[%s452 + $0x2c] sm:$0xf] %v2550
      %2583 = vst [vmem:[%s452 + $0x30] sm:$0xf] %v2551
      %2584 = vst [vmem:[%s452 + $0x34] sm:$0xf] %v2552
      %2585 = vst [vmem:[%s452 + $0x38] sm:$0xf] %v2553
      %2586 = vst [vmem:[%s452 + $0x3c] sm:$0xf] %v2554
      %s2587 = smul.u32 16, %s23
      %p2588 = scmp.lt.s32.totalorder %s2587, 31
      %s2589 = scalar_select %p2588, %s2587, 31
      %s2590 = smul.addr %s2589, 4
      %s2591 = scalar_lea.vmem %s10, %s2590
      %s2592 = smul.u32 16, %s23
      %p2593 = scmp.lt.s32.totalorder %s2592, 31
      %s2594 = scalar_select %p2593, %s2592, 31
      %s2595 = smul.addr %s2594, 4
      %s2596 = scalar_lea.vmem %s11, %s2595
      // Predicated region
      $region61: #{chebnet_forward.5} parent=59 // pred_check
        %p2597 = pneg %p266
      $region62: #{chebnet_forward.5} parent=59 // pred_check_branch
        %2599 = sbr.rel (%p2597) target = $region64
      $region63: #{chebnet_forward.5} parent=59 // pred_region
        %s2600 = smul.u32 16, %s23
      $region64: #{chebnet_forward.5} parent=59 // pred_fallthru
        _
      // Predicated region
      $region65: #{chebnet_forward.5} parent=59 // pred_check
        %p2601 = pneg %p292
      $region66: #{chebnet_forward.5} parent=59 // pred_check_branch
        %2603 = sbr.rel (%p2601) target = $region68
      $region67: #{chebnet_forward.5} parent=59 // pred_region
        %s2604 = smul.u32 16, %s23
      $region68: #{chebnet_forward.5} parent=59 // pred_fallthru
        _
    $region60: #{chebnet_forward.5} parent=5 // pred_fallthru
      _
    %p2605 = scmp.le.s32.totalorder 2, %s18
    // Predicated region
    $region69: #{chebnet_forward.5} parent=5 // pred_check
      %p2606 = pneg %p2605
    $region70: #{chebnet_forward.5} parent=5 // pred_check_branch
      %2608 = sbr.rel (%p2606) target = $region72
    $region71: #{chebnet_forward.5} parent=5 // pred_region
      %s2609 = ssub.s32 %s18, 2
      // Predicated region
      $region73: #{chebnet_forward.5} parent=71 // pred_check
        %p2610 = pneg %p272
      $region74: #{chebnet_forward.5} parent=71 // pred_check_branch
        %2612 = sbr.rel (%p2610) target = $region76
      $region75: #{chebnet_forward.5} parent=71 // pred_region
        %s2613 = smul.u32 16, %s24
        %p2614 = scmp.lt.s32.totalorder %s2613, 31
        %s2615 = scalar_select %p2614, %s2613, 31
        %s2616 = smul.addr %s2615, 4
        %s2617 = scalar_lea.vmem %s10, %s2616
      $region76: #{chebnet_forward.5} parent=71 // pred_fallthru
        _
      // Predicated region
      $region77: #{chebnet_forward.5} parent=71 // pred_check
        %p2618 = pneg %p298
      $region78: #{chebnet_forward.5} parent=71 // pred_check_branch
        %2620 = sbr.rel (%p2618) target = $region80
      $region79: #{chebnet_forward.5} parent=71 // pred_region
        %s2621 = smul.u32 16, %s24
        %p2622 = scmp.lt.s32.totalorder %s2621, 31
        %s2623 = scalar_select %p2622, %s2621, 31
        %s2624 = smul.addr %s2623, 4
        %s2625 = scalar_lea.vmem %s11, %s2624
      $region80: #{chebnet_forward.5} parent=71 // pred_fallthru
        _
    $region72: #{chebnet_forward.5} parent=5 // pred_fallthru
      _
  $region6: #{chebnet_forward.5} parent=0 // loop_footer
    %s22 = sadd.s32 1, %s18
  $region7: #{chebnet_forward.5} parent=0 // loop_footer_branch
    %17 = sbr.rel target = $region3
  $region8: #{chebnet_forward.5} parent=0 // loop_exit
    _

// kernel: chebnet_forward.7
$region0: #{chebnet_forward.7}
  #allocation0 [shape = 'u32[]', space=smem, size = 0x4, offset = 0x4, fixed_abs, tag = 'smem constant byte address 0x4 - core index']
  #allocation1 [shape = 'u32[144,128]{1,0:T(1,128)}', space=vmem, size = 0x12000, scoped, tag = 'internal scratch']
  %s0 = inlined_call_operand.vmem [shape: f32[1,2], index: 0, kind: input, shape index: {}]
  %s1 = inlined_call_operand.vmem [shape: bf16[256,128], index: 1, kind: input, shape index: {}]
  %s2 = inlined_call_operand.vmem [shape: bf16[128,256], index: 2, kind: input, shape index: {}]
  %s3 = inlined_call_operand.vmem [shape: bf16[256,256], index: 3, kind: input, shape index: {}]
  %s4 = inlined_call_operand.vmem [shape: bf16[256,256], index: 4, kind: input, shape index: {}]
  %s5 = inlined_call_operand.hbm [shape: f32[1,1], index: 5, kind: output, shape index: {}]
  %s6 = sld [smem:[#allocation0]]
  $region184: #{chebnet_forward.7} parent=0
    _
  %s8 = ssub.s32 1, %s6
  %s9 = scalar_select 0, %s8, %s6
  $region1: #{chebnet_forward.7} parent=0
    #allocation2 [shape = 'u8[512]{0}', space=smem, size = 0x200, scoped, tag = 'input window, operand 0, single buffered']
    #allocation3 [shape = 's32[2]{0}', space=sflag, size = 0x8, scoped, tag = 'scoped memory for chebnet_forward.7']
    #allocation4 [shape = 's32[2]{0}', space=sflag, size = 0x8, scoped, tag = 'scoped memory for chebnet_forward.7']
    #allocation5 [shape = 'u8[65536]{0}', space=vmem, size = 0x10000, scoped, tag = 'input window, operand 2']
    #allocation6 [shape = 'u8[65536]{0}', space=vmem, size = 0x10000, scoped, tag = 'input window, operand 3']
    #allocation7 [shape = 'u8[65536]{0}', space=vmem, size = 0x10000, scoped, tag = 'input window, operand 4']
    #allocation8 [shape = 'u8[512]{0}', space=vmem, size = 0x400, scoped, tag = 'output window, operand 0, single buffered']
    %10 = vsyncpa [#allocation4], 0
    %11 = vsyncpa [#allocation3], 0
    loop: start=0, step=1, limit=6
    $region2: #{chebnet_forward.7} parent=1 // loop_pre_header
      _
    $region3: #{chebnet_forward.7} parent=1 // loop_header
      %s13 = sphi 0, %s17
      %p14 = scmp.ge.s32.totalorder %s13, 6
      %s20 = sphi 0, %s32
      %s21 = sphi 0, %s28
      %s22 = sphi 0, %s20
      %s23 = sphi 0, %s21
      %s24 = sphi 0, %s22
      %s25 = sphi 0, %s23
      %s33 = sphi 0, %s33
      %s35 = sphi 0, %s33
      %s36 = sphi 0, %s35
      %s50 = sphi 0, %s36
      %s56 = sphi 0, %s58
      %s59 = sphi 0, %s56
      %s60 = sphi 0, %s59
      %s76 = sphi 0, %s60
      %s82 = sphi 0, %s84
      %s85 = sphi 0, %s82
      %s86 = sphi 0, %s85
      %s102 = sphi 0, %s86
      %s110 = sphi 0, %s112
      %s113 = sphi 0, %s110
      %s114 = sphi 0, %s113
      %s130 = sphi 0, %s114
      %s138 = sphi 0, %s140
      %s141 = sphi 0, %s138
      %s142 = sphi 0, %s141
      %s158 = sphi 0, %s142
      %s162 = sphi 0, %s162
      %s164 = sphi 0, %s162
      %s165 = sphi 0, %s164
      %s179 = sphi 0, %s165
    $region4: #{chebnet_forward.7} parent=1 // loop_header_branch
      %16 = sbr.rel (%p14) target = $region8
    $region5: #{chebnet_forward.7} parent=1 // loop_body
      %s18 = ssub.s32 %s13, 1
      %s19 = ssub.s32 %s13, 2
      %s26 = sadd.s32 1, %s21
      %p27 = scmp.ge.s32.totalorder %s26, 2
      %s28 = scalar_select %p27, 0, %s26
      %s29 = sadd.s32 1, %s20
      %s30 = scalar_select %p27, %s29, %s20
      %p31 = scmp.ge.s32.totalorder %s30, 2
      %s32 = scalar_select %p31, 0, %s30
      %s34 = sadd.s32 %s33, 1
      %p37 = scmp.eq.s32.totalorder %s13, 3
      %p38 = scmp.ne.s32.totalorder %s33, %s35
      %p39 = scmp.eq.s32.totalorder %s13, 0
      %p40 = por %p38, %p39
      %p41 = scmp.ne.s32.totalorder %s33, %s35
      %p42 = scmp.eq.s32.totalorder %s18, 3
      %p43 = por %p41, %p42
      %p44 = scmp.ne.s32.totalorder %s35, %s36
      %p45 = scmp.eq.s32.totalorder %s18, 0
      %p46 = por %p44, %p45
      %p47 = scmp.ne.s32.totalorder %s35, %s36
      %p48 = scmp.eq.s32.totalorder %s19, 3
      %p49 = por %p47, %p48
      %p51 = scmp.ne.s32.totalorder %s36, %s50
      %p52 = scmp.eq.s32.totalorder %s19, 0
      %p53 = por %p51, %p52
      %s54 = ssub.s32 %s20, %s32
      %p55 = scmp.eq.s32.totalorder %s54, 0
      %s57 = sadd.s32 %s56, 1
      %s58 = scalar_select %p55, %s56, %s57
      %p61 = pneg %p55
      %p62 = scmp.eq.s32.totalorder %s13, 3
      %p63 = por %p61, %p62
      %p64 = scmp.ne.s32.totalorder %s56, %s59
      %p65 = scmp.eq.s32.totalorder %s13, 0
      %p66 = por %p64, %p65
      %p67 = scmp.ne.s32.totalorder %s56, %s59
      %p68 = scmp.eq.s32.totalorder %s18, 3
      %p69 = por %p67, %p68
      %p70 = scmp.ne.s32.totalorder %s59, %s60
      %p71 = scmp.eq.s32.totalorder %s18, 0
      %p72 = por %p70, %p71
      %p73 = scmp.ne.s32.totalorder %s59, %s60
      %p74 = scmp.eq.s32.totalorder %s19, 3
      %p75 = por %p73, %p74
      %p77 = scmp.ne.s32.totalorder %s60, %s76
      %p78 = scmp.eq.s32.totalorder %s19, 0
      %p79 = por %p77, %p78
      %s80 = ssub.s32 %s21, %s28
      %p81 = scmp.eq.s32.totalorder %s80, 0
      %s83 = sadd.s32 %s82, 1
      %s84 = scalar_select %p81, %s82, %s83
      %p87 = pneg %p81
      %p88 = scmp.eq.s32.totalorder %s13, 3
      %p89 = por %p87, %p88
      %p90 = scmp.ne.s32.totalorder %s82, %s85
      %p91 = scmp.eq.s32.totalorder %s13, 0
      %p92 = por %p90, %p91
      %p93 = scmp.ne.s32.totalorder %s82, %s85
      %p94 = scmp.eq.s32.totalorder %s18, 3
      %p95 = por %p93, %p94
      %p96 = scmp.ne.s32.totalorder %s85, %s86
      %p97 = scmp.eq.s32.totalorder %s18, 0
      %p98 = por %p96, %p97
      %p99 = scmp.ne.s32.totalorder %s85, %s86
      %p100 = scmp.eq.s32.totalorder %s19, 3
      %p101 = por %p99, %p100
      %p103 = scmp.ne.s32.totalorder %s86, %s102
      %p104 = scmp.eq.s32.totalorder %s19, 0
      %p105 = por %p103, %p104
      %s106 = ssub.s32 %s20, %s32
      %s107 = ssub.s32 %s21, %s28
      %s108 = sor.u32 %s106, %s107
      %p109 = scmp.eq.s32.totalorder %s108, 0
      %s111 = sadd.s32 %s110, 1
      %s112 = scalar_select %p109, %s110, %s111
      %p115 = pneg %p109
      %p116 = scmp.eq.s32.totalorder %s13, 3
      %p117 = por %p115, %p116
      %p118 = scmp.ne.s32.totalorder %s110, %s113
      %p119 = scmp.eq.s32.totalorder %s13, 0
      %p120 = por %p118, %p119
      %p121 = scmp.ne.s32.totalorder %s110, %s113
      %p122 = scmp.eq.s32.totalorder %s18, 3
      %p123 = por %p121, %p122
      %p124 = scmp.ne.s32.totalorder %s113, %s114
      %p125 = scmp.eq.s32.totalorder %s18, 0
      %p126 = por %p124, %p125
      %p127 = scmp.ne.s32.totalorder %s113, %s114
      %p128 = scmp.eq.s32.totalorder %s19, 3
      %p129 = por %p127, %p128
      %p131 = scmp.ne.s32.totalorder %s114, %s130
      %p132 = scmp.eq.s32.totalorder %s19, 0
      %p133 = por %p131, %p132
      %s134 = ssub.s32 %s20, %s32
      %s135 = ssub.s32 %s21, %s28
      %s136 = sor.u32 %s134, %s135
      %p137 = scmp.eq.s32.totalorder %s136, 0
      %s139 = sadd.s32 %s138, 1
      %s140 = scalar_select %p137, %s138, %s139
      %p143 = pneg %p137
      %p144 = scmp.eq.s32.totalorder %s13, 3
      %p145 = por %p143, %p144
      %p146 = scmp.ne.s32.totalorder %s138, %s141
      %p147 = scmp.eq.s32.totalorder %s13, 0
      %p148 = por %p146, %p147
      %p149 = scmp.ne.s32.totalorder %s138, %s141
      %p150 = scmp.eq.s32.totalorder %s18, 3
      %p151 = por %p149, %p150
      %p152 = scmp.ne.s32.totalorder %s141, %s142
      %p153 = scmp.eq.s32.totalorder %s18, 0
      %p154 = por %p152, %p153
      %p155 = scmp.ne.s32.totalorder %s141, %s142
      %p156 = scmp.eq.s32.totalorder %s19, 3
      %p157 = por %p155, %p156
      %p159 = scmp.ne.s32.totalorder %s142, %s158
      %p160 = scmp.eq.s32.totalorder %s19, 0
      %p161 = por %p159, %p160
      %s163 = sadd.s32 %s162, 1
      %p166 = scmp.eq.s32.totalorder %s13, 3
      %p167 = scmp.ne.s32.totalorder %s162, %s164
      %p168 = scmp.eq.s32.totalorder %s13, 0
      %p169 = por %p167, %p168
      %p170 = scmp.ne.s32.totalorder %s162, %s164
      %p171 = scmp.eq.s32.totalorder %s18, 3
      %p172 = por %p170, %p171
      %p173 = scmp.ne.s32.totalorder %s164, %s165
      %p174 = scmp.eq.s32.totalorder %s18, 0
      %p175 = por %p173, %p174
      %p176 = scmp.ne.s32.totalorder %s164, %s165
      %p177 = scmp.eq.s32.totalorder %s19, 3
      %p178 = por %p176, %p177
      %p180 = scmp.ne.s32.totalorder %s165, %s179
      %p181 = scmp.eq.s32.totalorder %s19, 0
      %p182 = por %p180, %p181
      %p183 = scmp.le.s32.totalorder 1, %s13
      %p184 = scmp.lt.s32.totalorder %s13, 5
      %p185 = pnand %p183, %p184
      %p186 = pneg %p185
      // Predicated region
      $region9: #{chebnet_forward.7} parent=5 // pred_check
        _
      $region10: #{chebnet_forward.7} parent=5 // pred_check_branch
        %188 = sbr.rel (%p185) target = $region12
      $region11: #{chebnet_forward.7} parent=5 // pred_region
        %s189 = ssub.s32 %s13, 1
        // Predicated region
        $region13: #{chebnet_forward.7} parent=11 // pred_check
          %p190 = pneg %p46
        $region14: #{chebnet_forward.7} parent=11 // pred_check_branch
          %192 = sbr.rel (%p190) target = $region16
        $region15: #{chebnet_forward.7} parent=11 // pred_region
          %s194 = ssub.s32 16, 16
          %195 = vsyncadd [#allocation4], %s194
          %s197 = sshll.u32 %s0, 4
          %s198 = int_to_ptr.vmem [resolvable:$true] %s197
          %200 = dma.vmem_to_smem %s198, 16, [#allocation2], [#allocation4]
        $region16: #{chebnet_forward.7} parent=11 // pred_fallthru
          _
      $region12: #{chebnet_forward.7} parent=5 // pred_fallthru
        _
      %p201 = scmp.lt.s32.totalorder %s13, 4
      // Predicated region
      $region17: #{chebnet_forward.7} parent=5 // pred_check
        %p202 = pneg %p201
      $region18: #{chebnet_forward.7} parent=5 // pred_check_branch
        %204 = sbr.rel (%p202) target = $region20
      $region19: #{chebnet_forward.7} parent=5 // pred_region
        // Predicated region
        $region21: #{chebnet_forward.7} parent=19 // pred_check
          %p205 = pneg %p66
        $region22: #{chebnet_forward.7} parent=19 // pred_check_branch
          %207 = sbr.rel (%p205) target = $region24
        $region23: #{chebnet_forward.7} parent=19 // pred_region
          %s208 = smul.u32 16, %s20
          %p209 = scmp.lt.s32.totalorder %s208, 31
          %s210 = scalar_select %p209, %s208, 31
          %s211 = smul.addr %s210, 4
          %s212 = scalar_lea.vmem %s1, %s211
          %s213 = smul.u32 16, %s20
        $region24: #{chebnet_forward.7} parent=19 // pred_fallthru
          _
        // Predicated region
        $region25: #{chebnet_forward.7} parent=19 // pred_check
          %p214 = pneg %p92
        $region26: #{chebnet_forward.7} parent=19 // pred_check_branch
          %216 = sbr.rel (%p214) target = $region28
        $region27: #{chebnet_forward.7} parent=19 // pred_region
          %s217 = sand.u32 %s82, 1
          %s218 = sand.u32 %s82, 1
          %s219 = smul.addr %s218, 64
          %s220 = scalar_lea.vmem [#allocation5], %s219
          %s221 = smul.addr %s21, 4
          %s222 = scalar_lea.vmem %s2, %s221
          // Predicated region
          $region29: #{chebnet_forward.7} parent=27 // pred_check
            _
          $region30: #{chebnet_forward.7} parent=27 // pred_check_branch
            %224 = sbr.rel (0) target = $region32
          $region31: #{chebnet_forward.7} parent=27 // pred_region
            // Predicated region
            $region33: #{chebnet_forward.7} parent=31 // pred_check
              _
            $region34: #{chebnet_forward.7} parent=31 // pred_check_branch
              %226 = sbr.rel target = $region36
            $region35: #{chebnet_forward.7} parent=31 // pred_region
              // Predicated region
              $region48: #{chebnet_forward.7} parent=35 // pred_check
                _
              $region49: #{chebnet_forward.7} parent=35 // pred_check_branch
                %271 = sbr.rel (0) target = $region51
              $region50: #{chebnet_forward.7} parent=35 // pred_region
                loop: start=0, step=1, limit=1
                $region52: #{chebnet_forward.7} parent=50 // loop_pre_header
                  _
                $region53: #{chebnet_forward.7} parent=50 // loop_header
                  %s273 = sphi 0, %s277
                  %p274 = scmp.ge.s32.totalorder %s273, 1
                  %s278 = sphi %s222, %s222
                  %s279 = sphi %s220, %s220
                $region54: #{chebnet_forward.7} parent=50 // loop_header_branch
                  %276 = sbr.rel (%p274) target = $region58
                $region55: #{chebnet_forward.7} parent=50 // loop_body
                  _
                $region56: #{chebnet_forward.7} parent=50 // loop_footer
                  %s277 = sadd.s32 1, %s273
                $region57: #{chebnet_forward.7} parent=50 // loop_footer_branch
                  %272 = sbr.rel target = $region53
                $region58: #{chebnet_forward.7} parent=50 // loop_exit
                  _
                loop: start=0, step=1, limit=1
                $region59: #{chebnet_forward.7} parent=50 // loop_pre_header
                  _
                $region60: #{chebnet_forward.7} parent=50 // loop_header
                  %s282 = sphi 0, %s286
                  %p283 = scmp.ge.s32.totalorder %s282, 1
                  %s287 = sphi %s222, %s222
                  %s288 = sphi %s220, %s220
                $region61: #{chebnet_forward.7} parent=50 // loop_header_branch
                  %285 = sbr.rel (%p283) target = $region65
                $region62: #{chebnet_forward.7} parent=50 // loop_body
                  %v289 = vld [vmem:[%s287] sm:$0xf]
                  %290 = vst [vmem:[%s288] sm:$0xf] %v289
                  %v291 = vld [vmem:[%s287 + $0x8] sm:$0xf]
                  %292 = vst [vmem:[%s288 + $0x4] sm:$0xf] %v291
                  %v293 = vld [vmem:[%s287 + $0x10] sm:$0xf]
                  %294 = vst [vmem:[%s288 + $0x8] sm:$0xf] %v293
                  %v295 = vld [vmem:[%s287 + $0x18] sm:$0xf]
                  %296 = vst [vmem:[%s288 + $0xc] sm:$0xf] %v295
                  %v297 = vld [vmem:[%s287 + $0x20] sm:$0xf]
                  %298 = vst [vmem:[%s288 + $0x10] sm:$0xf] %v297
                  %v299 = vld [vmem:[%s287 + $0x28] sm:$0xf]
                  %300 = vst [vmem:[%s288 + $0x14] sm:$0xf] %v299
                  %v301 = vld [vmem:[%s287 + $0x30] sm:$0xf]
                  %302 = vst [vmem:[%s288 + $0x18] sm:$0xf] %v301
                  %v303 = vld [vmem:[%s287 + $0x38] sm:$0xf]
                  %304 = vst [vmem:[%s288 + $0x1c] sm:$0xf] %v303
                  %v305 = vld [vmem:[%s287 + $0x40] sm:$0xf]
                  %306 = vst [vmem:[%s288 + $0x20] sm:$0xf] %v305
                  %v307 = vld [vmem:[%s287 + $0x48] sm:$0xf]
                  %308 = vst [vmem:[%s288 + $0x24] sm:$0xf] %v307
                  %v309 = vld [vmem:[%s287 + $0x50] sm:$0xf]
                  %310 = vst [vmem:[%s288 + $0x28] sm:$0xf] %v309
                  %v311 = vld [vmem:[%s287 + $0x58] sm:$0xf]
                  %312 = vst [vmem:[%s288 + $0x2c] sm:$0xf] %v311
                  %v313 = vld [vmem:[%s287 + $0x60] sm:$0xf]
                  %314 = vst [vmem:[%s288 + $0x30] sm:$0xf] %v313
                  %v315 = vld [vmem:[%s287 + $0x68] sm:$0xf]
                  %316 = vst [vmem:[%s288 + $0x34] sm:$0xf] %v315
                  %v317 = vld [vmem:[%s287 + $0x70] sm:$0xf]
                  %318 = vst [vmem:[%s288 + $0x38] sm:$0xf] %v317
                  %v319 = vld [vmem:[%s287 + $0x78] sm:$0xf]
                  %320 = vst [vmem:[%s288 + $0x3c] sm:$0xf] %v319
                $region63: #{chebnet_forward.7} parent=50 // loop_footer
                  %s286 = sadd.s32 1, %s282
                $region64: #{chebnet_forward.7} parent=50 // loop_footer_branch
                  %281 = sbr.rel target = $region60
                $region65: #{chebnet_forward.7} parent=50 // loop_exit
                  _
              $region51: #{chebnet_forward.7} parent=35 // pred_fallthru
                _
            $region36: #{chebnet_forward.7} parent=31 // pred_fallthru
              _
            // Predicated region
            $region37: #{chebnet_forward.7} parent=31 // pred_check
              _
            $region38: #{chebnet_forward.7} parent=31 // pred_check_branch
              %228 = sbr.rel (0) target = $region40
            $region39: #{chebnet_forward.7} parent=31 // pred_region
              loop: start=0, step=1, limit=1
              $region41: #{chebnet_forward.7} parent=39 // loop_pre_header
                _
              $region42: #{chebnet_forward.7} parent=39 // loop_header
                %s231 = sphi 0, %s235
                %p232 = scmp.ge.s32.totalorder %s231, 1
                %s236 = sphi %s222, %s222
                %s237 = sphi %s220, %s220
              $region43: #{chebnet_forward.7} parent=39 // loop_header_branch
                %234 = sbr.rel (%p232) target = $region47
              $region44: #{chebnet_forward.7} parent=39 // loop_body
                %v238 = vld [vmem:[%s236] sm:$0xf]
                %239 = vst [vmem:[%s237] sm:$0xf] %v238
                %v240 = vld [vmem:[%s236 + $0x8] sm:$0xf]
                %241 = vst [vmem:[%s237 + $0x4] sm:$0xf] %v240
                %v242 = vld [vmem:[%s236 + $0x10] sm:$0xf]
                %243 = vst [vmem:[%s237 + $0x8] sm:$0xf] %v242
                %v244 = vld [vmem:[%s236 + $0x18] sm:$0xf]
                %245 = vst [vmem:[%s237 + $0xc] sm:$0xf] %v244
                %v246 = vld [vmem:[%s236 + $0x20] sm:$0xf]
                %247 = vst [vmem:[%s237 + $0x10] sm:$0xf] %v246
                %v248 = vld [vmem:[%s236 + $0x28] sm:$0xf]
                %249 = vst [vmem:[%s237 + $0x14] sm:$0xf] %v248
                %v250 = vld [vmem:[%s236 + $0x30] sm:$0xf]
                %251 = vst [vmem:[%s237 + $0x18] sm:$0xf] %v250
                %v252 = vld [vmem:[%s236 + $0x38] sm:$0xf]
                %253 = vst [vmem:[%s237 + $0x1c] sm:$0xf] %v252
                %v254 = vld [vmem:[%s236 + $0x40] sm:$0xf]
                %255 = vst [vmem:[%s237 + $0x20] sm:$0xf] %v254
                %v256 = vld [vmem:[%s236 + $0x48] sm:$0xf]
                %257 = vst [vmem:[%s237 + $0x24] sm:$0xf] %v256
                %v258 = vld [vmem:[%s236 + $0x50] sm:$0xf]
                %259 = vst [vmem:[%s237 + $0x28] sm:$0xf] %v258
                %v260 = vld [vmem:[%s236 + $0x58] sm:$0xf]
                %261 = vst [vmem:[%s237 + $0x2c] sm:$0xf] %v260
                %v262 = vld [vmem:[%s236 + $0x60] sm:$0xf]
                %263 = vst [vmem:[%s237 + $0x30] sm:$0xf] %v262
                %v264 = vld [vmem:[%s236 + $0x68] sm:$0xf]
                %265 = vst [vmem:[%s237 + $0x34] sm:$0xf] %v264
                %v266 = vld [vmem:[%s236 + $0x70] sm:$0xf]
                %267 = vst [vmem:[%s237 + $0x38] sm:$0xf] %v266
                %v268 = vld [vmem:[%s236 + $0x78] sm:$0xf]
                %269 = vst [vmem:[%s237 + $0x3c] sm:$0xf] %v268
              $region45: #{chebnet_forward.7} parent=39 // loop_footer
                %s235 = sadd.s32 1, %s231
              $region46: #{chebnet_forward.7} parent=39 // loop_footer_branch
                %230 = sbr.rel target = $region42
              $region47: #{chebnet_forward.7} parent=39 // loop_exit
                _
            $region40: #{chebnet_forward.7} parent=31 // pred_fallthru
              _
          $region32: #{chebnet_forward.7} parent=27 // pred_fallthru
            _
          %321 = vnop
        $region28: #{chebnet_forward.7} parent=19 // pred_fallthru
          _
        // Predicated region
        $region66: #{chebnet_forward.7} parent=19 // pred_check
          %p322 = pneg %p120
        $region67: #{chebnet_forward.7} parent=19 // pred_check_branch
          %324 = sbr.rel (%p322) target = $region69
        $region68: #{chebnet_forward.7} parent=19 // pred_region
          %s325 = sand.u32 %s110, 1
          %s326 = sand.u32 %s110, 1
          %s327 = smul.addr %s326, 64
          %s328 = scalar_lea.vmem [#allocation6], %s327
          %s329 = smul.u32 16, %s20
          %s330 = smul.addr %s329, 2
          %s331 = sadd.s32 %s21, %s330
          %s332 = smul.addr %s331, 4
          %s333 = scalar_lea.vmem %s3, %s332
          // Predicated region
          $region70: #{chebnet_forward.7} parent=68 // pred_check
            _
          $region71: #{chebnet_forward.7} parent=68 // pred_check_branch
            %335 = sbr.rel (0) target = $region73
          $region72: #{chebnet_forward.7} parent=68 // pred_region
            // Predicated region
            $region74: #{chebnet_forward.7} parent=72 // pred_check
              _
            $region75: #{chebnet_forward.7} parent=72 // pred_check_branch
              %337 = sbr.rel target = $region77
            $region76: #{chebnet_forward.7} parent=72 // pred_region
              // Predicated region
              $region89: #{chebnet_forward.7} parent=76 // pred_check
                _
              $region90: #{chebnet_forward.7} parent=76 // pred_check_branch
                %382 = sbr.rel (0) target = $region92
              $region91: #{chebnet_forward.7} parent=76 // pred_region
                loop: start=0, step=1, limit=1
                $region93: #{chebnet_forward.7} parent=91 // loop_pre_header
                  _
                $region94: #{chebnet_forward.7} parent=91 // loop_header
                  %s384 = sphi 0, %s388
                  %p385 = scmp.ge.s32.totalorder %s384, 1
                  %s389 = sphi %s333, %s333
                  %s390 = sphi %s328, %s328
                $region95: #{chebnet_forward.7} parent=91 // loop_header_branch
                  %387 = sbr.rel (%p385) target = $region99
                $region96: #{chebnet_forward.7} parent=91 // loop_body
                  _
                $region97: #{chebnet_forward.7} parent=91 // loop_footer
                  %s388 = sadd.s32 1, %s384
                $region98: #{chebnet_forward.7} parent=91 // loop_footer_branch
                  %383 = sbr.rel target = $region94
                $region99: #{chebnet_forward.7} parent=91 // loop_exit
                  _
                loop: start=0, step=1, limit=1
                $region100: #{chebnet_forward.7} parent=91 // loop_pre_header
                  _
                $region101: #{chebnet_forward.7} parent=91 // loop_header
                  %s393 = sphi 0, %s397
                  %p394 = scmp.ge.s32.totalorder %s393, 1
                  %s398 = sphi %s333, %s333
                  %s399 = sphi %s328, %s328
                $region102: #{chebnet_forward.7} parent=91 // loop_header_branch
                  %396 = sbr.rel (%p394) target = $region106
                $region103: #{chebnet_forward.7} parent=91 // loop_body
                  %v400 = vld [vmem:[%s398] sm:$0xf]
                  %401 = vst [vmem:[%s399] sm:$0xf] %v400
                  %v402 = vld [vmem:[%s398 + $0x8] sm:$0xf]
                  %403 = vst [vmem:[%s399 + $0x4] sm:$0xf] %v402
                  %v404 = vld [vmem:[%s398 + $0x10] sm:$0xf]
                  %405 = vst [vmem:[%s399 + $0x8] sm:$0xf] %v404
                  %v406 = vld [vmem:[%s398 + $0x18] sm:$0xf]
                  %407 = vst [vmem:[%s399 + $0xc] sm:$0xf] %v406
                  %v408 = vld [vmem:[%s398 + $0x20] sm:$0xf]
                  %409 = vst [vmem:[%s399 + $0x10] sm:$0xf] %v408
                  %v410 = vld [vmem:[%s398 + $0x28] sm:$0xf]
                  %411 = vst [vmem:[%s399 + $0x14] sm:$0xf] %v410
                  %v412 = vld [vmem:[%s398 + $0x30] sm:$0xf]
                  %413 = vst [vmem:[%s399 + $0x18] sm:$0xf] %v412
                  %v414 = vld [vmem:[%s398 + $0x38] sm:$0xf]
                  %415 = vst [vmem:[%s399 + $0x1c] sm:$0xf] %v414
                  %v416 = vld [vmem:[%s398 + $0x40] sm:$0xf]
                  %417 = vst [vmem:[%s399 + $0x20] sm:$0xf] %v416
                  %v418 = vld [vmem:[%s398 + $0x48] sm:$0xf]
                  %419 = vst [vmem:[%s399 + $0x24] sm:$0xf] %v418
                  %v420 = vld [vmem:[%s398 + $0x50] sm:$0xf]
                  %421 = vst [vmem:[%s399 + $0x28] sm:$0xf] %v420
                  %v422 = vld [vmem:[%s398 + $0x58] sm:$0xf]
                  %423 = vst [vmem:[%s399 + $0x2c] sm:$0xf] %v422
                  %v424 = vld [vmem:[%s398 + $0x60] sm:$0xf]
                  %425 = vst [vmem:[%s399 + $0x30] sm:$0xf] %v424
                  %v426 = vld [vmem:[%s398 + $0x68] sm:$0xf]
                  %427 = vst [vmem:[%s399 + $0x34] sm:$0xf] %v426
                  %v428 = vld [vmem:[%s398 + $0x70] sm:$0xf]
                  %429 = vst [vmem:[%s399 + $0x38] sm:$0xf] %v428
                  %v430 = vld [vmem:[%s398 + $0x78] sm:$0xf]
                  %431 = vst [vmem:[%s399 + $0x3c] sm:$0xf] %v430
                $region104: #{chebnet_forward.7} parent=91 // loop_footer
                  %s397 = sadd.s32 1, %s393
                $region105: #{chebnet_forward.7} parent=91 // loop_footer_branch
                  %392 = sbr.rel target = $region101
                $region106: #{chebnet_forward.7} parent=91 // loop_exit
                  _
              $region92: #{chebnet_forward.7} parent=76 // pred_fallthru
                _
            $region77: #{chebnet_forward.7} parent=72 // pred_fallthru
              _
            // Predicated region
            $region78: #{chebnet_forward.7} parent=72 // pred_check
              _
            $region79: #{chebnet_forward.7} parent=72 // pred_check_branch
              %339 = sbr.rel (0) target = $region81
            $region80: #{chebnet_forward.7} parent=72 // pred_region
              loop: start=0, step=1, limit=1
              $region82: #{chebnet_forward.7} parent=80 // loop_pre_header
                _
              $region83: #{chebnet_forward.7} parent=80 // loop_header
                %s342 = sphi 0, %s346
                %p343 = scmp.ge.s32.totalorder %s342, 1
                %s347 = sphi %s333, %s333
                %s348 = sphi %s328, %s328
              $region84: #{chebnet_forward.7} parent=80 // loop_header_branch
                %345 = sbr.rel (%p343) target = $region88
              $region85: #{chebnet_forward.7} parent=80 // loop_body
                %v349 = vld [vmem:[%s347] sm:$0xf]
                %350 = vst [vmem:[%s348] sm:$0xf] %v349
                %v351 = vld [vmem:[%s347 + $0x8] sm:$0xf]
                %352 = vst [vmem:[%s348 + $0x4] sm:$0xf] %v351
                %v353 = vld [vmem:[%s347 + $0x10] sm:$0xf]
                %354 = vst [vmem:[%s348 + $0x8] sm:$0xf] %v353
                %v355 = vld [vmem:[%s347 + $0x18] sm:$0xf]
                %356 = vst [vmem:[%s348 + $0xc] sm:$0xf] %v355
                %v357 = vld [vmem:[%s347 + $0x20] sm:$0xf]
                %358 = vst [vmem:[%s348 + $0x10] sm:$0xf] %v357
                %v359 = vld [vmem:[%s347 + $0x28] sm:$0xf]
                %360 = vst [vmem:[%s348 + $0x14] sm:$0xf] %v359
                %v361 = vld [vmem:[%s347 + $0x30] sm:$0xf]
                %362 = vst [vmem:[%s348 + $0x18] sm:$0xf] %v361
                %v363 = vld [vmem:[%s347 + $0x38] sm:$0xf]
                %364 = vst [vmem:[%s348 + $0x1c] sm:$0xf] %v363
                %v365 = vld [vmem:[%s347 + $0x40] sm:$0xf]
                %366 = vst [vmem:[%s348 + $0x20] sm:$0xf] %v365
                %v367 = vld [vmem:[%s347 + $0x48] sm:$0xf]
                %368 = vst [vmem:[%s348 + $0x24] sm:$0xf] %v367
                %v369 = vld [vmem:[%s347 + $0x50] sm:$0xf]
                %370 = vst [vmem:[%s348 + $0x28] sm:$0xf] %v369
                %v371 = vld [vmem:[%s347 + $0x58] sm:$0xf]
                %372 = vst [vmem:[%s348 + $0x2c] sm:$0xf] %v371
                %v373 = vld [vmem:[%s347 + $0x60] sm:$0xf]
                %374 = vst [vmem:[%s348 + $0x30] sm:$0xf] %v373
                %v375 = vld [vmem:[%s347 + $0x68] sm:$0xf]
                %376 = vst [vmem:[%s348 + $0x34] sm:$0xf] %v375
                %v377 = vld [vmem:[%s347 + $0x70] sm:$0xf]
                %378 = vst [vmem:[%s348 + $0x38] sm:$0xf] %v377
                %v379 = vld [vmem:[%s347 + $0x78] sm:$0xf]
                %380 = vst [vmem:[%s348 + $0x3c] sm:$0xf] %v379
              $region86: #{chebnet_forward.7} parent=80 // loop_footer
                %s346 = sadd.s32 1, %s342
              $region87: #{chebnet_forward.7} parent=80 // loop_footer_branch
                %341 = sbr.rel target = $region83
              $region88: #{chebnet_forward.7} parent=80 // loop_exit
                _
            $region81: #{chebnet_forward.7} parent=72 // pred_fallthru
              _
          $region73: #{chebnet_forward.7} parent=68 // pred_fallthru
            _
          %432 = vnop
        $region69: #{chebnet_forward.7} parent=19 // pred_fallthru
          _
        // Predicated region
        $region107: #{chebnet_forward.7} parent=19 // pred_check
          %p433 = pneg %p148
        $region108: #{chebnet_forward.7} parent=19 // pred_check_branch
          %435 = sbr.rel (%p433) target = $region110
        $region109: #{chebnet_forward.7} parent=19 // pred_region
          %s436 = sand.u32 %s138, 1
          %s437 = sand.u32 %s138, 1
          %s438 = smul.addr %s437, 64
          %s439 = scalar_lea.vmem [#allocation7], %s438
          %s440 = smul.u32 16, %s20
          %s441 = smul.addr %s440, 2
          %s442 = sadd.s32 %s21, %s441
          %s443 = smul.addr %s442, 4
          %s444 = scalar_lea.vmem %s4, %s443
          // Predicated region
          $region111: #{chebnet_forward.7} parent=109 // pred_check
            _
          $region112: #{chebnet_forward.7} parent=109 // pred_check_branch
            %446 = sbr.rel (0) target = $region114
          $region113: #{chebnet_forward.7} parent=109 // pred_region
            // Predicated region
            $region115: #{chebnet_forward.7} parent=113 // pred_check
              _
            $region116: #{chebnet_forward.7} parent=113 // pred_check_branch
              %448 = sbr.rel target = $region118
            $region117: #{chebnet_forward.7} parent=113 // pred_region
              // Predicated region
              $region130: #{chebnet_forward.7} parent=117 // pred_check
                _
              $region131: #{chebnet_forward.7} parent=117 // pred_check_branch
                %493 = sbr.rel (0) target = $region133
              $region132: #{chebnet_forward.7} parent=117 // pred_region
                loop: start=0, step=1, limit=1
                $region134: #{chebnet_forward.7} parent=132 // loop_pre_header
                  _
                $region135: #{chebnet_forward.7} parent=132 // loop_header
                  %s495 = sphi 0, %s499
                  %p496 = scmp.ge.s32.totalorder %s495, 1
                  %s500 = sphi %s444, %s444
                  %s501 = sphi %s439, %s439
                $region136: #{chebnet_forward.7} parent=132 // loop_header_branch
                  %498 = sbr.rel (%p496) target = $region140
                $region137: #{chebnet_forward.7} parent=132 // loop_body
                  _
                $region138: #{chebnet_forward.7} parent=132 // loop_footer
                  %s499 = sadd.s32 1, %s495
                $region139: #{chebnet_forward.7} parent=132 // loop_footer_branch
                  %494 = sbr.rel target = $region135
                $region140: #{chebnet_forward.7} parent=132 // loop_exit
                  _
                loop: start=0, step=1, limit=1
                $region141: #{chebnet_forward.7} parent=132 // loop_pre_header
                  _
                $region142: #{chebnet_forward.7} parent=132 // loop_header
                  %s504 = sphi 0, %s508
                  %p505 = scmp.ge.s32.totalorder %s504, 1
                  %s509 = sphi %s444, %s444
                  %s510 = sphi %s439, %s439
                $region143: #{chebnet_forward.7} parent=132 // loop_header_branch
                  %507 = sbr.rel (%p505) target = $region147
                $region144: #{chebnet_forward.7} parent=132 // loop_body
                  %v511 = vld [vmem:[%s509] sm:$0xf]
                  %512 = vst [vmem:[%s510] sm:$0xf] %v511
                  %v513 = vld [vmem:[%s509 + $0x8] sm:$0xf]
                  %514 = vst [vmem:[%s510 + $0x4] sm:$0xf] %v513
                  %v515 = vld [vmem:[%s509 + $0x10] sm:$0xf]
                  %516 = vst [vmem:[%s510 + $0x8] sm:$0xf] %v515
                  %v517 = vld [vmem:[%s509 + $0x18] sm:$0xf]
                  %518 = vst [vmem:[%s510 + $0xc] sm:$0xf] %v517
                  %v519 = vld [vmem:[%s509 + $0x20] sm:$0xf]
                  %520 = vst [vmem:[%s510 + $0x10] sm:$0xf] %v519
                  %v521 = vld [vmem:[%s509 + $0x28] sm:$0xf]
                  %522 = vst [vmem:[%s510 + $0x14] sm:$0xf] %v521
                  %v523 = vld [vmem:[%s509 + $0x30] sm:$0xf]
                  %524 = vst [vmem:[%s510 + $0x18] sm:$0xf] %v523
                  %v525 = vld [vmem:[%s509 + $0x38] sm:$0xf]
                  %526 = vst [vmem:[%s510 + $0x1c] sm:$0xf] %v525
                  %v527 = vld [vmem:[%s509 + $0x40] sm:$0xf]
                  %528 = vst [vmem:[%s510 + $0x20] sm:$0xf] %v527
                  %v529 = vld [vmem:[%s509 + $0x48] sm:$0xf]
                  %530 = vst [vmem:[%s510 + $0x24] sm:$0xf] %v529
                  %v531 = vld [vmem:[%s509 + $0x50] sm:$0xf]
                  %532 = vst [vmem:[%s510 + $0x28] sm:$0xf] %v531
                  %v533 = vld [vmem:[%s509 + $0x58] sm:$0xf]
                  %534 = vst [vmem:[%s510 + $0x2c] sm:$0xf] %v533
                  %v535 = vld [vmem:[%s509 + $0x60] sm:$0xf]
                  %536 = vst [vmem:[%s510 + $0x30] sm:$0xf] %v535
                  %v537 = vld [vmem:[%s509 + $0x68] sm:$0xf]
                  %538 = vst [vmem:[%s510 + $0x34] sm:$0xf] %v537
                  %v539 = vld [vmem:[%s509 + $0x70] sm:$0xf]
                  %540 = vst [vmem:[%s510 + $0x38] sm:$0xf] %v539
                  %v541 = vld [vmem:[%s509 + $0x78] sm:$0xf]
                  %542 = vst [vmem:[%s510 + $0x3c] sm:$0xf] %v541
                $region145: #{chebnet_forward.7} parent=132 // loop_footer
                  %s508 = sadd.s32 1, %s504
                $region146: #{chebnet_forward.7} parent=132 // loop_footer_branch
                  %503 = sbr.rel target = $region142
                $region147: #{chebnet_forward.7} parent=132 // loop_exit
                  _
              $region133: #{chebnet_forward.7} parent=117 // pred_fallthru
                _
            $region118: #{chebnet_forward.7} parent=113 // pred_fallthru
              _
            // Predicated region
            $region119: #{chebnet_forward.7} parent=113 // pred_check
              _
            $region120: #{chebnet_forward.7} parent=113 // pred_check_branch
              %450 = sbr.rel (0) target = $region122
            $region121: #{chebnet_forward.7} parent=113 // pred_region
              loop: start=0, step=1, limit=1
              $region123: #{chebnet_forward.7} parent=121 // loop_pre_header
                _
              $region124: #{chebnet_forward.7} parent=121 // loop_header
                %s453 = sphi 0, %s457
                %p454 = scmp.ge.s32.totalorder %s453, 1
                %s458 = sphi %s444, %s444
                %s459 = sphi %s439, %s439
              $region125: #{chebnet_forward.7} parent=121 // loop_header_branch
                %456 = sbr.rel (%p454) target = $region129
              $region126: #{chebnet_forward.7} parent=121 // loop_body
                %v460 = vld [vmem:[%s458] sm:$0xf]
                %461 = vst [vmem:[%s459] sm:$0xf] %v460
                %v462 = vld [vmem:[%s458 + $0x8] sm:$0xf]
                %463 = vst [vmem:[%s459 + $0x4] sm:$0xf] %v462
                %v464 = vld [vmem:[%s458 + $0x10] sm:$0xf]
                %465 = vst [vmem:[%s459 + $0x8] sm:$0xf] %v464
                %v466 = vld [vmem:[%s458 + $0x18] sm:$0xf]
                %467 = vst [vmem:[%s459 + $0xc] sm:$0xf] %v466
                %v468 = vld [vmem:[%s458 + $0x20] sm:$0xf]
                %469 = vst [vmem:[%s459 + $0x10] sm:$0xf] %v468
                %v470 = vld [vmem:[%s458 + $0x28] sm:$0xf]
                %471 = vst [vmem:[%s459 + $0x14] sm:$0xf] %v470
                %v472 = vld [vmem:[%s458 + $0x30] sm:$0xf]
                %473 = vst [vmem:[%s459 + $0x18] sm:$0xf] %v472
                %v474 = vld [vmem:[%s458 + $0x38] sm:$0xf]
                %475 = vst [vmem:[%s459 + $0x1c] sm:$0xf] %v474
                %v476 = vld [vmem:[%s458 + $0x40] sm:$0xf]
                %477 = vst [vmem:[%s459 + $0x20] sm:$0xf] %v476
                %v478 = vld [vmem:[%s458 + $0x48] sm:$0xf]
                %479 = vst [vmem:[%s459 + $0x24] sm:$0xf] %v478
                %v480 = vld [vmem:[%s458 + $0x50] sm:$0xf]
                %481 = vst [vmem:[%s459 + $0x28] sm:$0xf] %v480
                %v482 = vld [vmem:[%s458 + $0x58] sm:$0xf]
                %483 = vst [vmem:[%s459 + $0x2c] sm:$0xf] %v482
                %v484 = vld [vmem:[%s458 + $0x60] sm:$0xf]
                %485 = vst [vmem:[%s459 + $0x30] sm:$0xf] %v484
                %v486 = vld [vmem:[%s458 + $0x68] sm:$0xf]
                %487 = vst [vmem:[%s459 + $0x34] sm:$0xf] %v486
                %v488 = vld [vmem:[%s458 + $0x70] sm:$0xf]
                %489 = vst [vmem:[%s459 + $0x38] sm:$0xf] %v488
                %v490 = vld [vmem:[%s458 + $0x78] sm:$0xf]
                %491 = vst [vmem:[%s459 + $0x3c] sm:$0xf] %v490
              $region127: #{chebnet_forward.7} parent=121 // loop_footer
                %s457 = sadd.s32 1, %s453
              $region128: #{chebnet_forward.7} parent=121 // loop_footer_branch
                %452 = sbr.rel target = $region124
              $region129: #{chebnet_forward.7} parent=121 // loop_exit
                _
            $region122: #{chebnet_forward.7} parent=113 // pred_fallthru
              _
          $region114: #{chebnet_forward.7} parent=109 // pred_fallthru
            _
          %543 = vnop
        $region110: #{chebnet_forward.7} parent=19 // pred_fallthru
          _
      $region20: #{chebnet_forward.7} parent=5 // pred_fallthru
        _
      %p544 = scmp.le.s32.totalorder 1, %s13
      %p545 = scmp.lt.s32.totalorder %s13, 5
      %p546 = pnand %p544, %p545
      %p547 = pneg %p546
      // Predicated region
      $region148: #{chebnet_forward.7} parent=5 // pred_check
        _
      $region149: #{chebnet_forward.7} parent=5 // pred_check_branch
        %549 = sbr.rel (%p546) target = $region151
      $region150: #{chebnet_forward.7} parent=5 // pred_region
        %s550 = ssub.s32 %s13, 1
        // Predicated region
        $region152: #{chebnet_forward.7} parent=150 // pred_check
          %p551 = pneg %p46
        $region153: #{chebnet_forward.7} parent=150 // pred_check_branch
          %553 = sbr.rel (%p551) target = $region155
        $region154: #{chebnet_forward.7} parent=150 // pred_region
          %554 = dma.done [#allocation4], 16
        $region155: #{chebnet_forward.7} parent=150 // pred_fallthru
          _
        %s555 = sand.u32 %s85, 1
        %s556 = sand.u32 %s85, 1
        %s557 = smul.addr %s556, 64
        %s558 = scalar_lea.vmem [#allocation5], %s557
        // Predicated region
        $region156: #{chebnet_forward.7} parent=150 // pred_check
          %p559 = pneg %p98
        $region157: #{chebnet_forward.7} parent=150 // pred_check_branch
          %561 = sbr.rel (%p559) target = $region159
        $region158: #{chebnet_forward.7} parent=150 // pred_region
          _
        $region159: #{chebnet_forward.7} parent=150 // pred_fallthru
          _
        %s562 = sand.u32 %s113, 1
        %s563 = sand.u32 %s113, 1
        %s564 = smul.addr %s563, 64
        %s565 = scalar_lea.vmem [#allocation6], %s564
        // Predicated region
        $region160: #{chebnet_forward.7} parent=150 // pred_check
          %p566 = pneg %p126
        $region161: #{chebnet_forward.7} parent=150 // pred_check_branch
          %568 = sbr.rel (%p566) target = $region163
        $region162: #{chebnet_forward.7} parent=150 // pred_region
          _
        $region163: #{chebnet_forward.7} parent=150 // pred_fallthru
          _
        %s569 = sand.u32 %s141, 1
        %s570 = sand.u32 %s141, 1
        %s571 = smul.addr %s570, 64
        %s572 = scalar_lea.vmem [#allocation7], %s571
        // Predicated region
        $region164: #{chebnet_forward.7} parent=150 // pred_check
          %p573 = pneg %p154
        $region165: #{chebnet_forward.7} parent=150 // pred_check_branch
          %575 = sbr.rel (%p573) target = $region167
        $region166: #{chebnet_forward.7} parent=150 // pred_region
          _
        $region167: #{chebnet_forward.7} parent=150 // pred_fallthru
          _
        %576 = sfence
        %p577 = pneg %p46
        %p578 = pneg %p43
        %s579 = smul.u32 16, %s22
        %p580 = scmp.lt.s32.totalorder %s579, 31
        %s581 = scalar_select %p580, %s579, 31
        %s582 = smul.addr %s581, 4
        %s583 = scalar_lea.vmem %s1, %s582
        %p584 = pneg %p72
        %p585 = pneg %p69
        %s586 = sand.u32 %s85, 1
        %s587 = sand.u32 %s85, 1
        %s588 = smul.addr %s587, 64
        %s589 = scalar_lea.vmem [#allocation5], %s588
        %p590 = pneg %p98
        %p591 = pneg %p95
        %s592 = sand.u32 %s113, 1
        %s593 = sand.u32 %s113, 1
        %s594 = smul.addr %s593, 64
        %s595 = scalar_lea.vmem [#allocation6], %s594
        %p596 = pneg %p126
        %p597 = pneg %p123
        %s598 = sand.u32 %s141, 1
        %s599 = sand.u32 %s141, 1
        %s600 = smul.addr %s599, 64
        %s601 = scalar_lea.vmem [#allocation7], %s600
        %p602 = pneg %p154
        %p603 = pneg %p151
        %p604 = pneg %p175
        %p605 = pneg %p172
        %s606 = smul.u32 16, %s22
        %p607 = scmp.lt.s32.totalorder %s606, 31
        %s608 = scalar_select %p607, %s606, 31
        %s609 = smul.addr %s608, 4
        %s610 = scalar_lea.vmem %s1, %s609
        %s611 = smul.u32 16, %s22
        %s612 = smul.u32 16, %s22
        %s613 = smul.u32 16, %s22
        %p615 = scmp.eq.s32.totalorder %s22, 0
        %p616 = scmp.eq.s32.totalorder %s23, 0
        %p617 = pnand %p615, %p616
        %p618 = pneg %p617
        // Predicated region
        $region168: #{chebnet_forward.7} parent=150 // pred_check
          _
        $region169: #{chebnet_forward.7} parent=150 // pred_check_branch
          %620 = sbr.rel (%p617) target = $region171
        $region170: #{chebnet_forward.7} parent=150 // pred_region
          %vm621 = vcmask 0
          %622 = vst.msk [vmem:[#allocation8] sm:$0x1] %vm621, 0.0
        $region171: #{chebnet_forward.7} parent=150 // pred_fallthru
          _
        %v623 = vld [vmem:[%s610] sm:$0xf]
        %v624 = vld [vmem:[%s610 + $0x4] sm:$0xf]
        %v625 = vld [vmem:[%s610 + $0x8] sm:$0xf]
        %v626 = vld [vmem:[%s610 + $0xc] sm:$0xf]
        %v627 = vld [vmem:[%s610 + $0x10] sm:$0xf]
        %v628 = vld [vmem:[%s610 + $0x14] sm:$0xf]
        %v629 = vld [vmem:[%s610 + $0x18] sm:$0xf]
        %v630 = vld [vmem:[%s610 + $0x1c] sm:$0xf]
        %v631 = vld [vmem:[%s610 + $0x20] sm:$0xf]
        %v632 = vld [vmem:[%s610 + $0x24] sm:$0xf]
        %v633 = vld [vmem:[%s610 + $0x28] sm:$0xf]
        %v634 = vld [vmem:[%s610 + $0x2c] sm:$0xf]
        %v635 = vld [vmem:[%s610 + $0x30] sm:$0xf]
        %v636 = vld [vmem:[%s610 + $0x34] sm:$0xf]
        %v637 = vld [vmem:[%s610 + $0x38] sm:$0xf]
        %v638 = vld [vmem:[%s610 + $0x3c] sm:$0xf]
        %v639 = vld [vmem:[%s558] sm:$0xf]
        %v640 = vld [vmem:[%s558 + $0x4] sm:$0xf]
        %v641 = vld [vmem:[%s558 + $0x8] sm:$0xf]
        %v642 = vld [vmem:[%s558 + $0xc] sm:$0xf]
        %v643 = vld [vmem:[%s558 + $0x10] sm:$0xf]
        %v644 = vld [vmem:[%s558 + $0x14] sm:$0xf]
        %v645 = vld [vmem:[%s558 + $0x18] sm:$0xf]
        %v646 = vld [vmem:[%s558 + $0x1c] sm:$0xf]
        %v647 = vld [vmem:[%s558 + $0x20] sm:$0xf]
        %v648 = vld [vmem:[%s558 + $0x24] sm:$0xf]
        %v649 = vld [vmem:[%s558 + $0x28] sm:$0xf]
        %v650 = vld [vmem:[%s558 + $0x2c] sm:$0xf]
        %v651 = vld [vmem:[%s558 + $0x30] sm:$0xf]
        %v652 = vld [vmem:[%s558 + $0x34] sm:$0xf]
        %v653 = vld [vmem:[%s558 + $0x38] sm:$0xf]
        %v654 = vld [vmem:[%s558 + $0x3c] sm:$0xf]
        %v671 = vunpack.c.l.b16 %v623
        %v672 = vunpack.c.l.b16 %v624
        %v673 = vunpack.c.l.b16 %v625
        %v674 = vunpack.c.l.b16 %v626
        %v675 = vunpack.c.l.b16 %v627
        %v676 = vunpack.c.l.b16 %v628
        %v677 = vunpack.c.l.b16 %v629
        %v678 = vunpack.c.l.b16 %v630
        %v679 = vunpack.c.l.b16 %v631
        %v680 = vunpack.c.l.b16 %v632
        %v681 = vunpack.c.l.b16 %v633
        %v682 = vunpack.c.l.b16 %v634
        %v683 = vunpack.c.l.b16 %v635
        %v684 = vunpack.c.l.b16 %v636
        %v685 = vunpack.c.l.b16 %v637
        %v686 = vunpack.c.l.b16 %v638
        %v687 = vpack.c.b16 %v672, %v671
        %v688 = vpack.c.b16 %v674, %v673
        %v689 = vpack.c.b16 %v676, %v675
        %v690 = vpack.c.b16 %v678, %v677
        %v691 = vpack.c.b16 %v680, %v679
        %v692 = vpack.c.b16 %v682, %v681
        %v693 = vpack.c.b16 %v684, %v683
        %v694 = vpack.c.b16 %v686, %v685
        %v719 = vunpack.c.l.b16 %v639
        %v720 = vunpack.c.l.b16 %v640
        %v721 = vunpack.c.l.b16 %v641
        %v722 = vunpack.c.l.b16 %v642
        %v723 = vunpack.c.l.b16 %v643
        %v724 = vunpack.c.l.b16 %v644
        %v725 = vunpack.c.l.b16 %v645
        %v726 = vunpack.c.l.b16 %v646
        %v727 = vunpack.c.l.b16 %v647
        %v728 = vunpack.c.l.b16 %v648
        %v729 = vunpack.c.l.b16 %v649
        %v730 = vunpack.c.l.b16 %v650
        %v731 = vunpack.c.l.b16 %v651
        %v732 = vunpack.c.l.b16 %v652
        %v733 = vunpack.c.l.b16 %v653
        %v734 = vunpack.c.l.b16 %v654
        %v735 = vpack.c.b16 %v720, %v719
        %v736 = vpack.c.b16 %v722, %v721
        %v737 = vpack.c.b16 %v724, %v723
        %v738 = vpack.c.b16 %v726, %v725
        %v739 = vpack.c.b16 %v728, %v727
        %v740 = vpack.c.b16 %v730, %v729
        %v741 = vpack.c.b16 %v732, %v731
        %v742 = vpack.c.b16 %v734, %v733
        %751 = vmatprep.subr.bf16.mxu0 0
        %752 = vmatpush1.bf16.msra.mxu0 %v735
        %753 = vmatprep.subr.bf16.mxu0 0
        %754 = vmatpush1.bf16.msra.mxu0 %v736
        %755 = vmatprep.subr.bf16.mxu0 0
        %756 = vmatpush1.bf16.msra.mxu0 %v737
        %757 = vmatprep.subr.bf16.mxu0 0
        %758 = vmatpush1.bf16.msra.mxu0 %v738
        %759 = vmatprep.subr.bf16.mxu0 0
        %760 = vmatpush1.bf16.msra.mxu0 %v739
        %761 = vmatprep.subr.bf16.mxu0 0
        %762 = vmatpush1.bf16.msra.mxu0 %v740
        %763 = vmatprep.subr.bf16.mxu0 0
        %764 = vmatpush1.bf16.msra.mxu0 %v741
        %765 = vmatprep.subr.bf16.mxu0 0
        %766 = vmatpush1.bf16.msra.mxu0 %v742
        %767 = vmatprep.subr.bf16.mxu0 0
        %768 = vmatpush1.bf16.msra.mxu0 0
        %769 = vmatprep.subr.bf16.mxu0 0
        %770 = vmatpush1.bf16.msra.mxu0 0
        %771 = vmatprep.subr.bf16.mxu0 0
        %772 = vmatpush1.bf16.msra.mxu0 0
        %773 = vmatprep.subr.bf16.mxu0 0
        %774 = vmatpush1.bf16.msra.mxu0 0
        %775 = vmatprep.subr.bf16.mxu0 0
        %776 = vmatpush1.bf16.msra.mxu0 0
        %777 = vmatprep.subr.bf16.mxu0 0
        %778 = vmatpush1.bf16.msra.mxu0 0
        %779 = vmatprep.subr.bf16.mxu0 0
        %780 = vmatpush1.bf16.msra.mxu0 0
        %781 = vmatprep.subr.bf16.mxu0 0
        %782 = vmatpush1.bf16.msra.mxu0 0
        %783 = vmatprep.mubr.bf16.mxu0 0
        %784 = vmatmul.mubr.bf16.gmra.mrb[0].mxu0 %v687
        %v785 = vpop.f32.mrb[0].mxu0
        %v786 = vadd.f32 0.0, %v785
        %v787 = vpop.f32.mrb[0].mxu0
        %v788 = vpop.f32.mrb[0].mxu0
        %v789 = vadd.f32 0.0, %v788
        %v790 = vpop.f32.mrb[0].mxu0
        %791 = vmatprep.mubr.bf16.mxu0 0
        %792 = vmatmul.mubr.bf16.gmra.mrb[0].mxu0 %v688
        %v793 = vpop.f32.mrb[0].mxu0
        %v794 = vadd.f32 0.0, %v793
        %v795 = vpop.f32.mrb[0].mxu0
        %v796 = vpop.f32.mrb[0].mxu0
        %v797 = vadd.f32 0.0, %v796
        %v798 = vpop.f32.mrb[0].mxu0
        %799 = vmatprep.mubr.bf16.mxu0 0
        %800 = vmatmul.mubr.bf16.gmra.mrb[0].mxu0 %v689
        %v801 = vpop.f32.mrb[0].mxu0
        %v802 = vadd.f32 0.0, %v801
        %v803 = vpop.f32.mrb[0].mxu0
        %v804 = vpop.f32.mrb[0].mxu0
        %v805 = vadd.f32 0.0, %v804
        %v806 = vpop.f32.mrb[0].mxu0
        %807 = vmatprep.mubr.bf16.mxu0 0
        %808 = vmatmul.mubr.bf16.gmra.mrb[0].mxu0 %v690
        %v809 = vpop.f32.mrb[0].mxu0
        %v810 = vadd.f32 0.0, %v809
        %v811 = vpop.f32.mrb[0].mxu0
        %v812 = vpop.f32.mrb[0].mxu0
        %v813 = vadd.f32 0.0, %v812
        %v814 = vpop.f32.mrb[0].mxu0
        %815 = vmatprep.mubr.bf16.mxu0 0
        %816 = vmatmul.mubr.bf16.gmra.mrb[0].mxu0 %v691
        %v817 = vpop.f32.mrb[0].mxu0
        %v818 = vadd.f32 0.0, %v817
        %v819 = vpop.f32.mrb[0].mxu0
        %v820 = vpop.f32.mrb[0].mxu0
        %v821 = vadd.f32 0.0, %v820
        %v822 = vpop.f32.mrb[0].mxu0
        %823 = vmatprep.mubr.bf16.mxu0 0
        %824 = vmatmul.mubr.bf16.gmra.mrb[0].mxu0 %v692
        %v825 = vpop.f32.mrb[0].mxu0
        %v826 = vadd.f32 0.0, %v825
        %v827 = vpop.f32.mrb[0].mxu0
        %v828 = vpop.f32.mrb[0].mxu0
        %v829 = vadd.f32 0.0, %v828
        %v830 = vpop.f32.mrb[0].mxu0
        %831 = vmatprep.mubr.bf16.mxu0 0
        %832 = vmatmul.mubr.bf16.gmra.mrb[0].mxu0 %v693
        %v833 = vpop.f32.mrb[0].mxu0
        %v834 = vadd.f32 0.0, %v833
        %v835 = vpop.f32.mrb[0].mxu0
        %v836 = vpop.f32.mrb[0].mxu0
        %v837 = vadd.f32 0.0, %v836
        %v838 = vpop.f32.mrb[0].mxu0
        %839 = vmatprep.mubr.bf16.mxu0 0
        %840 = vmatmul.mubr.bf16.gmra.mrb[0].mxu0 %v694
        %v841 = vpop.f32.mrb[0].mxu0
        %v842 = vadd.f32 0.0, %v841
        %v843 = vpop.f32.mrb[0].mxu0
        %v844 = vpop.f32.mrb[0].mxu0
        %v845 = vadd.f32 0.0, %v844
        %v846 = vpop.f32.mrb[0].mxu0
        %847 = vdwg.mxu0
        %v848 = vand.u32 2147483647, %v786
        %v849 = vand.u32 2147483647, %v789
        %v850 = vand.u32 2147483647, %v794
        %v851 = vand.u32 2147483647, %v797
        %v852 = vand.u32 2147483647, %v802
        %v853 = vand.u32 2147483647, %v805
        %v854 = vand.u32 2147483647, %v810
        %v855 = vand.u32 2147483647, %v813
        %v856 = vand.u32 2147483647, %v818
        %v857 = vand.u32 2147483647, %v821
        %v858 = vand.u32 2147483647, %v826
        %v859 = vand.u32 2147483647, %v829
        %v860 = vand.u32 2147483647, %v834
        %v861 = vand.u32 2147483647, %v837
        %v862 = vand.u32 2147483647, %v842
        %v863 = vand.u32 2147483647, %v845
        %v864 = vsub.f32 0.0, %v848
        %v865 = vsub.f32 0.0, %v849
        %v866 = vsub.f32 0.0, %v850
        %v867 = vsub.f32 0.0, %v851
        %v868 = vsub.f32 0.0, %v852
        %v869 = vsub.f32 0.0, %v853
        %v870 = vsub.f32 0.0, %v854
        %v871 = vsub.f32 0.0, %v855
        %v872 = vsub.f32 0.0, %v856
        %v873 = vsub.f32 0.0, %v857
        %v874 = vsub.f32 0.0, %v858
        %v875 = vsub.f32 0.0, %v859
        %v876 = vsub.f32 0.0, %v860
        %v877 = vsub.f32 0.0, %v861
        %v878 = vsub.f32 0.0, %v862
        %v879 = vsub.f32 0.0, %v863
        %v880 = vmul.f32 %v864, 1.442695
        %v881 = vpow.pop %v880
        %v882 = vmul.f32 %v865, 1.442695
        %v883 = vpow.pop %v882
        %v884 = vmul.f32 %v866, 1.442695
        %v885 = vpow.pop %v884
        %v886 = vmul.f32 %v867, 1.442695
        %v887 = vpow.pop %v886
        %v888 = vmul.f32 %v868, 1.442695
        %v889 = vpow.pop %v888
        %v890 = vmul.f32 %v869, 1.442695
        %v891 = vpow.pop %v890
        %v892 = vmul.f32 %v870, 1.442695
        %v893 = vpow.pop %v892
        %v894 = vmul.f32 %v871, 1.442695
        %v895 = vpow.pop %v894
        %v896 = vmul.f32 %v872, 1.442695
        %v897 = vpow.pop %v896
        %v898 = vmul.f32 %v873, 1.442695
        %v899 = vpow.pop %v898
        %v900 = vmul.f32 %v874, 1.442695
        %v901 = vpow.pop %v900
        %v902 = vmul.f32 %v875, 1.442695
        %v903 = vpow.pop %v902
        %v904 = vmul.f32 %v876, 1.442695
        %v905 = vpow.pop %v904
        %v906 = vmul.f32 %v877, 1.442695
        %v907 = vpow.pop %v906
        %v908 = vmul.f32 %v878, 1.442695
        %v909 = vpow.pop %v908
        %v910 = vmul.f32 %v879, 1.442695
        %v911 = vpow.pop %v910
        %v912 = vadd.f32 %v881, 1.0
        %v913 = vadd.f32 %v883, 1.0
        %v914 = vadd.f32 %v885, 1.0
        %v915 = vadd.f32 %v887, 1.0
        %v916 = vadd.f32 %v889, 1.0
        %v917 = vadd.f32 %v891, 1.0
        %v918 = vadd.f32 %v893, 1.0
        %v919 = vadd.f32 %v895, 1.0
        %v920 = vadd.f32 %v897, 1.0
        %v921 = vadd.f32 %v899, 1.0
        %v922 = vadd.f32 %v901, 1.0
        %v923 = vadd.f32 %v903, 1.0
        %v924 = vadd.f32 %v905, 1.0
        %v925 = vadd.f32 %v907, 1.0
        %v926 = vadd.f32 %v909, 1.0
        %v927 = vadd.f32 %v911, 1.0
        %v928 = vlog2.pop %v912
        %v929 = vmul.f32 %v928, 0.6931472
        %v930 = vlog2.pop %v913
        %v931 = vmul.f32 %v930, 0.6931472
        %v932 = vlog2.pop %v914
        %v933 = vmul.f32 %v932, 0.6931472
        %v934 = vlog2.pop %v915
        %v935 = vmul.f32 %v934, 0.6931472
        %v936 = vlog2.pop %v916
        %v937 = vmul.f32 %v936, 0.6931472
        %v938 = vlog2.pop %v917
        %v939 = vmul.f32 %v938, 0.6931472
        %v940 = vlog2.pop %v918
        %v941 = vmul.f32 %v940, 0.6931472
        %v942 = vlog2.pop %v919
        %v943 = vmul.f32 %v942, 0.6931472
        %v944 = vlog2.pop %v920
        %v945 = vmul.f32 %v944, 0.6931472
        %v946 = vlog2.pop %v921
        %v947 = vmul.f32 %v946, 0.6931472
        %v948 = vlog2.pop %v922
        %v949 = vmul.f32 %v948, 0.6931472
        %v950 = vlog2.pop %v923
        %v951 = vmul.f32 %v950, 0.6931472
        %v952 = vlog2.pop %v924
        %v953 = vmul.f32 %v952, 0.6931472
        %v954 = vlog2.pop %v925
        %v955 = vmul.f32 %v954, 0.6931472
        %v956 = vlog2.pop %v926
        %v957 = vmul.f32 %v956, 0.6931472
        %v958 = vlog2.pop %v927
        %v959 = vmul.f32 %v958, 0.6931472
        %v960 = vld [vmem:[%s565] sm:$0xf]
        %v961 = vld [vmem:[%s565 + $0x4] sm:$0xf]
        %v962 = vld [vmem:[%s565 + $0x8] sm:$0xf]
        %v963 = vld [vmem:[%s565 + $0xc] sm:$0xf]
        %v964 = vld [vmem:[%s565 + $0x10] sm:$0xf]
        %v965 = vld [vmem:[%s565 + $0x14] sm:$0xf]
        %v966 = vld [vmem:[%s565 + $0x18] sm:$0xf]
        %v967 = vld [vmem:[%s565 + $0x1c] sm:$0xf]
        %v968 = vld [vmem:[%s565 + $0x20] sm:$0xf]
        %v969 = vld [vmem:[%s565 + $0x24] sm:$0xf]
        %v970 = vld [vmem:[%s565 + $0x28] sm:$0xf]
        %v971 = vld [vmem:[%s565 + $0x2c] sm:$0xf]
        %v972 = vld [vmem:[%s565 + $0x30] sm:$0xf]
        %v973 = vld [vmem:[%s565 + $0x34] sm:$0xf]
        %v974 = vld [vmem:[%s565 + $0x38] sm:$0xf]
        %v975 = vld [vmem:[%s565 + $0x3c] sm:$0xf]
        %v976 = vunpack.c.l.bf16 %v960
        %v977 = vunpack.c.l.bf16 %v961
        %v978 = vunpack.c.l.bf16 %v962
        %v979 = vunpack.c.l.bf16 %v963
        %v980 = vunpack.c.l.bf16 %v964
        %v981 = vunpack.c.l.bf16 %v965
        %v982 = vunpack.c.l.bf16 %v966
        %v983 = vunpack.c.l.bf16 %v967
        %v984 = vunpack.c.l.bf16 %v968
        %v985 = vunpack.c.l.bf16 %v969
        %v986 = vunpack.c.l.bf16 %v970
        %v987 = vunpack.c.l.bf16 %v971
        %v988 = vunpack.c.l.bf16 %v972
        %v989 = vunpack.c.l.bf16 %v973
        %v990 = vunpack.c.l.bf16 %v974
        %v991 = vunpack.c.l.bf16 %v975
        %v992 = vsub.f32 0.0, %v786
        %v993 = vsub.f32 0.0, %v789
        %v994 = vsub.f32 0.0, %v794
        %v995 = vsub.f32 0.0, %v797
        %v996 = vsub.f32 0.0, %v802
        %v997 = vsub.f32 0.0, %v805
        %v998 = vsub.f32 0.0, %v810
        %v999 = vsub.f32 0.0, %v813
        %v1000 = vsub.f32 0.0, %v818
        %v1001 = vsub.f32 0.0, %v821
        %v1002 = vsub.f32 0.0, %v826
        %v1003 = vsub.f32 0.0, %v829
        %v1004 = vsub.f32 0.0, %v834
        %v1005 = vsub.f32 0.0, %v837
        %v1006 = vsub.f32 0.0, %v842
        %v1007 = vsub.f32 0.0, %v845
        %v1008 = vmax.f32 %v992, 0.0
        %v1009 = vmax.f32 %v993, 0.0
        %v1010 = vmax.f32 %v994, 0.0
        %v1011 = vmax.f32 %v995, 0.0
        %v1012 = vmax.f32 %v996, 0.0
        %v1013 = vmax.f32 %v997, 0.0
        %v1014 = vmax.f32 %v998, 0.0
        %v1015 = vmax.f32 %v999, 0.0
        %v1016 = vmax.f32 %v1000, 0.0
        %v1017 = vmax.f32 %v1001, 0.0
        %v1018 = vmax.f32 %v1002, 0.0
        %v1019 = vmax.f32 %v1003, 0.0
        %v1020 = vmax.f32 %v1004, 0.0
        %v1021 = vmax.f32 %v1005, 0.0
        %v1022 = vmax.f32 %v1006, 0.0
        %v1023 = vmax.f32 %v1007, 0.0
        %v1024 = vadd.f32 %v1008, %v929
        %v1025 = vadd.f32 %v1009, %v931
        %v1026 = vadd.f32 %v1010, %v933
        %v1027 = vadd.f32 %v1011, %v935
        %v1028 = vadd.f32 %v1012, %v937
        %v1029 = vadd.f32 %v1013, %v939
        %v1030 = vadd.f32 %v1014, %v941
        %v1031 = vadd.f32 %v1015, %v943
        %v1032 = vadd.f32 %v1016, %v945
        %v1033 = vadd.f32 %v1017, %v947
        %v1034 = vadd.f32 %v1018, %v949
        %v1035 = vadd.f32 %v1019, %v951
        %v1036 = vadd.f32 %v1020, %v953
        %v1037 = vadd.f32 %v1021, %v955
        %v1038 = vadd.f32 %v1022, %v957
        %v1039 = vadd.f32 %v1023, %v959
        %v1040 = vmul.f32 %v976, %v1024
        %v1041 = vmul.f32 %v977, %v1025
        %v1042 = vmul.f32 %v978, %v1026
        %v1043 = vmul.f32 %v979, %v1027
        %v1044 = vmul.f32 %v980, %v1028
        %v1045 = vmul.f32 %v981, %v1029
        %v1046 = vmul.f32 %v982, %v1030
        %v1047 = vmul.f32 %v983, %v1031
        %v1048 = vmul.f32 %v984, %v1032
        %v1049 = vmul.f32 %v985, %v1033
        %v1050 = vmul.f32 %v986, %v1034
        %v1051 = vmul.f32 %v987, %v1035
        %v1052 = vmul.f32 %v988, %v1036
        %v1053 = vmul.f32 %v989, %v1037
        %v1054 = vmul.f32 %v990, %v1038
        %v1055 = vmul.f32 %v991, %v1039
        %v1056 = vld [vmem:[%s572] sm:$0xf]
        %v1057 = vld [vmem:[%s572 + $0x4] sm:$0xf]
        %v1058 = vld [vmem:[%s572 + $0x8] sm:$0xf]
        %v1059 = vld [vmem:[%s572 + $0xc] sm:$0xf]
        %v1060 = vld [vmem:[%s572 + $0x10] sm:$0xf]
        %v1061 = vld [vmem:[%s572 + $0x14] sm:$0xf]
        %v1062 = vld [vmem:[%s572 + $0x18] sm:$0xf]
        %v1063 = vld [vmem:[%s572 + $0x1c] sm:$0xf]
        %v1064 = vld [vmem:[%s572 + $0x20] sm:$0xf]
        %v1065 = vld [vmem:[%s572 + $0x24] sm:$0xf]
        %v1066 = vld [vmem:[%s572 + $0x28] sm:$0xf]
        %v1067 = vld [vmem:[%s572 + $0x2c] sm:$0xf]
        %v1068 = vld [vmem:[%s572 + $0x30] sm:$0xf]
        %v1069 = vld [vmem:[%s572 + $0x34] sm:$0xf]
        %v1070 = vld [vmem:[%s572 + $0x38] sm:$0xf]
        %v1071 = vld [vmem:[%s572 + $0x3c] sm:$0xf]
        %v1072 = vunpack.c.l.bf16 %v1056
        %v1073 = vunpack.c.l.bf16 %v1057
        %v1074 = vunpack.c.l.bf16 %v1058
        %v1075 = vunpack.c.l.bf16 %v1059
        %v1076 = vunpack.c.l.bf16 %v1060
        %v1077 = vunpack.c.l.bf16 %v1061
        %v1078 = vunpack.c.l.bf16 %v1062
        %v1079 = vunpack.c.l.bf16 %v1063
        %v1080 = vunpack.c.l.bf16 %v1064
        %v1081 = vunpack.c.l.bf16 %v1065
        %v1082 = vunpack.c.l.bf16 %v1066
        %v1083 = vunpack.c.l.bf16 %v1067
        %v1084 = vunpack.c.l.bf16 %v1068
        %v1085 = vunpack.c.l.bf16 %v1069
        %v1086 = vunpack.c.l.bf16 %v1070
        %v1087 = vunpack.c.l.bf16 %v1071
        %v1088 = vmax.f32 %v786, 0.0
        %v1089 = vmax.f32 %v789, 0.0
        %v1090 = vmax.f32 %v794, 0.0
        %v1091 = vmax.f32 %v797, 0.0
        %v1092 = vmax.f32 %v802, 0.0
        %v1093 = vmax.f32 %v805, 0.0
        %v1094 = vmax.f32 %v810, 0.0
        %v1095 = vmax.f32 %v813, 0.0
        %v1096 = vmax.f32 %v818, 0.0
        %v1097 = vmax.f32 %v821, 0.0
        %v1098 = vmax.f32 %v826, 0.0
        %v1099 = vmax.f32 %v829, 0.0
        %v1100 = vmax.f32 %v834, 0.0
        %v1101 = vmax.f32 %v837, 0.0
        %v1102 = vmax.f32 %v842, 0.0
        %v1103 = vmax.f32 %v845, 0.0
        %v1104 = vadd.f32 %v1088, %v929
        %v1105 = vadd.f32 %v1089, %v931
        %v1106 = vadd.f32 %v1090, %v933
        %v1107 = vadd.f32 %v1091, %v935
        %v1108 = vadd.f32 %v1092, %v937
        %v1109 = vadd.f32 %v1093, %v939
        %v1110 = vadd.f32 %v1094, %v941
        %v1111 = vadd.f32 %v1095, %v943
        %v1112 = vadd.f32 %v1096, %v945
        %v1113 = vadd.f32 %v1097, %v947
        %v1114 = vadd.f32 %v1098, %v949
        %v1115 = vadd.f32 %v1099, %v951
        %v1116 = vadd.f32 %v1100, %v953
        %v1117 = vadd.f32 %v1101, %v955
        %v1118 = vadd.f32 %v1102, %v957
        %v1119 = vadd.f32 %v1103, %v959
        %v1120 = vmul.f32 %v1072, %v1104
        %v1121 = vmul.f32 %v1073, %v1105
        %v1122 = vmul.f32 %v1074, %v1106
        %v1123 = vmul.f32 %v1075, %v1107
        %v1124 = vmul.f32 %v1076, %v1108
        %v1125 = vmul.f32 %v1077, %v1109
        %v1126 = vmul.f32 %v1078, %v1110
        %v1127 = vmul.f32 %v1079, %v1111
        %v1128 = vmul.f32 %v1080, %v1112
        %v1129 = vmul.f32 %v1081, %v1113
        %v1130 = vmul.f32 %v1082, %v1114
        %v1131 = vmul.f32 %v1083, %v1115
        %v1132 = vmul.f32 %v1084, %v1116
        %v1133 = vmul.f32 %v1085, %v1117
        %v1134 = vmul.f32 %v1086, %v1118
        %v1135 = vmul.f32 %v1087, %v1119
        %v1136 = vld [vmem:[#allocation8] sm:$0x1]
        %1137 = vadd.xlane.f32.xlu0 %v1040
        %v1138 = vpop.xlane.xlu0 %1137
        %1139 = vadd.xlane.f32.xlu0 %v1041
        %v1140 = vpop.xlane.xlu0 %1139
        %1141 = vadd.xlane.f32.xlu0 %v1042
        %v1142 = vpop.xlane.xlu0 %1141
        %1143 = vadd.xlane.f32.xlu0 %v1043
        %v1144 = vpop.xlane.xlu0 %1143
        %1145 = vadd.xlane.f32.xlu0 %v1044
        %v1146 = vpop.xlane.xlu0 %1145
        %1147 = vadd.xlane.f32.xlu0 %v1045
        %v1148 = vpop.xlane.xlu0 %1147
        %1149 = vadd.xlane.f32.xlu0 %v1046
        %v1150 = vpop.xlane.xlu0 %1149
        %1151 = vadd.xlane.f32.xlu0 %v1047
        %v1152 = vpop.xlane.xlu0 %1151
        %1153 = vadd.xlane.f32.xlu0 %v1048
        %v1154 = vpop.xlane.xlu0 %1153
        %1155 = vadd.xlane.f32.xlu0 %v1049
        %v1156 = vpop.xlane.xlu0 %1155
        %1157 = vadd.xlane.f32.xlu0 %v1050
        %v1158 = vpop.xlane.xlu0 %1157
        %1159 = vadd.xlane.f32.xlu0 %v1051
        %v1160 = vpop.xlane.xlu0 %1159
        %1161 = vadd.xlane.f32.xlu0 %v1052
        %v1162 = vpop.xlane.xlu0 %1161
        %1163 = vadd.xlane.f32.xlu0 %v1053
        %v1164 = vpop.xlane.xlu0 %1163
        %1165 = vadd.xlane.f32.xlu0 %v1054
        %v1166 = vpop.xlane.xlu0 %1165
        %1167 = vadd.xlane.f32.xlu0 %v1055
        %v1168 = vpop.xlane.xlu0 %1167
        %v1169 = vadd.f32 %v1138, %v1140
        %v1170 = vadd.f32 %v1169, %v1142
        %v1171 = vadd.f32 %v1170, %v1144
        %v1172 = vadd.f32 %v1171, %v1146
        %v1173 = vadd.f32 %v1172, %v1148
        %v1174 = vadd.f32 %v1173, %v1150
        %v1175 = vadd.f32 %v1174, %v1152
        %v1176 = vadd.f32 %v1175, %v1154
        %v1177 = vadd.f32 %v1176, %v1156
        %v1178 = vadd.f32 %v1177, %v1158
        %v1179 = vadd.f32 %v1178, %v1160
        %v1180 = vadd.f32 %v1179, %v1162
        %v1181 = vadd.f32 %v1180, %v1164
        %v1182 = vadd.f32 %v1181, %v1166
        %v1183 = vadd.f32 %v1182, %v1168
        %v1184 = vrot.slane %v1183, 4
        %v1185 = vadd.f32 %v1183, %v1184
        %v1186 = vrot.slane %v1185, 2
        %v1187 = vadd.f32 %v1185, %v1186
        %v1188 = vrot.slane %v1187, 1
        %v1189 = vadd.f32 %v1187, %v1188
        %s1190 = sld [smem:[#allocation2]]
        %v1191 = vstv %s1190
        %v1192 = vmul.f32 %v1189, %v1191
        %1193 = vadd.xlane.f32.xlu0 %v1120
        %v1194 = vpop.xlane.xlu0 %1193
        %1195 = vadd.xlane.f32.xlu0 %v1121
        %v1196 = vpop.xlane.xlu0 %1195
        %1197 = vadd.xlane.f32.xlu0 %v1122
        %v1198 = vpop.xlane.xlu0 %1197
        %1199 = vadd.xlane.f32.xlu0 %v1123
        %v1200 = vpop.xlane.xlu0 %1199
        %1201 = vadd.xlane.f32.xlu0 %v1124
        %v1202 = vpop.xlane.xlu0 %1201
        %1203 = vadd.xlane.f32.xlu0 %v1125
        %v1204 = vpop.xlane.xlu0 %1203
        %1205 = vadd.xlane.f32.xlu0 %v1126
        %v1206 = vpop.xlane.xlu0 %1205
        %1207 = vadd.xlane.f32.xlu0 %v1127
        %v1208 = vpop.xlane.xlu0 %1207
        %1209 = vadd.xlane.f32.xlu0 %v1128
        %v1210 = vpop.xlane.xlu0 %1209
        %1211 = vadd.xlane.f32.xlu0 %v1129
        %v1212 = vpop.xlane.xlu0 %1211
        %1213 = vadd.xlane.f32.xlu0 %v1130
        %v1214 = vpop.xlane.xlu0 %1213
        %1215 = vadd.xlane.f32.xlu0 %v1131
        %v1216 = vpop.xlane.xlu0 %1215
        %1217 = vadd.xlane.f32.xlu0 %v1132
        %v1218 = vpop.xlane.xlu0 %1217
        %1219 = vadd.xlane.f32.xlu0 %v1133
        %v1220 = vpop.xlane.xlu0 %1219
        %1221 = vadd.xlane.f32.xlu0 %v1134
        %v1222 = vpop.xlane.xlu0 %1221
        %1223 = vadd.xlane.f32.xlu0 %v1135
        %v1224 = vpop.xlane.xlu0 %1223
        %v1225 = vadd.f32 %v1194, %v1196
        %v1226 = vadd.f32 %v1225, %v1198
        %v1227 = vadd.f32 %v1226, %v1200
        %v1228 = vadd.f32 %v1227, %v1202
        %v1229 = vadd.f32 %v1228, %v1204
        %v1230 = vadd.f32 %v1229, %v1206
        %v1231 = vadd.f32 %v1230, %v1208
        %v1232 = vadd.f32 %v1231, %v1210
        %v1233 = vadd.f32 %v1232, %v1212
        %v1234 = vadd.f32 %v1233, %v1214
        %v1235 = vadd.f32 %v1234, %v1216
        %v1236 = vadd.f32 %v1235, %v1218
        %v1237 = vadd.f32 %v1236, %v1220
        %v1238 = vadd.f32 %v1237, %v1222
        %v1239 = vadd.f32 %v1238, %v1224
        %v1240 = vrot.slane %v1239, 4
        %v1241 = vadd.f32 %v1239, %v1240
        %v1242 = vrot.slane %v1241, 2
        %v1243 = vadd.f32 %v1241, %v1242
        %v1244 = vrot.slane %v1243, 1
        %v1245 = vadd.f32 %v1243, %v1244
        %s1246 = sld [smem:[#allocation2 + $0x1]]
        %v1247 = vstv %s1246
        %v1248 = vmul.f32 %v1245, %v1247
        %v1249 = vadd.f32 %v1192, %v1248
        %v1250 = vadd.f32 %v1136, %v1249
        %vm1251 = vcmask 0
        %1252 = vst.msk [vmem:[#allocation8] sm:$0x1] %vm1251, %v1250
        // Predicated region
        $region172: #{chebnet_forward.7} parent=150 // pred_check
          %p1253 = pneg %p172
        $region173: #{chebnet_forward.7} parent=150 // pred_check_branch
          %1255 = sbr.rel (%p1253) target = $region175
        $region174: #{chebnet_forward.7} parent=150 // pred_region
          %s1257 = ssub.s32 16, 16
          %1258 = vsyncadd [#allocation3], %s1257
          %s1260 = sshll.u32 [#allocation8], 4
          %s1261 = int_to_ptr.vmem [resolvable:$true] %s1260
          %1263 = dma.vmem_to_hbm [thread:$0]  %s1261, 16, %s5, [#allocation3]
        $region175: #{chebnet_forward.7} parent=150 // pred_fallthru
          _
        // Predicated region
        $region176: #{chebnet_forward.7} parent=150 // pred_check
          %p1264 = pneg %p172
        $region177: #{chebnet_forward.7} parent=150 // pred_check_branch
          %1266 = sbr.rel (%p1264) target = $region179
        $region178: #{chebnet_forward.7} parent=150 // pred_region
          %1267 = dma.done [#allocation3], 16
        $region179: #{chebnet_forward.7} parent=150 // pred_fallthru
          _
      $region151: #{chebnet_forward.7} parent=5 // pred_fallthru
        _
      %p1268 = scmp.le.s32.totalorder 2, %s13
      // Predicated region
      $region180: #{chebnet_forward.7} parent=5 // pred_check
        %p1269 = pneg %p1268
      $region181: #{chebnet_forward.7} parent=5 // pred_check_branch
        %1271 = sbr.rel (%p1269) target = $region183
      $region182: #{chebnet_forward.7} parent=5 // pred_region
        %s1272 = ssub.s32 %s13, 2
      $region183: #{chebnet_forward.7} parent=5 // pred_fallthru
        _
    $region6: #{chebnet_forward.7} parent=1 // loop_footer
      %s17 = sadd.s32 1, %s13
    $region7: #{chebnet_forward.7} parent=1 // loop_footer_branch
      %12 = sbr.rel target = $region3
    $region8: #{chebnet_forward.7} parent=1 // loop_exit
      _
    %1273 = vsyncpa [#allocation3], 1
    %s1274 = scalar_lea.sflag [#allocation3], 1
    %1275 = vsyncpa %s1274, 1
    %1276 = vsyncpa [#allocation4], 1
    %s1277 = scalar_lea.sflag [#allocation4], 1
    %1278 = vsyncpa %s1277, 1

// kernel: chebnet_forward.6
$region0: #{chebnet_forward.6}
  #allocation0 [shape = 'u32[]', space=smem, size = 0x4, offset = 0x4, fixed_abs, tag = 'smem constant byte address 0x4 - core index']
  #allocation1 [shape = 'u32[144,128]{1,0:T(1,128)}', space=vmem, size = 0x12000, scoped, tag = 'internal scratch']
  %s0 = inlined_call_operand.vmem [shape: bf16[256,128], index: 0, kind: input, shape index: {}, may-alias: {0,1}]
  %s1 = inlined_call_operand.vmem [shape: bf16[256,128], index: 1, kind: input, shape index: {}, may-alias: {0,1}]
  %s2 = inlined_call_operand.vmem [shape: bf16[256,256], index: 2, kind: input, shape index: {}]
  %s3 = inlined_call_operand.vmem [shape: bf16[256,128], index: 3, kind: input, shape index: {}]
  %s4 = inlined_call_operand.vmem [shape: f32[1,128], index: 4, kind: input, shape index: {}]
  %s5 = inlined_call_operand.vmem [shape: f32[256,128], index: 5, kind: output, shape index: {}]
  %s6 = sld [smem:[#allocation0]]
  $region53: #{chebnet_forward.6} parent=0
    _
  %s8 = ssub.s32 1, %s6
  %s9 = scalar_select 0, %s8, %s6
  loop: start=0, step=1, limit=4
  $region2: #{chebnet_forward.6} parent=0 // loop_pre_header
    _
  $region3: #{chebnet_forward.6} parent=0 // loop_header
    %s11 = sphi 0, %s15
    %p12 = scmp.ge.s32.totalorder %s11, 4
    %s19 = sphi 0, %s19
    %s21 = sphi 0, %s19
    %s22 = sphi 0, %s21
    %s36 = sphi 0, %s22
    %s42 = sphi 0, %s44
    %s45 = sphi 0, %s42
    %s46 = sphi 0, %s45
    %s62 = sphi 0, %s46
    %s68 = sphi 0, %s70
    %s71 = sphi 0, %s68
    %s72 = sphi 0, %s71
    %s88 = sphi 0, %s72
    %s92 = sphi 0, %s92
    %s94 = sphi 0, %s92
    %s95 = sphi 0, %s94
    %s109 = sphi 0, %s95
    %s113 = sphi 0, %s113
    %s115 = sphi 0, %s113
    %s116 = sphi 0, %s115
    %s130 = sphi 0, %s116
    %s136 = sphi 0, %s138
    %s139 = sphi 0, %s136
    %s140 = sphi 0, %s139
    %s156 = sphi 0, %s140
  $region4: #{chebnet_forward.6} parent=0 // loop_header_branch
    %14 = sbr.rel (%p12) target = $region8
  $region5: #{chebnet_forward.6} parent=0 // loop_body
    %s16 = ssub.s32 %s11, 1
    %s17 = ssub.s32 %s11, 2
    %s18 = sadd.s32 %s11, 1
    %s20 = sadd.s32 %s19, 1
    %p23 = scmp.eq.s32.totalorder %s11, 1
    %p24 = scmp.ne.s32.totalorder %s19, %s21
    %p25 = scmp.eq.s32.totalorder %s11, 0
    %p26 = por %p24, %p25
    %p27 = scmp.ne.s32.totalorder %s19, %s21
    %p28 = scmp.eq.s32.totalorder %s16, 1
    %p29 = por %p27, %p28
    %p30 = scmp.ne.s32.totalorder %s21, %s22
    %p31 = scmp.eq.s32.totalorder %s16, 0
    %p32 = por %p30, %p31
    %p33 = scmp.ne.s32.totalorder %s21, %s22
    %p34 = scmp.eq.s32.totalorder %s17, 1
    %p35 = por %p33, %p34
    %p37 = scmp.ne.s32.totalorder %s22, %s36
    %p38 = scmp.eq.s32.totalorder %s17, 0
    %p39 = por %p37, %p38
    %s40 = ssub.s32 %s11, %s18
    %p41 = scmp.eq.s32.totalorder %s40, 0
    %s43 = sadd.s32 %s42, 1
    %s44 = scalar_select %p41, %s42, %s43
    %p47 = pneg %p41
    %p48 = scmp.eq.s32.totalorder %s11, 1
    %p49 = por %p47, %p48
    %p50 = scmp.ne.s32.totalorder %s42, %s45
    %p51 = scmp.eq.s32.totalorder %s11, 0
    %p52 = por %p50, %p51
    %p53 = scmp.ne.s32.totalorder %s42, %s45
    %p54 = scmp.eq.s32.totalorder %s16, 1
    %p55 = por %p53, %p54
    %p56 = scmp.ne.s32.totalorder %s45, %s46
    %p57 = scmp.eq.s32.totalorder %s16, 0
    %p58 = por %p56, %p57
    %p59 = scmp.ne.s32.totalorder %s45, %s46
    %p60 = scmp.eq.s32.totalorder %s17, 1
    %p61 = por %p59, %p60
    %p63 = scmp.ne.s32.totalorder %s46, %s62
    %p64 = scmp.eq.s32.totalorder %s17, 0
    %p65 = por %p63, %p64
    %s66 = ssub.s32 %s11, %s18
    %p67 = scmp.eq.s32.totalorder %s66, 0
    %s69 = sadd.s32 %s68, 1
    %s70 = scalar_select %p67, %s68, %s69
    %p73 = pneg %p67
    %p74 = scmp.eq.s32.totalorder %s11, 1
    %p75 = por %p73, %p74
    %p76 = scmp.ne.s32.totalorder %s68, %s71
    %p77 = scmp.eq.s32.totalorder %s11, 0
    %p78 = por %p76, %p77
    %p79 = scmp.ne.s32.totalorder %s68, %s71
    %p80 = scmp.eq.s32.totalorder %s16, 1
    %p81 = por %p79, %p80
    %p82 = scmp.ne.s32.totalorder %s71, %s72
    %p83 = scmp.eq.s32.totalorder %s16, 0
    %p84 = por %p82, %p83
    %p85 = scmp.ne.s32.totalorder %s71, %s72
    %p86 = scmp.eq.s32.totalorder %s17, 1
    %p87 = por %p85, %p86
    %p89 = scmp.ne.s32.totalorder %s72, %s88
    %p90 = scmp.eq.s32.totalorder %s17, 0
    %p91 = por %p89, %p90
    %s93 = sadd.s32 %s92, 1
    %p96 = scmp.eq.s32.totalorder %s11, 1
    %p97 = scmp.ne.s32.totalorder %s92, %s94
    %p98 = scmp.eq.s32.totalorder %s11, 0
    %p99 = por %p97, %p98
    %p100 = scmp.ne.s32.totalorder %s92, %s94
    %p101 = scmp.eq.s32.totalorder %s16, 1
    %p102 = por %p100, %p101
    %p103 = scmp.ne.s32.totalorder %s94, %s95
    %p104 = scmp.eq.s32.totalorder %s16, 0
    %p105 = por %p103, %p104
    %p106 = scmp.ne.s32.totalorder %s94, %s95
    %p107 = scmp.eq.s32.totalorder %s17, 1
    %p108 = por %p106, %p107
    %p110 = scmp.ne.s32.totalorder %s95, %s109
    %p111 = scmp.eq.s32.totalorder %s17, 0
    %p112 = por %p110, %p111
    %s114 = sadd.s32 %s113, 1
    %p117 = scmp.eq.s32.totalorder %s11, 1
    %p118 = scmp.ne.s32.totalorder %s113, %s115
    %p119 = scmp.eq.s32.totalorder %s11, 0
    %p120 = por %p118, %p119
    %p121 = scmp.ne.s32.totalorder %s113, %s115
    %p122 = scmp.eq.s32.totalorder %s16, 1
    %p123 = por %p121, %p122
    %p124 = scmp.ne.s32.totalorder %s115, %s116
    %p125 = scmp.eq.s32.totalorder %s16, 0
    %p126 = por %p124, %p125
    %p127 = scmp.ne.s32.totalorder %s115, %s116
    %p128 = scmp.eq.s32.totalorder %s17, 1
    %p129 = por %p127, %p128
    %p131 = scmp.ne.s32.totalorder %s116, %s130
    %p132 = scmp.eq.s32.totalorder %s17, 0
    %p133 = por %p131, %p132
    %s134 = ssub.s32 %s11, %s18
    %p135 = scmp.eq.s32.totalorder %s134, 0
    %s137 = sadd.s32 %s136, 1
    %s138 = scalar_select %p135, %s136, %s137
    %p141 = pneg %p135
    %p142 = scmp.eq.s32.totalorder %s11, 1
    %p143 = por %p141, %p142
    %p144 = scmp.ne.s32.totalorder %s136, %s139
    %p145 = scmp.eq.s32.totalorder %s11, 0
    %p146 = por %p144, %p145
    %p147 = scmp.ne.s32.totalorder %s136, %s139
    %p148 = scmp.eq.s32.totalorder %s16, 1
    %p149 = por %p147, %p148
    %p150 = scmp.ne.s32.totalorder %s139, %s140
    %p151 = scmp.eq.s32.totalorder %s16, 0
    %p152 = por %p150, %p151
    %p153 = scmp.ne.s32.totalorder %s139, %s140
    %p154 = scmp.eq.s32.totalorder %s17, 1
    %p155 = por %p153, %p154
    %p157 = scmp.ne.s32.totalorder %s140, %s156
    %p158 = scmp.eq.s32.totalorder %s17, 0
    %p159 = por %p157, %p158
    %p160 = scmp.le.s32.totalorder 1, %s11
    %p161 = scmp.lt.s32.totalorder %s11, 3
    %p162 = pnand %p160, %p161
    %p163 = pneg %p162
    // Predicated region
    $region9: #{chebnet_forward.6} parent=5 // pred_check
      _
    $region10: #{chebnet_forward.6} parent=5 // pred_check_branch
      %165 = sbr.rel (%p162) target = $region12
    $region11: #{chebnet_forward.6} parent=5 // pred_region
      %s166 = ssub.s32 %s11, 1
      // Predicated region
      $region13: #{chebnet_forward.6} parent=11 // pred_check
        %p167 = pneg %p32
      $region14: #{chebnet_forward.6} parent=11 // pred_check_branch
        %169 = sbr.rel (%p167) target = $region16
      $region15: #{chebnet_forward.6} parent=11 // pred_region
        _
      $region16: #{chebnet_forward.6} parent=11 // pred_fallthru
        _
      // Predicated region
      $region17: #{chebnet_forward.6} parent=11 // pred_check
        %p170 = pneg %p105
      $region18: #{chebnet_forward.6} parent=11 // pred_check_branch
        %172 = sbr.rel (%p170) target = $region20
      $region19: #{chebnet_forward.6} parent=11 // pred_region
        _
      $region20: #{chebnet_forward.6} parent=11 // pred_fallthru
        _
      // Predicated region
      $region21: #{chebnet_forward.6} parent=11 // pred_check
        %p173 = pneg %p126
      $region22: #{chebnet_forward.6} parent=11 // pred_check_branch
        %175 = sbr.rel (%p173) target = $region24
      $region23: #{chebnet_forward.6} parent=11 // pred_region
        _
      $region24: #{chebnet_forward.6} parent=11 // pred_fallthru
        _
    $region12: #{chebnet_forward.6} parent=5 // pred_fallthru
      _
    %p176 = scmp.lt.s32.totalorder %s11, 2
    // Predicated region
    $region25: #{chebnet_forward.6} parent=5 // pred_check
      %p177 = pneg %p176
    $region26: #{chebnet_forward.6} parent=5 // pred_check_branch
      %179 = sbr.rel (%p177) target = $region28
    $region27: #{chebnet_forward.6} parent=5 // pred_region
      // Predicated region
      $region29: #{chebnet_forward.6} parent=27 // pred_check
        %p180 = pneg %p52
      $region30: #{chebnet_forward.6} parent=27 // pred_check_branch
        %182 = sbr.rel (%p180) target = $region32
      $region31: #{chebnet_forward.6} parent=27 // pred_region
        %s183 = smul.u32 16, %s11
        %p184 = scmp.lt.s32.totalorder %s183, 31
        %s185 = scalar_select %p184, %s183, 31
        %s186 = smul.addr %s185, 4
        %s187 = scalar_lea.vmem %s1, %s186
        %s188 = smul.u32 16, %s11
      $region32: #{chebnet_forward.6} parent=27 // pred_fallthru
        _
      // Predicated region
      $region33: #{chebnet_forward.6} parent=27 // pred_check
        %p189 = pneg %p78
      $region34: #{chebnet_forward.6} parent=27 // pred_check_branch
        %191 = sbr.rel (%p189) target = $region36
      $region35: #{chebnet_forward.6} parent=27 // pred_region
        %s192 = smul.u32 16, %s11
        %p193 = scmp.lt.s32.totalorder %s192, 31
        %s194 = scalar_select %p193, %s192, 31
        %s195 = smul.addr %s194, 2
        %s196 = smul.addr %s195, 4
        %s197 = scalar_lea.vmem %s2, %s196
        %s198 = smul.u32 16, %s11
      $region36: #{chebnet_forward.6} parent=27 // pred_fallthru
        _
    $region28: #{chebnet_forward.6} parent=5 // pred_fallthru
      _
    %p199 = scmp.le.s32.totalorder 1, %s11
    %p200 = scmp.lt.s32.totalorder %s11, 3
    %p201 = pnand %p199, %p200
    %p202 = pneg %p201
    // Predicated region
    $region37: #{chebnet_forward.6} parent=5 // pred_check
      _
    $region38: #{chebnet_forward.6} parent=5 // pred_check_branch
      %204 = sbr.rel (%p201) target = $region40
    $region39: #{chebnet_forward.6} parent=5 // pred_region
      %s205 = ssub.s32 %s11, 1
      %p206 = pneg %p32
      %p207 = pneg %p29
      %s208 = smul.u32 16, %s16
      %p209 = scmp.lt.s32.totalorder %s208, 31
      %s210 = scalar_select %p209, %s208, 31
      %s211 = smul.addr %s210, 4
      %s212 = scalar_lea.vmem %s1, %s211
      %p213 = pneg %p58
      %p214 = pneg %p55
      %s215 = smul.u32 16, %s16
      %p216 = scmp.lt.s32.totalorder %s215, 31
      %s217 = scalar_select %p216, %s215, 31
      %s218 = smul.addr %s217, 2
      %s219 = smul.addr %s218, 4
      %s220 = scalar_lea.vmem %s2, %s219
      %p221 = pneg %p84
      %p222 = pneg %p81
      %p223 = pneg %p105
      %p224 = pneg %p102
      %p225 = pneg %p126
      %p226 = pneg %p123
      %p227 = pneg %p152
      %p228 = pneg %p149
      %s229 = smul.u32 16, %s16
      %p230 = scmp.lt.s32.totalorder %s229, 31
      %s231 = scalar_select %p230, %s229, 31
      %s232 = smul.addr %s231, 8
      %s233 = scalar_lea.vmem %s5, %s232
      %s234 = smul.u32 16, %s16
      %p235 = scmp.lt.s32.totalorder %s234, 31
      %s236 = scalar_select %p235, %s234, 31
      %s237 = smul.addr %s236, 4
      %s238 = scalar_lea.vmem %s1, %s237
      %s239 = smul.u32 16, %s16
      %s240 = smul.u32 16, %s16
      %p241 = scmp.lt.s32.totalorder %s240, 31
      %s242 = scalar_select %p241, %s240, 31
      %s243 = smul.addr %s242, 2
      %s244 = smul.addr %s243, 4
      %s245 = scalar_lea.vmem %s2, %s244
      %s246 = smul.u32 16, %s16
      %s247 = smul.u32 16, %s16
      %p248 = scmp.lt.s32.totalorder %s247, 31
      %s249 = scalar_select %p248, %s247, 31
      %s250 = smul.addr %s249, 8
      %s251 = scalar_lea.vmem %s5, %s250
      %s252 = smul.u32 16, %s16
      %v254 = vld [vmem:[%s245] sm:$0xff]
      %v255 = vld [vmem:[%s245 + $0x8] sm:$0xff]
      %v256 = vld [vmem:[%s245 + $0x10] sm:$0xff]
      %v257 = vld [vmem:[%s245 + $0x18] sm:$0xff]
      %v258 = vld [vmem:[%s245 + $0x20] sm:$0xff]
      %v259 = vld [vmem:[%s245 + $0x28] sm:$0xff]
      %v260 = vld [vmem:[%s245 + $0x30] sm:$0xff]
      %v261 = vld [vmem:[%s245 + $0x38] sm:$0xff]
      %v262 = vld [vmem:[%s245 + $0x40] sm:$0xff]
      %v263 = vld [vmem:[%s245 + $0x48] sm:$0xff]
      %v264 = vld [vmem:[%s245 + $0x50] sm:$0xff]
      %v265 = vld [vmem:[%s245 + $0x58] sm:$0xff]
      %v266 = vld [vmem:[%s245 + $0x60] sm:$0xff]
      %v267 = vld [vmem:[%s245 + $0x68] sm:$0xff]
      %v268 = vld [vmem:[%s245 + $0x70] sm:$0xff]
      %v269 = vld [vmem:[%s245 + $0x78] sm:$0xff]
      %v270 = vld [vmem:[%s0] sm:$0xf]
      %v271 = vld [vmem:[%s0 + $0x4] sm:$0xf]
      %v272 = vld [vmem:[%s0 + $0x8] sm:$0xf]
      %v273 = vld [vmem:[%s0 + $0xc] sm:$0xf]
      %v274 = vld [vmem:[%s0 + $0x10] sm:$0xf]
      %v275 = vld [vmem:[%s0 + $0x14] sm:$0xf]
      %v276 = vld [vmem:[%s0 + $0x18] sm:$0xf]
      %v277 = vld [vmem:[%s0 + $0x1c] sm:$0xf]
      %v278 = vld [vmem:[%s0 + $0x20] sm:$0xf]
      %v279 = vld [vmem:[%s0 + $0x24] sm:$0xf]
      %v280 = vld [vmem:[%s0 + $0x28] sm:$0xf]
      %v281 = vld [vmem:[%s0 + $0x2c] sm:$0xf]
      %v282 = vld [vmem:[%s0 + $0x30] sm:$0xf]
      %v283 = vld [vmem:[%s0 + $0x34] sm:$0xf]
      %v284 = vld [vmem:[%s0 + $0x38] sm:$0xf]
      %v285 = vld [vmem:[%s0 + $0x3c] sm:$0xf]
      %v286 = vld [vmem:[%s0 + $0x40] sm:$0xf]
      %v287 = vld [vmem:[%s0 + $0x44] sm:$0xf]
      %v288 = vld [vmem:[%s0 + $0x48] sm:$0xf]
      %v289 = vld [vmem:[%s0 + $0x4c] sm:$0xf]
      %v290 = vld [vmem:[%s0 + $0x50] sm:$0xf]
      %v291 = vld [vmem:[%s0 + $0x54] sm:$0xf]
      %v292 = vld [vmem:[%s0 + $0x58] sm:$0xf]
      %v293 = vld [vmem:[%s0 + $0x5c] sm:$0xf]
      %v294 = vld [vmem:[%s0 + $0x60] sm:$0xf]
      %v295 = vld [vmem:[%s0 + $0x64] sm:$0xf]
      %v296 = vld [vmem:[%s0 + $0x68] sm:$0xf]
      %v297 = vld [vmem:[%s0 + $0x6c] sm:$0xf]
      %v298 = vld [vmem:[%s0 + $0x70] sm:$0xf]
      %v299 = vld [vmem:[%s0 + $0x74] sm:$0xf]
      %v300 = vld [vmem:[%s0 + $0x78] sm:$0xf]
      %v301 = vld [vmem:[%s0 + $0x7c] sm:$0xf]
      %v318 = vunpack.c.l.b16 %v254
      %v319 = vunpack.c.h.b16 %v254
      %v320 = vunpack.c.l.b16 %v255
      %v321 = vunpack.c.h.b16 %v255
      %v322 = vunpack.c.l.b16 %v256
      %v323 = vunpack.c.h.b16 %v256
      %v324 = vunpack.c.l.b16 %v257
      %v325 = vunpack.c.h.b16 %v257
      %v326 = vunpack.c.l.b16 %v258
      %v327 = vunpack.c.h.b16 %v258
      %v328 = vunpack.c.l.b16 %v259
      %v329 = vunpack.c.h.b16 %v259
      %v330 = vunpack.c.l.b16 %v260
      %v331 = vunpack.c.h.b16 %v260
      %v332 = vunpack.c.l.b16 %v261
      %v333 = vunpack.c.h.b16 %v261
      %v334 = vunpack.c.l.b16 %v262
      %v335 = vunpack.c.h.b16 %v262
      %v336 = vunpack.c.l.b16 %v263
      %v337 = vunpack.c.h.b16 %v263
      %v338 = vunpack.c.l.b16 %v264
      %v339 = vunpack.c.h.b16 %v264
      %v340 = vunpack.c.l.b16 %v265
      %v341 = vunpack.c.h.b16 %v265
      %v342 = vunpack.c.l.b16 %v266
      %v343 = vunpack.c.h.b16 %v266
      %v344 = vunpack.c.l.b16 %v267
      %v345 = vunpack.c.h.b16 %v267
      %v346 = vunpack.c.l.b16 %v268
      %v347 = vunpack.c.h.b16 %v268
      %v348 = vunpack.c.l.b16 %v269
      %v349 = vunpack.c.h.b16 %v269
      %v350 = vpack.c.b16 %v320, %v318
      %v351 = vpack.c.b16 %v321, %v319
      %v352 = vpack.c.b16 %v324, %v322
      %v353 = vpack.c.b16 %v325, %v323
      %v354 = vpack.c.b16 %v328, %v326
      %v355 = vpack.c.b16 %v329, %v327
      %v356 = vpack.c.b16 %v332, %v330
      %v357 = vpack.c.b16 %v333, %v331
      %v358 = vpack.c.b16 %v336, %v334
      %v359 = vpack.c.b16 %v337, %v335
      %v360 = vpack.c.b16 %v340, %v338
      %v361 = vpack.c.b16 %v341, %v339
      %v362 = vpack.c.b16 %v344, %v342
      %v363 = vpack.c.b16 %v345, %v343
      %v364 = vpack.c.b16 %v348, %v346
      %v365 = vpack.c.b16 %v349, %v347
      %v414 = vunpack.c.l.b16 %v270
      %v415 = vunpack.c.l.b16 %v271
      %v416 = vunpack.c.l.b16 %v272
      %v417 = vunpack.c.l.b16 %v273
      %v418 = vunpack.c.l.b16 %v274
      %v419 = vunpack.c.l.b16 %v275
      %v420 = vunpack.c.l.b16 %v276
      %v421 = vunpack.c.l.b16 %v277
      %v422 = vunpack.c.l.b16 %v278
      %v423 = vunpack.c.l.b16 %v279
      %v424 = vunpack.c.l.b16 %v280
      %v425 = vunpack.c.l.b16 %v281
      %v426 = vunpack.c.l.b16 %v282
      %v427 = vunpack.c.l.b16 %v283
      %v428 = vunpack.c.l.b16 %v284
      %v429 = vunpack.c.l.b16 %v285
      %v430 = vunpack.c.l.b16 %v286
      %v431 = vunpack.c.l.b16 %v287
      %v432 = vunpack.c.l.b16 %v288
      %v433 = vunpack.c.l.b16 %v289
      %v434 = vunpack.c.l.b16 %v290
      %v435 = vunpack.c.l.b16 %v291
      %v436 = vunpack.c.l.b16 %v292
      %v437 = vunpack.c.l.b16 %v293
      %v438 = vunpack.c.l.b16 %v294
      %v439 = vunpack.c.l.b16 %v295
      %v440 = vunpack.c.l.b16 %v296
      %v441 = vunpack.c.l.b16 %v297
      %v442 = vunpack.c.l.b16 %v298
      %v443 = vunpack.c.l.b16 %v299
      %v444 = vunpack.c.l.b16 %v300
      %v445 = vunpack.c.l.b16 %v301
      %v446 = vpack.c.b16 %v415, %v414
      %v447 = vpack.c.b16 %v417, %v416
      %v448 = vpack.c.b16 %v419, %v418
      %v449 = vpack.c.b16 %v421, %v420
      %v450 = vpack.c.b16 %v423, %v422
      %v451 = vpack.c.b16 %v425, %v424
      %v452 = vpack.c.b16 %v427, %v426
      %v453 = vpack.c.b16 %v429, %v428
      %v454 = vpack.c.b16 %v431, %v430
      %v455 = vpack.c.b16 %v433, %v432
      %v456 = vpack.c.b16 %v435, %v434
      %v457 = vpack.c.b16 %v437, %v436
      %v458 = vpack.c.b16 %v439, %v438
      %v459 = vpack.c.b16 %v441, %v440
      %v460 = vpack.c.b16 %v443, %v442
      %v461 = vpack.c.b16 %v445, %v444
      %478 = vmatprep.subr.bf16.mxu0 0
      %479 = vmatpush1.bf16.msra.mxu0 %v446
      %480 = vmatprep.subr.bf16.mxu0 0
      %481 = vmatpush1.bf16.msra.mxu0 %v447
      %482 = vmatprep.subr.bf16.mxu0 0
      %483 = vmatpush1.bf16.msra.mxu0 %v448
      %484 = vmatprep.subr.bf16.mxu0 0
      %485 = vmatpush1.bf16.msra.mxu0 %v449
      %486 = vmatprep.subr.bf16.mxu0 0
      %487 = vmatpush1.bf16.msra.mxu0 %v450
      %488 = vmatprep.subr.bf16.mxu0 0
      %489 = vmatpush1.bf16.msra.mxu0 %v451
      %490 = vmatprep.subr.bf16.mxu0 0
      %491 = vmatpush1.bf16.msra.mxu0 %v452
      %492 = vmatprep.subr.bf16.mxu0 0
      %493 = vmatpush1.bf16.msra.mxu0 %v453
      %494 = vmatprep.subr.bf16.mxu0 0
      %495 = vmatpush1.bf16.msra.mxu0 %v454
      %496 = vmatprep.subr.bf16.mxu0 0
      %497 = vmatpush1.bf16.msra.mxu0 %v455
      %498 = vmatprep.subr.bf16.mxu0 0
      %499 = vmatpush1.bf16.msra.mxu0 %v456
      %500 = vmatprep.subr.bf16.mxu0 0
      %501 = vmatpush1.bf16.msra.mxu0 %v457
      %502 = vmatprep.subr.bf16.mxu0 0
      %503 = vmatpush1.bf16.msra.mxu0 %v458
      %504 = vmatprep.subr.bf16.mxu0 0
      %505 = vmatpush1.bf16.msra.mxu0 %v459
      %506 = vmatprep.subr.bf16.mxu0 0
      %507 = vmatpush1.bf16.msra.mxu0 %v460
      %508 = vmatprep.subr.bf16.mxu0 0
      %509 = vmatpush1.bf16.msra.mxu0 %v461
      %510 = vmatprep.mubr.bf16.mxu0 %v351
      %511 = vmatmul.mubr.bf16.gmra.mrb[0].mxu0 %v350
      %v512 = vpop.f32.mrb[0].mxu0
      %v513 = vadd.f32 0.0, %v512
      %v514 = vpop.f32.mrb[0].mxu0
      %v515 = vpop.f32.mrb[0].mxu0
      %v516 = vadd.f32 0.0, %v515
      %v517 = vpop.f32.mrb[0].mxu0
      %518 = vmatprep.mubr.bf16.mxu0 %v353
      %519 = vmatmul.mubr.bf16.gmra.mrb[0].mxu0 %v352
      %v520 = vpop.f32.mrb[0].mxu0
      %v521 = vadd.f32 0.0, %v520
      %v522 = vpop.f32.mrb[0].mxu0
      %v523 = vpop.f32.mrb[0].mxu0
      %v524 = vadd.f32 0.0, %v523
      %v525 = vpop.f32.mrb[0].mxu0
      %526 = vmatprep.mubr.bf16.mxu0 %v355
      %527 = vmatmul.mubr.bf16.gmra.mrb[0].mxu0 %v354
      %v528 = vpop.f32.mrb[0].mxu0
      %v529 = vadd.f32 0.0, %v528
      %v530 = vpop.f32.mrb[0].mxu0
      %v531 = vpop.f32.mrb[0].mxu0
      %v532 = vadd.f32 0.0, %v531
      %v533 = vpop.f32.mrb[0].mxu0
      %534 = vmatprep.mubr.bf16.mxu0 %v357
      %535 = vmatmul.mubr.bf16.gmra.mrb[0].mxu0 %v356
      %v536 = vpop.f32.mrb[0].mxu0
      %v537 = vadd.f32 0.0, %v536
      %v538 = vpop.f32.mrb[0].mxu0
      %v539 = vpop.f32.mrb[0].mxu0
      %v540 = vadd.f32 0.0, %v539
      %v541 = vpop.f32.mrb[0].mxu0
      %542 = vmatprep.mubr.bf16.mxu0 %v359
      %543 = vmatmul.mubr.bf16.gmra.mrb[0].mxu0 %v358
      %v544 = vpop.f32.mrb[0].mxu0
      %v545 = vadd.f32 0.0, %v544
      %v546 = vpop.f32.mrb[0].mxu0
      %v547 = vpop.f32.mrb[0].mxu0
      %v548 = vadd.f32 0.0, %v547
      %v549 = vpop.f32.mrb[0].mxu0
      %550 = vmatprep.mubr.bf16.mxu0 %v361
      %551 = vmatmul.mubr.bf16.gmra.mrb[0].mxu0 %v360
      %v552 = vpop.f32.mrb[0].mxu0
      %v553 = vadd.f32 0.0, %v552
      %v554 = vpop.f32.mrb[0].mxu0
      %v555 = vpop.f32.mrb[0].mxu0
      %v556 = vadd.f32 0.0, %v555
      %v557 = vpop.f32.mrb[0].mxu0
      %558 = vmatprep.mubr.bf16.mxu0 %v363
      %559 = vmatmul.mubr.bf16.gmra.mrb[0].mxu0 %v362
      %v560 = vpop.f32.mrb[0].mxu0
      %v561 = vadd.f32 0.0, %v560
      %v562 = vpop.f32.mrb[0].mxu0
      %v563 = vpop.f32.mrb[0].mxu0
      %v564 = vadd.f32 0.0, %v563
      %v565 = vpop.f32.mrb[0].mxu0
      %566 = vmatprep.mubr.bf16.mxu0 %v365
      %567 = vmatmul.mubr.bf16.gmra.mrb[0].mxu0 %v364
      %v568 = vpop.f32.mrb[0].mxu0
      %v569 = vadd.f32 0.0, %v568
      %v570 = vpop.f32.mrb[0].mxu0
      %v571 = vpop.f32.mrb[0].mxu0
      %v572 = vadd.f32 0.0, %v571
      %v573 = vpop.f32.mrb[0].mxu0
      %574 = vdwg.mxu0
      %v575 = vld [vmem:[%s238] sm:$0xf]
      %v576 = vld [vmem:[%s238 + $0x4] sm:$0xf]
      %v577 = vld [vmem:[%s238 + $0x8] sm:$0xf]
      %v578 = vld [vmem:[%s238 + $0xc] sm:$0xf]
      %v579 = vld [vmem:[%s238 + $0x10] sm:$0xf]
      %v580 = vld [vmem:[%s238 + $0x14] sm:$0xf]
      %v581 = vld [vmem:[%s238 + $0x18] sm:$0xf]
      %v582 = vld [vmem:[%s238 + $0x1c] sm:$0xf]
      %v583 = vld [vmem:[%s238 + $0x20] sm:$0xf]
      %v584 = vld [vmem:[%s238 + $0x24] sm:$0xf]
      %v585 = vld [vmem:[%s238 + $0x28] sm:$0xf]
      %v586 = vld [vmem:[%s238 + $0x2c] sm:$0xf]
      %v587 = vld [vmem:[%s238 + $0x30] sm:$0xf]
      %v588 = vld [vmem:[%s238 + $0x34] sm:$0xf]
      %v589 = vld [vmem:[%s238 + $0x38] sm:$0xf]
      %v590 = vld [vmem:[%s238 + $0x3c] sm:$0xf]
      %v591 = vpack.c.bf16 %v516, %v513
      %v592 = vpack.c.bf16 %v524, %v521
      %v593 = vpack.c.bf16 %v532, %v529
      %v594 = vpack.c.bf16 %v540, %v537
      %v595 = vpack.c.bf16 %v548, %v545
      %v596 = vpack.c.bf16 %v556, %v553
      %v597 = vpack.c.bf16 %v564, %v561
      %v598 = vpack.c.bf16 %v572, %v569
      %v615 = vunpack.c.l.b16 %v575
      %v616 = vunpack.c.l.b16 %v576
      %v617 = vunpack.c.l.b16 %v577
      %v618 = vunpack.c.l.b16 %v578
      %v619 = vunpack.c.l.b16 %v579
      %v620 = vunpack.c.l.b16 %v580
      %v621 = vunpack.c.l.b16 %v581
      %v622 = vunpack.c.l.b16 %v582
      %v623 = vunpack.c.l.b16 %v583
      %v624 = vunpack.c.l.b16 %v584
      %v625 = vunpack.c.l.b16 %v585
      %v626 = vunpack.c.l.b16 %v586
      %v627 = vunpack.c.l.b16 %v587
      %v628 = vunpack.c.l.b16 %v588
      %v629 = vunpack.c.l.b16 %v589
      %v630 = vunpack.c.l.b16 %v590
      %v631 = vpack.c.b16 %v616, %v615
      %v632 = vpack.c.b16 %v618, %v617
      %v633 = vpack.c.b16 %v620, %v619
      %v634 = vpack.c.b16 %v622, %v621
      %v635 = vpack.c.b16 %v624, %v623
      %v636 = vpack.c.b16 %v626, %v625
      %v637 = vpack.c.b16 %v628, %v627
      %v638 = vpack.c.b16 %v630, %v629
      %v647 = vld [vmem:[%s3] sm:$0xf]
      %v648 = vld [vmem:[%s3 + $0x4] sm:$0xf]
      %v649 = vld [vmem:[%s3 + $0x8] sm:$0xf]
      %v650 = vld [vmem:[%s3 + $0xc] sm:$0xf]
      %v651 = vld [vmem:[%s3 + $0x10] sm:$0xf]
      %v652 = vld [vmem:[%s3 + $0x14] sm:$0xf]
      %v653 = vld [vmem:[%s3 + $0x18] sm:$0xf]
      %v654 = vld [vmem:[%s3 + $0x1c] sm:$0xf]
      %v655 = vld [vmem:[%s3 + $0x20] sm:$0xf]
      %v656 = vld [vmem:[%s3 + $0x24] sm:$0xf]
      %v657 = vld [vmem:[%s3 + $0x28] sm:$0xf]
      %v658 = vld [vmem:[%s3 + $0x2c] sm:$0xf]
      %v659 = vld [vmem:[%s3 + $0x30] sm:$0xf]
      %v660 = vld [vmem:[%s3 + $0x34] sm:$0xf]
      %v661 = vld [vmem:[%s3 + $0x38] sm:$0xf]
      %v662 = vld [vmem:[%s3 + $0x3c] sm:$0xf]
      %v663 = vld [vmem:[%s3 + $0x40] sm:$0xf]
      %v664 = vld [vmem:[%s3 + $0x44] sm:$0xf]
      %v665 = vld [vmem:[%s3 + $0x48] sm:$0xf]
      %v666 = vld [vmem:[%s3 + $0x4c] sm:$0xf]
      %v667 = vld [vmem:[%s3 + $0x50] sm:$0xf]
      %v668 = vld [vmem:[%s3 + $0x54] sm:$0xf]
      %v669 = vld [vmem:[%s3 + $0x58] sm:$0xf]
      %v670 = vld [vmem:[%s3 + $0x5c] sm:$0xf]
      %v671 = vld [vmem:[%s3 + $0x60] sm:$0xf]
      %v672 = vld [vmem:[%s3 + $0x64] sm:$0xf]
      %v673 = vld [vmem:[%s3 + $0x68] sm:$0xf]
      %v674 = vld [vmem:[%s3 + $0x6c] sm:$0xf]
      %v675 = vld [vmem:[%s3 + $0x70] sm:$0xf]
      %v676 = vld [vmem:[%s3 + $0x74] sm:$0xf]
      %v677 = vld [vmem:[%s3 + $0x78] sm:$0xf]
      %v678 = vld [vmem:[%s3 + $0x7c] sm:$0xf]
      %v679 = vld [vmem:[%s4] sm:$0x1]
      %v681 = vlaneseq
      %v682 = vshrl.u32 %v681, 7
      %v683 = vsub.s32 0, %v682
      %v684 = vrot.slane %v679, %v683
      %v718 = vunpack.c.l.b16 %v647
      %v719 = vunpack.c.l.b16 %v648
      %v720 = vunpack.c.l.b16 %v649
      %v721 = vunpack.c.l.b16 %v650
      %v722 = vunpack.c.l.b16 %v651
      %v723 = vunpack.c.l.b16 %v652
      %v724 = vunpack.c.l.b16 %v653
      %v725 = vunpack.c.l.b16 %v654
      %v726 = vunpack.c.l.b16 %v655
      %v727 = vunpack.c.l.b16 %v656
      %v728 = vunpack.c.l.b16 %v657
      %v729 = vunpack.c.l.b16 %v658
      %v730 = vunpack.c.l.b16 %v659
      %v731 = vunpack.c.l.b16 %v660
      %v732 = vunpack.c.l.b16 %v661
      %v733 = vunpack.c.l.b16 %v662
      %v734 = vunpack.c.l.b16 %v663
      %v735 = vunpack.c.l.b16 %v664
      %v736 = vunpack.c.l.b16 %v665
      %v737 = vunpack.c.l.b16 %v666
      %v738 = vunpack.c.l.b16 %v667
      %v739 = vunpack.c.l.b16 %v668
      %v740 = vunpack.c.l.b16 %v669
      %v741 = vunpack.c.l.b16 %v670
      %v742 = vunpack.c.l.b16 %v671
      %v743 = vunpack.c.l.b16 %v672
      %v744 = vunpack.c.l.b16 %v673
      %v745 = vunpack.c.l.b16 %v674
      %v746 = vunpack.c.l.b16 %v675
      %v747 = vunpack.c.l.b16 %v676
      %v748 = vunpack.c.l.b16 %v677
      %v749 = vunpack.c.l.b16 %v678
      %v750 = vpack.c.b16 %v719, %v718
      %v751 = vpack.c.b16 %v721, %v720
      %v752 = vpack.c.b16 %v723, %v722
      %v753 = vpack.c.b16 %v725, %v724
      %v754 = vpack.c.b16 %v727, %v726
      %v755 = vpack.c.b16 %v729, %v728
      %v756 = vpack.c.b16 %v731, %v730
      %v757 = vpack.c.b16 %v733, %v732
      %v758 = vpack.c.b16 %v735, %v734
      %v759 = vpack.c.b16 %v737, %v736
      %v760 = vpack.c.b16 %v739, %v738
      %v761 = vpack.c.b16 %v741, %v740
      %v762 = vpack.c.b16 %v743, %v742
      %v763 = vpack.c.b16 %v745, %v744
      %v764 = vpack.c.b16 %v747, %v746
      %v765 = vpack.c.b16 %v749, %v748
      %782 = vmatprep.subr.bf16.mxu0 0
      %783 = vmatpush1.bf16.msra.mxu0 %v750
      %784 = vmatprep.subr.bf16.mxu0 0
      %785 = vmatpush1.bf16.msra.mxu0 %v751
      %786 = vmatprep.subr.bf16.mxu0 0
      %787 = vmatpush1.bf16.msra.mxu0 %v752
      %788 = vmatprep.subr.bf16.mxu0 0
      %789 = vmatpush1.bf16.msra.mxu0 %v753
      %790 = vmatprep.subr.bf16.mxu0 0
      %791 = vmatpush1.bf16.msra.mxu0 %v754
      %792 = vmatprep.subr.bf16.mxu0 0
      %793 = vmatpush1.bf16.msra.mxu0 %v755
      %794 = vmatprep.subr.bf16.mxu0 0
      %795 = vmatpush1.bf16.msra.mxu0 %v756
      %796 = vmatprep.subr.bf16.mxu0 0
      %797 = vmatpush1.bf16.msra.mxu0 %v757
      %798 = vmatprep.subr.bf16.mxu0 0
      %799 = vmatpush1.bf16.msra.mxu0 %v758
      %800 = vmatprep.subr.bf16.mxu0 0
      %801 = vmatpush1.bf16.msra.mxu0 %v759
      %802 = vmatprep.subr.bf16.mxu0 0
      %803 = vmatpush1.bf16.msra.mxu0 %v760
      %804 = vmatprep.subr.bf16.mxu0 0
      %805 = vmatpush1.bf16.msra.mxu0 %v761
      %806 = vmatprep.subr.bf16.mxu0 0
      %807 = vmatpush1.bf16.msra.mxu0 %v762
      %808 = vmatprep.subr.bf16.mxu0 0
      %809 = vmatpush1.bf16.msra.mxu0 %v763
      %810 = vmatprep.subr.bf16.mxu0 0
      %811 = vmatpush1.bf16.msra.mxu0 %v764
      %812 = vmatprep.subr.bf16.mxu0 0
      %813 = vmatpush1.bf16.msra.mxu0 %v765
      %814 = vmatprep.mubr.bf16.mxu0 %v591
      %815 = vmatmul.mubr.bf16.gmra.mrb[0].mxu0 %v631
      %v816 = vpop.f32.mrb[0].mxu0
      %v817 = vadd.f32 %v684, %v816
      %v818 = vpop.f32.mrb[0].mxu0
      %v819 = vpop.f32.mrb[0].mxu0
      %v820 = vadd.f32 %v684, %v819
      %v821 = vpop.f32.mrb[0].mxu0
      %822 = vmatprep.mubr.bf16.mxu0 %v592
      %823 = vmatmul.mubr.bf16.gmra.mrb[0].mxu0 %v632
      %v824 = vpop.f32.mrb[0].mxu0
      %v825 = vadd.f32 %v684, %v824
      %v826 = vpop.f32.mrb[0].mxu0
      %v827 = vpop.f32.mrb[0].mxu0
      %v828 = vadd.f32 %v684, %v827
      %v829 = vpop.f32.mrb[0].mxu0
      %830 = vmatprep.mubr.bf16.mxu0 %v593
      %831 = vmatmul.mubr.bf16.gmra.mrb[0].mxu0 %v633
      %v832 = vpop.f32.mrb[0].mxu0
      %v833 = vadd.f32 %v684, %v832
      %v834 = vpop.f32.mrb[0].mxu0
      %v835 = vpop.f32.mrb[0].mxu0
      %v836 = vadd.f32 %v684, %v835
      %v837 = vpop.f32.mrb[0].mxu0
      %838 = vmatprep.mubr.bf16.mxu0 %v594
      %839 = vmatmul.mubr.bf16.gmra.mrb[0].mxu0 %v634
      %v840 = vpop.f32.mrb[0].mxu0
      %v841 = vadd.f32 %v684, %v840
      %v842 = vpop.f32.mrb[0].mxu0
      %v843 = vpop.f32.mrb[0].mxu0
      %v844 = vadd.f32 %v684, %v843
      %v845 = vpop.f32.mrb[0].mxu0
      %846 = vmatprep.mubr.bf16.mxu0 %v595
      %847 = vmatmul.mubr.bf16.gmra.mrb[0].mxu0 %v635
      %v848 = vpop.f32.mrb[0].mxu0
      %v849 = vadd.f32 %v684, %v848
      %v850 = vpop.f32.mrb[0].mxu0
      %v851 = vpop.f32.mrb[0].mxu0
      %v852 = vadd.f32 %v684, %v851
      %v853 = vpop.f32.mrb[0].mxu0
      %854 = vmatprep.mubr.bf16.mxu0 %v596
      %855 = vmatmul.mubr.bf16.gmra.mrb[0].mxu0 %v636
      %v856 = vpop.f32.mrb[0].mxu0
      %v857 = vadd.f32 %v684, %v856
      %v858 = vpop.f32.mrb[0].mxu0
      %v859 = vpop.f32.mrb[0].mxu0
      %v860 = vadd.f32 %v684, %v859
      %v861 = vpop.f32.mrb[0].mxu0
      %862 = vmatprep.mubr.bf16.mxu0 %v597
      %863 = vmatmul.mubr.bf16.gmra.mrb[0].mxu0 %v637
      %v864 = vpop.f32.mrb[0].mxu0
      %v865 = vadd.f32 %v684, %v864
      %v866 = vpop.f32.mrb[0].mxu0
      %v867 = vpop.f32.mrb[0].mxu0
      %v868 = vadd.f32 %v684, %v867
      %v869 = vpop.f32.mrb[0].mxu0
      %870 = vmatprep.mubr.bf16.mxu0 %v598
      %871 = vmatmul.mubr.bf16.gmra.mrb[0].mxu0 %v638
      %v872 = vpop.f32.mrb[0].mxu0
      %v873 = vadd.f32 %v684, %v872
      %v874 = vpop.f32.mrb[0].mxu0
      %v875 = vpop.f32.mrb[0].mxu0
      %v876 = vadd.f32 %v684, %v875
      %v877 = vpop.f32.mrb[0].mxu0
      %878 = vdwg.mxu0
      %879 = vst [vmem:[%s251] sm:$0xff] %v817
      %880 = vst [vmem:[%s251 + $0x8] sm:$0xff] %v820
      %881 = vst [vmem:[%s251 + $0x10] sm:$0xff] %v825
      %882 = vst [vmem:[%s251 + $0x18] sm:$0xff] %v828
      %883 = vst [vmem:[%s251 + $0x20] sm:$0xff] %v833
      %884 = vst [vmem:[%s251 + $0x28] sm:$0xff] %v836
      %885 = vst [vmem:[%s251 + $0x30] sm:$0xff] %v841
      %886 = vst [vmem:[%s251 + $0x38] sm:$0xff] %v844
      %887 = vst [vmem:[%s251 + $0x40] sm:$0xff] %v849
      %888 = vst [vmem:[%s251 + $0x48] sm:$0xff] %v852
      %889 = vst [vmem:[%s251 + $0x50] sm:$0xff] %v857
      %890 = vst [vmem:[%s251 + $0x58] sm:$0xff] %v860
      %891 = vst [vmem:[%s251 + $0x60] sm:$0xff] %v865
      %892 = vst [vmem:[%s251 + $0x68] sm:$0xff] %v868
      %893 = vst [vmem:[%s251 + $0x70] sm:$0xff] %v873
      %894 = vst [vmem:[%s251 + $0x78] sm:$0xff] %v876
      %s895 = smul.u32 16, %s16
      %p896 = scmp.lt.s32.totalorder %s895, 31
      %s897 = scalar_select %p896, %s895, 31
      %s898 = smul.addr %s897, 8
      %s899 = scalar_lea.vmem %s5, %s898
      // Predicated region
      $region41: #{chebnet_forward.6} parent=39 // pred_check
        %p900 = pneg %p149
      $region42: #{chebnet_forward.6} parent=39 // pred_check_branch
        %902 = sbr.rel (%p900) target = $region44
      $region43: #{chebnet_forward.6} parent=39 // pred_region
        %s903 = smul.u32 16, %s16
      $region44: #{chebnet_forward.6} parent=39 // pred_fallthru
        _
    $region40: #{chebnet_forward.6} parent=5 // pred_fallthru
      _
    %p904 = scmp.le.s32.totalorder 2, %s11
    // Predicated region
    $region45: #{chebnet_forward.6} parent=5 // pred_check
      %p905 = pneg %p904
    $region46: #{chebnet_forward.6} parent=5 // pred_check_branch
      %907 = sbr.rel (%p905) target = $region48
    $region47: #{chebnet_forward.6} parent=5 // pred_region
      %s908 = ssub.s32 %s11, 2
      // Predicated region
      $region49: #{chebnet_forward.6} parent=47 // pred_check
        %p909 = pneg %p155
      $region50: #{chebnet_forward.6} parent=47 // pred_check_branch
        %911 = sbr.rel (%p909) target = $region52
      $region51: #{chebnet_forward.6} parent=47 // pred_region
        %s912 = smul.u32 16, %s17
        %p913 = scmp.lt.s32.totalorder %s912, 31
        %s914 = scalar_select %p913, %s912, 31
        %s915 = smul.addr %s914, 8
        %s916 = scalar_lea.vmem %s5, %s915
      $region52: #{chebnet_forward.6} parent=47 // pred_fallthru
        _
    $region48: #{chebnet_forward.6} parent=5 // pred_fallthru
      _
  $region6: #{chebnet_forward.6} parent=0 // loop_footer
    %s15 = sadd.s32 1, %s11
  $region7: #{chebnet_forward.6} parent=0 // loop_footer_branch
    %10 = sbr.rel target = $region3
  $region8: #{chebnet_forward.6} parent=0 // loop_exit
    _

</llo_original>
